<compile_context>
chip_gen: v7x
topology: tpu7x:2x2x1
jax: 0.10.0
libtpu: 0.0.40
codegen_flags: <defaults>
</compile_context>

<pallas_src>
import functools

import jax
import jax.numpy as jnp
from jax import lax
from jax.experimental import pallas as pl
from jax.experimental.pallas import tpu as pltpu

# Hyper-parameters from DLDENetLoss.__init__ defaults.
ALPHA = 0.25
GAMMA = 2.0
SIGMA = 3.0
IOU_BACKGROUND = 0.4
IOU_OBJECT = 0.5
INCREASE_FG = 1.0  # increase_foreground_by default


def _dlde_image_kernel(anch_ref, ancht_ref, regrt_ref, cls_ref, emb_ref,
                       annT_ref, rhs_ref, out_ref, *, total_anchors,
                       tiles_per_split, num_classes, alpha, gamma, sigma,
                       iou_bg, iou_obj, increase_fg):
    """Fused per-(image, split, anchor-tile) loss kernel. grid = (B, NS, NT)."""
    f32 = jnp.float32
    s = pl.program_id(1)
    t = pl.program_id(2)

    anchors_c = anch_ref[0]      # (TA, 4)   anchor coords as columns (native)
    anchors_r = ancht_ref[0]     # (4, TA)   anchor coords as rows
    regr_r = regrt_ref[0]        # (4, TA)
    probs = cls_ref[0]           # (TA, C)   native layout
    emb = emb_ref[0]             # (TA, E)   native layout
    annT = annT_ref[0]           # (8, M)    rows 0..4 = x1, y1, x2, y2, label
    rhs = rhs_ref[0]             # (M, 5+C+E): coords+label | class onehot | w_n[label]

    TA = anchors_c.shape[0]
    M = annT.shape[1]
    C = num_classes

    # Global anchor index mask: handles A not divisible by the tile size
    # (the trailing block may contain garbage — it must never contribute).
    start = (s * tiles_per_split + t) * TA
    in_range_c = (lax.broadcasted_iota(jnp.int32, (TA, 1), 0) + start) < total_anchors
    in_range_r = (lax.broadcasted_iota(jnp.int32, (1, TA), 1) + start) < total_anchors

    # =================== orientation A: (TA, M), anchors on sublanes =========
    # Feeds the focal / CCS math against the NATIVE (TA,C)/(TA,E) inputs.
    ax1c = anchors_c[:, 0:1]
    ay1c = anchors_c[:, 1:2]
    ax2c = anchors_c[:, 2:3]
    ay2c = anchors_c[:, 3:4]
    bx1r = annT[0:1, :]
    by1r = annT[1:2, :]
    bx2r = annT[2:3, :]
    by2r = annT[3:4, :]
    valid_r = annT[4:5, :] != -1.0                              # (1, M)

    area_ac = (ax2c - ax1c) * (ay2c - ay1c)                     # (TA, 1)
    area_br = (bx2r - bx1r) * (by2r - by1r)                     # (1, M)
    iw = jnp.maximum(jnp.minimum(ax2c, bx2r) - jnp.maximum(ax1c, bx1r), 0.0)
    ih = jnp.maximum(jnp.minimum(ay2c, by2r) - jnp.maximum(ay1c, by1r), 0.0)
    inter = iw * ih                                             # (TA, M)
    union = jnp.maximum(area_ac + area_br - inter, 1e-8)
    iou_n = jnp.where(valid_r, inter / union, -1.0)             # exact divide

    iou_max_c = jnp.max(iou_n, axis=1, keepdims=True)           # (TA, 1)
    mids_n = lax.broadcasted_iota(jnp.int32, (TA, M), 1)
    arg_c = jnp.min(jnp.where(iou_n == iou_max_c, mids_n, M), axis=1,
                    keepdims=True)
    positive_c = jnp.logical_and(iou_max_c >= iou_obj, in_range_c)      # (TA,1)
    keep_c = jnp.logical_and(
        jnp.logical_or(iou_max_c >= iou_obj, iou_max_c < iou_bg), in_range_c)

    onehot_pos = jnp.where(
        jnp.logical_and(mids_n == arg_c, positive_c), 1.0, 0.0).astype(f32)

    # ONE MXU gather: focal one-hot targets + assigned (pre-normalized) weight.
    gathered = jnp.dot(onehot_pos, rhs[:, 5:], preferred_element_type=f32)
    g_cls = gathered[:, :C]                                     # (TA, C) 0/1
    w_sel = gathered[:, C:]                                     # (TA, E)

    # ---- Focal classification loss on native (TA, C) ----
    p = jnp.clip(probs, 1e-4, 1.0 - 1e-4)
    is_fg = g_cls > 0.5
    pt = jnp.where(is_fg, p, 1.0 - p)
    fw = 1.0 - pt
    af = (1.0 - alpha) + (2.0 * alpha - 1.0) * g_cls            # arithmetic select
    bce = -jnp.log(pt)                                          # single log (EUP)
    fwg = fw * fw if gamma == 2.0 else fw ** gamma
    cls_elem = af * fwg * bce
    if increase_fg != 1.0:                                      # compile-time skip
        cls_elem = jnp.where(is_fg, cls_elem * increase_fg, cls_elem)
    cls_row = jnp.sum(cls_elem, axis=1, keepdims=True)          # (TA, 1)
    cls_sum = jnp.sum(jnp.where(keep_c, cls_row, 0.0))

    # ---- CCS loss on native (TA, E): 1 - cos(embedding, assigned weight) ----
    inv_norm = lax.rsqrt(
        jnp.maximum(jnp.sum(emb * emb, axis=1, keepdims=True), 1e-12))
    cos = jnp.sum(emb * w_sel, axis=1, keepdims=True) * inv_norm
    ccs_sum = jnp.sum(jnp.where(positive_c, 1.0 - cos, 0.0))

    # =================== orientation B: (M, TA), anchors on lanes ============
    # Feeds the lane-dense smooth-L1 regression path (cheap (1,TA) row math).
    ax1 = anchors_r[0:1, :]
    ay1 = anchors_r[1:2, :]
    ax2 = anchors_r[2:3, :]
    ay2 = anchors_r[3:4, :]
    bx1 = rhs[:, 0:1]
    by1 = rhs[:, 1:2]
    bx2 = rhs[:, 2:3]
    by2 = rhs[:, 3:4]
    valid_c = rhs[:, 4:5] != -1.0                               # (M, 1)

    area_ar = (ax2 - ax1) * (ay2 - ay1)                         # (1, TA)
    area_bc = (bx2 - bx1) * (by2 - by1)                         # (M, 1)
    iw2 = jnp.maximum(jnp.minimum(ax2, bx2) - jnp.maximum(ax1, bx1), 0.0)
    ih2 = jnp.maximum(jnp.minimum(ay2, by2) - jnp.maximum(ay1, by1), 0.0)
    inter2 = iw2 * ih2                                          # (M, TA)
    union2 = jnp.maximum(area_ar + area_bc - inter2, 1e-8)
    iou_l = jnp.where(valid_c, inter2 / union2, -1.0)

    iou_max_r = jnp.max(iou_l, axis=0, keepdims=True)           # (1, TA)
    mids_l = lax.broadcasted_iota(jnp.int32, (M, TA), 0)
    arg_r = jnp.min(jnp.where(iou_l == iou_max_r, mids_l, M), axis=0,
                    keepdims=True)
    onehot_l = (mids_l == arg_r).astype(f32)                    # (M, TA)
    positive_r = jnp.logical_and(iou_max_r >= iou_obj, in_range_r)      # (1, TA)

    coords = jnp.dot(annT, onehot_l, preferred_element_type=f32)        # (8, TA)
    gx1 = coords[0:1, :]
    gy1 = coords[1:2, :]
    gx2 = coords[2:3, :]
    gy2 = coords[3:4, :]

    aw = ax2 - ax1
    ah = ay2 - ay1
    acx = ax1 + 0.5 * aw
    acy = ay1 + 0.5 * ah
    gww = jnp.maximum(gx2 - gx1, 1.0)
    ghh = jnp.maximum(gy2 - gy1, 1.0)
    gcx = gx1 + 0.5 * (gx2 - gx1)
    gcy = gy1 + 0.5 * (gy2 - gy1)

    tdx = (gcx - acx) / aw * 10.0
    tdy = (gcy - acy) / ah * 10.0
    tdw = jnp.log(gww / aw) * 5.0
    tdh = jnp.log(ghh / ah) * 5.0

    s2 = sigma * sigma
    inv_s2 = 1.0 / s2

    def smooth_l1(tgt, r):
        d = jnp.abs(tgt - r)
        return jnp.where(d <= inv_s2, 0.5 * s2 * d * d, d - 0.5 * inv_s2)

    reg_row = (smooth_l1(tdx, regr_r[0:1, :]) + smooth_l1(tdy, regr_r[1:2, :]) +
               smooth_l1(tdw, regr_r[2:3, :]) + smooth_l1(tdh, regr_r[3:4, :]))
    reg_sum = jnp.sum(jnp.where(positive_r, reg_row, 0.0))

    num_pos = jnp.sum(positive_r.astype(f32))
    # TODO(synk): assumes the reference takes .mean() over the (n_pos, 4) tensor.
    reg_cnt = num_pos * 4.0
    ccs_cnt = num_pos

    # ---- accumulate the six scalars into one packed (8, 128) output slab ----
    row = lax.broadcasted_iota(jnp.int32, (8, 128), 0)
    packed = (jnp.where(row == 0, cls_sum, 0.0) +
              jnp.where(row == 1, num_pos, 0.0) +
              jnp.where(row == 2, reg_sum, 0.0) +
              jnp.where(row == 3, reg_cnt, 0.0) +
              jnp.where(row == 4, ccs_sum, 0.0) +
              jnp.where(row == 5, ccs_cnt, 0.0)).astype(out_ref.dtype)

    @pl.when(t == 0)
    def _():
        out_ref[...] = jnp.zeros_like(out_ref)

    out_ref[...] += packed[None, None, :, :]


def _disperse_kernel(wnT_ref, wn_ref, out_ref):
    """Dispersion of the (pre-normalized) class weights: mean of per-class max cos."""
    WT = wnT_ref[...]                                           # (C, E) normalized
    W = wn_ref[...]                                             # (E, C) normalized
    C = WT.shape[0]
    if C == 1:
        loss = jnp.zeros((), jnp.float32)
    else:
        gram = jnp.dot(WT, W, preferred_element_type=jnp.float32)       # (C, C)
        r = lax.broadcasted_iota(jnp.int32, (C, C), 0)
        c = lax.broadcasted_iota(jnp.int32, (C, C), 1)
        gram = jnp.where(r == c, -2.0, gram)                    # mask self-sim
        loss = jnp.mean(jnp.max(gram, axis=1, keepdims=True))
    out_ref[...] = jnp.full(out_ref.shape, loss, dtype=out_ref.dtype)


def _anchor_tile(a, cap=1024):
    """Anchor tile: roofline knee is 512-1024; cap keeps v7x (64 MiB VMEM) safe."""
    return a if a <= cap else cap


@jax.jit
def dlde_net_loss(anchors, regressions, classifications, annotations,
                  embeddings, weights):
    """Returns (classification, regression, similarity, dispersion) losses."""
    f32 = jnp.float32
    B, A, _ = anchors.shape
    M = annotations.shape[1]
    C = classifications.shape[2]
    E = embeddings.shape[2]

    TA = _anchor_tile(A)
    n_tiles = pl.cdiv(A, TA)
    # v7x megacore: split the anchor-tile range over a second parallel grid
    # axis (own accumulator slab per split) whenever the tile count is even.
    n_split = 2 if (n_tiles % 2 == 0 and n_tiles >= 2) else 1
    tiles_per_split = n_tiles // n_split
    nt = tiles_per_split

    anchors = anchors.astype(f32)
    regressions = regressions.astype(f32)
    classifications = classifications.astype(f32)
    annotations = annotations.astype(f32)
    embeddings = embeddings.astype(f32)
    weights = weights.astype(f32)

    # Small layout plumbing only (anchors/regressions/annotations are tiny).
    # classifications / embeddings stay NATIVE -> no extra HBM pass.
    anchors_t = jnp.transpose(anchors, (0, 2, 1))               # (B, 4, A)
    regressions_t = jnp.transpose(regressions, (0, 2, 1))       # (B, 4, A)
    annT = jnp.pad(jnp.transpose(annotations, (0, 2, 1)),
                   ((0, 0), (0, 3), (0, 0)))                    # (B, 8, M)

    # Class weights normalized ONCE (hoisted out of the kernel) and
    # pre-gathered per annotation so the kernel's single gather matmul returns
    # both the focal one-hot targets and the assigned class weight.
    w_norm = jnp.sqrt(jnp.maximum(
        jnp.sum(weights * weights, axis=0, keepdims=True), 1e-12))
    w_n = weights / w_norm                                      # (E, C)
    w_n_t = jnp.transpose(w_n, (1, 0))                          # (C, E)
    labels = annotations[..., 4].astype(jnp.int32)              # (B, M)
    lab_oh = jax.nn.one_hot(labels, C, dtype=f32)               # zeros for -1 pads
    w_per_ann = jnp.einsum('bmc,ce->bme', lab_oh, w_n_t)        # (B, M, E)
    rhs_aug = jnp.concatenate([annotations, lab_oh, w_per_ann], axis=-1)

    kernel = functools.partial(
        _dlde_image_kernel, total_anchors=A, tiles_per_split=tiles_per_split,
        num_classes=C, alpha=ALPHA, gamma=GAMMA, sigma=SIGMA,
        iou_bg=IOU_BACKGROUND, iou_obj=IOU_OBJECT, increase_fg=INCREASE_FG)

    packed = pl.pallas_call(
        kernel,
        out_shape=jax.ShapeDtypeStruct((B, n_split, 8, 128), f32),
        grid_spec=pltpu.PrefetchScalarGridSpec(
            num_scalar_prefetch=0,
            grid=(B, n_split, tiles_per_split),
            in_specs=[
                pl.BlockSpec((1, TA, 4), lambda b, s, t: (b, s * nt + t, 0)),
                pl.BlockSpec((1, 4, TA), lambda b, s, t: (b, 0, s * nt + t)),
                pl.BlockSpec((1, 4, TA), lambda b, s, t: (b, 0, s * nt + t)),
                pl.BlockSpec((1, TA, C), lambda b, s, t: (b, s * nt + t, 0)),
                pl.BlockSpec((1, TA, E), lambda b, s, t: (b, s * nt + t, 0)),
                pl.BlockSpec((1, 8, M), lambda b, s, t: (b, 0, 0)),
                pl.BlockSpec((1, M, 5 + C + E), lambda b, s, t: (b, 0, 0)),
            ],
            out_specs=pl.BlockSpec((1, 1, 8, 128), lambda b, s, t: (b, s, 0, 0)),
        ),
        compiler_params=pltpu.CompilerParams(
            dimension_semantics=("parallel", "parallel", "arbitrary"),
            vmem_limit_bytes=32 * 1024 * 1024),
    )(anchors, anchors_t, regressions_t, classifications, embeddings,
      annT, rhs_aug)

    sums = jnp.sum(packed, axis=1)                              # (B, 8, 128)
    cls_sum = sums[:, 0, 0]
    pos_cnt = sums[:, 1, 0]
    reg_sum = sums[:, 2, 0]
    reg_cnt = sums[:, 3, 0]
    ccs_sum = sums[:, 4, 0]
    ccs_cnt = sums[:, 5, 0]

    # Per-image normalization, then mean over the batch (matches the torch
    # pattern of stacking per-image losses and taking .mean()).
    classification = jnp.mean(cls_sum / jnp.maximum(pos_cnt, 1.0))
    regression = jnp.mean(
        jnp.where(reg_cnt > 0.0, reg_sum / jnp.maximum(reg_cnt, 1.0), 0.0))
    similarity = jnp.mean(
        jnp.where(ccs_cnt > 0.0, ccs_sum / jnp.maximum(ccs_cnt, 1.0), 0.0))
    # TODO(synk): images with zero valid annotations fall back to all-background
    # focal loss here; the original torchsight code may special-case them.

    dispersion = pl.pallas_call(
        _disperse_kernel,
        out_shape=jax.ShapeDtypeStruct((8, 128), f32),
        grid_spec=pltpu.PrefetchScalarGridSpec(
            num_scalar_prefetch=0,
            grid=(1,),
            in_specs=[pl.BlockSpec((C, E), lambda i: (0, 0)),
                      pl.BlockSpec((E, C), lambda i: (0, 0))],
            out_specs=pl.BlockSpec((8, 128), lambda i: (0, 0)),
        ),
    )(w_n_t, w_n)[0, 0]

    return classification, regression, similarity, dispersion


if __name__ == "__main__":
    key = jax.random.PRNGKey(0)
    B, A, C, E, M = 2, 128, 8, 32, 8

    # Deterministic anchor grid: 16x16 boxes strided by 8 over a 128x64 canvas.
    idx = jnp.arange(A, dtype=jnp.float32)
    x1 = (idx % 16) * 8.0
    y1 = (idx // 16) * 8.0
    anchors_single = jnp.stack([x1, y1, x1 + 16.0, y1 + 16.0], axis=1)  # (A, 4)
    anchors = jnp.broadcast_to(anchors_single, (B, A, 4)).astype(jnp.float32)

    k1, k2, k3, k4 = jax.random.split(key, 4)
    regressions = 0.1 * jax.random.normal(k1, (B, A, 4), dtype=jnp.float32)
    classifications = jax.random.uniform(k2, (B, A, C), dtype=jnp.float32,
                                         minval=0.01, maxval=0.99)
    embeddings = jax.random.normal(k3, (B, A, E), dtype=jnp.float32)
    # Deterministic "model.classification.weights" parameter (E, C).
    weights = jax.random.normal(k4, (E, C), dtype=jnp.float32)

    # Annotations: padded with -1, a few boxes exactly matching anchors so that
    # each image has positive anchors (IoU == 1 >= 0.5).
    annotations = -jnp.ones((B, M, 5), dtype=jnp.float32)
    objects = [[(5, 1.0), (40, 3.0), (77, 6.0)],
               [(10, 0.0), (100, 7.0)]]
    for b, rows in enumerate(objects):
        for j, (a_idx, label) in enumerate(rows):
            annotations = annotations.at[b, j, :4].set(anchors_single[a_idx])
            annotations = annotations.at[b, j, 4].set(label)

    result = jax.block_until_ready(
        dlde_net_loss(anchors, regressions, classifications, annotations,
                      embeddings, weights))
    assert all(bool(jnp.isfinite(v)) for v in result)
    print("KERNEL_OK")
</pallas_src>

<mosaic_0001>
module attributes {stable_mosaic.version = 11 : i64} {
  func.func @_disperse_kernel(%arg0: i32, %arg1: memref<8x32xf32, #tpu.memory_space<vmem>>, %arg2: memref<32x8xf32, #tpu.memory_space<vmem>>, %arg3: memref<8x128xf32, #tpu.memory_space<vmem>>) attributes {dimension_semantics = [#tpu.dimension_semantics<arbitrary>], iteration_bounds = array<i64: 1>, scalar_prefetch = 0 : i64, scratch_operands = 0 : i64, tpu.core_type = #tpu.core_type<tc>, window_params = [{pipeline_mode = #tpu.pipeline_mode<synchronous>, transform_indices = @transform_0, window_bounds = array<i64: 8, 32>}, {pipeline_mode = #tpu.pipeline_mode<synchronous>, transform_indices = @transform_1, window_bounds = array<i64: 32, 8>}, {pipeline_mode = #tpu.pipeline_mode<synchronous>, transform_indices = @transform_2, window_bounds = array<i64: 8, 128>}]} {
    %c0 = arith.constant 0 : index
    %c0_0 = arith.constant 0 : index
    %0 = vector.load %arg1[%c0, %c0_0] : memref<8x32xf32, #tpu.memory_space<vmem>>, vector<8x32xf32>
    %c0_1 = arith.constant 0 : index
    %c0_2 = arith.constant 0 : index
    %1 = vector.load %arg2[%c0_1, %c0_2] : memref<32x8xf32, #tpu.memory_space<vmem>>, vector<32x8xf32>
    %cst = arith.constant dense<0.000000e+00> : vector<8x8xf32>
    %2 = tpu.matmul %0, %1, %cst {dimension_numbers = #tpu.dot_dimension_numbers<[1], [0], [0], [1], [0, 0, 1, 1], [], []>} : vector<8x32xf32>, vector<32x8xf32>, vector<8x8xf32> -> vector<8x8xf32>
    %3 = tpu.iota {dimensions = array<i32: 0>} : vector<8x8xi32>
    %4 = tpu.iota {dimensions = array<i32: 1>} : vector<8x8xi32>
    %5 = arith.cmpi eq, %3, %4 : vector<8x8xi32>
    %cst_3 = arith.constant -2.000000e+00 : f32
    %6 = vector.broadcast %cst_3 : f32 to vector<8x8xf32>
    %7 = arith.select %5, %6, %2 : vector<8x8xi1>, vector<8x8xf32>
    %cst_4 = arith.constant dense<0xFF800000> : vector<8xf32>
    %8 = vector.multi_reduction <maximumf>, %7, %cst_4 [1] : vector<8x8xf32> to vector<8xf32>
    %9 = vector.shape_cast %8 : vector<8xf32> to vector<8x1xf32>
    %10 = vector.shape_cast %9 : vector<8x1xf32> to vector<1x8x1xf32>
    %cst_5 = arith.constant dense<0.000000e+00> : vector<1xf32>
    %11 = vector.multi_reduction <add>, %10, %cst_5 [1, 2] : vector<1x8x1xf32> to vector<1xf32>
    %12 = vector.shape_cast %11 : vector<1xf32> to vector<1x1x1xf32>
    %13 = vector.extract %12[0, 0, 0] : f32 from vector<1x1x1xf32>
    %cst_6 = arith.constant 8.000000e+00 : f32
    %14 = arith.divf %13, %cst_6 : f32
    %15 = vector.broadcast %14 : f32 to vector<8x128xf32>
    %c0_7 = arith.constant 0 : index
    %c0_8 = arith.constant 0 : index
    %16 = vector.load %arg3[%c0_7, %c0_8] : memref<8x128xf32, #tpu.memory_space<vmem>>, vector<8x128xf32>
    tpu.vector_store %arg3[%c0_7, %c0_8], %15 {strides = array<i32>} : memref<8x128xf32, #tpu.memory_space<vmem>>, vector<8x128xf32>,
    return
  }
  func.func @transform_0(%arg0: i32) -> (i32, i32) {
    %c0_i32 = arith.constant 0 : i32
    %c0_i32_0 = arith.constant 0 : i32
    %c0_i32_1 = arith.constant 0 : i32
    return %c0_i32, %c0_i32_0 : i32, i32
  }
  func.func @transform_1(%arg0: i32) -> (i32, i32) {
    %c0_i32 = arith.constant 0 : i32
    %c0_i32_0 = arith.constant 0 : i32
    %c0_i32_1 = arith.constant 0 : i32
    return %c0_i32, %c0_i32_0 : i32, i32
  }
  func.func @transform_2(%arg0: i32) -> (i32, i32) {
    %c0_i32 = arith.constant 0 : i32
    %c0_i32_0 = arith.constant 0 : i32
    %c0_i32_1 = arith.constant 0 : i32
    return %c0_i32, %c0_i32_0 : i32, i32
  }
}

module attributes {stable_mosaic.version = 11 : i64} {
  func.func @_dlde_image_kernel(%arg0: i32, %arg1: i32, %arg2: i32, %arg3: memref<1x128x4xf32, #tpu.memory_space<vmem>>, %arg4: memref<1x4x128xf32, #tpu.memory_space<vmem>>, %arg5: memref<1x4x128xf32, #tpu.memory_space<vmem>>, %arg6: memref<1x128x8xf32, #tpu.memory_space<vmem>>, %arg7: memref<1x128x32xf32, #tpu.memory_space<vmem>>, %arg8: memref<1x8x8xf32, #tpu.memory_space<vmem>>, %arg9: memref<1x8x45xf32, #tpu.memory_space<vmem>>, %arg10: memref<1x1x8x128xf32, #tpu.memory_space<vmem>>) attributes {dimension_semantics = [#tpu.dimension_semantics<parallel>, #tpu.dimension_semantics<parallel>, #tpu.dimension_semantics<arbitrary>], iteration_bounds = array<i64: 2, 1, 1>, scalar_prefetch = 0 : i64, scratch_operands = 0 : i64, tpu.core_type = #tpu.core_type<tc>, window_params = [{transform_indices = @transform_0, window_bounds = array<i64: 1, 128, 4>}, {transform_indices = @transform_1, window_bounds = array<i64: 1, 4, 128>}, {transform_indices = @transform_2, window_bounds = array<i64: 1, 4, 128>}, {transform_indices = @transform_3, window_bounds = array<i64: 1, 128, 8>}, {transform_indices = @transform_4, window_bounds = array<i64: 1, 128, 32>}, {transform_indices = @transform_5, window_bounds = array<i64: 1, 8, 8>}, {transform_indices = @transform_6, window_bounds = array<i64: 1, 8, 45>}, {transform_indices = @transform_7, window_bounds = array<i64: 1, 1, 8, 128>}]} {
    %c0 = arith.constant 0 : index
    %c0_0 = arith.constant 0 : index
    %c0_1 = arith.constant 0 : index
    %0 = vector.load %arg3[%c0, %c0_0, %c0_1] : memref<1x128x4xf32, #tpu.memory_space<vmem>>, vector<1x128x4xf32>
    %1 = vector.shape_cast %0 : vector<1x128x4xf32> to vector<128x4xf32>
    %c0_2 = arith.constant 0 : index
    %c0_3 = arith.constant 0 : index
    %c0_4 = arith.constant 0 : index
    %2 = vector.load %arg4[%c0_2, %c0_3, %c0_4] : memref<1x4x128xf32, #tpu.memory_space<vmem>>, vector<1x4x128xf32>
    %3 = vector.shape_cast %2 : vector<1x4x128xf32> to vector<4x128xf32>
    %c0_5 = arith.constant 0 : index
    %c0_6 = arith.constant 0 : index
    %c0_7 = arith.constant 0 : index
    %4 = vector.load %arg5[%c0_5, %c0_6, %c0_7] : memref<1x4x128xf32, #tpu.memory_space<vmem>>, vector<1x4x128xf32>
    %5 = vector.shape_cast %4 : vector<1x4x128xf32> to vector<4x128xf32>
    %c0_8 = arith.constant 0 : index
    %c0_9 = arith.constant 0 : index
    %c0_10 = arith.constant 0 : index
    %6 = vector.load %arg6[%c0_8, %c0_9, %c0_10] : memref<1x128x8xf32, #tpu.memory_space<vmem>>, vector<1x128x8xf32>
    %7 = vector.shape_cast %6 : vector<1x128x8xf32> to vector<128x8xf32>
    %c0_11 = arith.constant 0 : index
    %c0_12 = arith.constant 0 : index
    %c0_13 = arith.constant 0 : index
    %8 = vector.load %arg7[%c0_11, %c0_12, %c0_13] : memref<1x128x32xf32, #tpu.memory_space<vmem>>, vector<1x128x32xf32>
    %9 = vector.shape_cast %8 : vector<1x128x32xf32> to vector<128x32xf32>
    %c0_14 = arith.constant 0 : index
    %c0_15 = arith.constant 0 : index
    %c0_16 = arith.constant 0 : index
    %10 = vector.load %arg8[%c0_14, %c0_15, %c0_16] : memref<1x8x8xf32, #tpu.memory_space<vmem>>, vector<1x8x8xf32>
    %11 = vector.shape_cast %10 : vector<1x8x8xf32> to vector<8x8xf32>
    %c0_17 = arith.constant 0 : index
    %c0_18 = arith.constant 0 : index
    %c0_19 = arith.constant 0 : index
    %12 = vector.load %arg9[%c0_17, %c0_18, %c0_19] : memref<1x8x45xf32, #tpu.memory_space<vmem>>, vector<1x8x45xf32>
    %13 = vector.shape_cast %12 : vector<1x8x45xf32> to vector<8x45xf32>
    %c1_i32 = arith.constant 1 : i32
    %14 = arith.muli %arg1, %c1_i32 : i32
    %15 = arith.addi %14, %arg2 : i32
    %c128_i32 = arith.constant 128 : i32
    %16 = arith.muli %15, %c128_i32 : i32
    %17 = tpu.iota {dimensions = array<i32: 0>} : vector<128x1xi32>
    %18 = vector.broadcast %16 : i32 to vector<128x1xi32>
    %19 = arith.addi %17, %18 : vector<128x1xi32>
    %c128_i32_20 = arith.constant 128 : i32
    %20 = vector.broadcast %c128_i32_20 : i32 to vector<128x1xi32>
    %21 = arith.cmpi slt, %19, %20 : vector<128x1xi32>
    %22 = tpu.iota {dimensions = array<i32: 1>} : vector<1x128xi32>
    %23 = vector.broadcast %16 : i32 to vector<1x128xi32>
    %24 = arith.addi %22, %23 : vector<1x128xi32>
    %c128_i32_21 = arith.constant 128 : i32
    %25 = vector.broadcast %c128_i32_21 : i32 to vector<1x128xi32>
    %26 = arith.cmpi slt, %24, %25 : vector<1x128xi32>
    %27 = vector.extract_strided_slice %1 {offsets = [0, 0], sizes = [128, 1], strides = [1, 1]} : vector<128x4xf32> to vector<128x1xf32>
    %28 = vector.extract_strided_slice %1 {offsets = [0, 1], sizes = [128, 1], strides = [1, 1]} : vector<128x4xf32> to vector<128x1xf32>
    %29 = vector.extract_strided_slice %1 {offsets = [0, 2], sizes = [128, 1], strides = [1, 1]} : vector<128x4xf32> to vector<128x1xf32>
    %30 = vector.extract_strided_slice %1 {offsets = [0, 3], sizes = [128, 1], strides = [1, 1]} : vector<128x4xf32> to vector<128x1xf32>
    %31 = vector.extract_strided_slice %11 {offsets = [0, 0], sizes = [1, 8], strides = [1, 1]} : vector<8x8xf32> to vector<1x8xf32>
    %32 = vector.extract_strided_slice %11 {offsets = [1, 0], sizes = [1, 8], strides = [1, 1]} : vector<8x8xf32> to vector<1x8xf32>
    %33 = vector.extract_strided_slice %11 {offsets = [2, 0], sizes = [1, 8], strides = [1, 1]} : vector<8x8xf32> to vector<1x8xf32>
    %34 = vector.extract_strided_slice %11 {offsets = [3, 0], sizes = [1, 8], strides = [1, 1]} : vector<8x8xf32> to vector<1x8xf32>
    %35 = vector.extract_strided_slice %11 {offsets = [4, 0], sizes = [1, 8], strides = [1, 1]} : vector<8x8xf32> to vector<1x8xf32>
    %cst = arith.constant -1.000000e+00 : f32
    %36 = vector.broadcast %cst : f32 to vector<1x8xf32>
    %37 = arith.cmpf one, %35, %36 : vector<1x8xf32>
    %38 = arith.subf %29, %27 : vector<128x1xf32>
    %39 = arith.subf %30, %28 : vector<128x1xf32>
    %40 = arith.mulf %38, %39 : vector<128x1xf32>
    %41 = arith.subf %33, %31 : vector<1x8xf32>
    %42 = arith.subf %34, %32 : vector<1x8xf32>
    %43 = arith.mulf %41, %42 : vector<1x8xf32>
    %44 = vector.broadcast %29 : vector<128x1xf32> to vector<128x8xf32>
    %45 = vector.broadcast %33 : vector<1x8xf32> to vector<128x8xf32>
    %46 = arith.minimumf %44, %45 : vector<128x8xf32>
    %47 = vector.broadcast %27 : vector<128x1xf32> to vector<128x8xf32>
    %48 = vector.broadcast %31 : vector<1x8xf32> to vector<128x8xf32>
    %49 = arith.maximumf %47, %48 : vector<128x8xf32>
    %50 = arith.subf %46, %49 : vector<128x8xf32>
    %cst_22 = arith.constant 0.000000e+00 : f32
    %51 = vector.broadcast %cst_22 : f32 to vector<128x8xf32>
    %52 = arith.maximumf %50, %51 : vector<128x8xf32>
    %53 = vector.broadcast %30 : vector<128x1xf32> to vector<128x8xf32>
    %54 = vector.broadcast %34 : vector<1x8xf32> to vector<128x8xf32>
    %55 = arith.minimumf %53, %54 : vector<128x8xf32>
    %56 = vector.broadcast %28 : vector<128x1xf32> to vector<128x8xf32>
    %57 = vector.broadcast %32 : vector<1x8xf32> to vector<128x8xf32>
    %58 = arith.maximumf %56, %57 : vector<128x8xf32>
    %59 = arith.subf %55, %58 : vector<128x8xf32>
    %cst_23 = arith.constant 0.000000e+00 : f32
    %60 = vector.broadcast %cst_23 : f32 to vector<128x8xf32>
    %61 = arith.maximumf %59, %60 : vector<128x8xf32>
    %62 = arith.mulf %52, %61 : vector<128x8xf32>
    %63 = vector.broadcast %40 : vector<128x1xf32> to vector<128x8xf32>
    %64 = vector.broadcast %43 : vector<1x8xf32> to vector<128x8xf32>
    %65 = arith.addf %63, %64 : vector<128x8xf32>
    %66 = arith.subf %65, %62 : vector<128x8xf32>
    %cst_24 = arith.constant 9.99999993E-9 : f32
    %67 = vector.broadcast %cst_24 : f32 to vector<128x8xf32>
    %68 = arith.maximumf %66, %67 : vector<128x8xf32>
    %69 = arith.divf %62, %68 : vector<128x8xf32>
    %cst_25 = arith.constant -1.000000e+00 : f32
    %70 = vector.shape_cast %37 : vector<1x8xi1> to vector<1x8xi1>
    %71 = vector.broadcast %70 : vector<1x8xi1> to vector<128x8xi1>
    %72 = vector.broadcast %cst_25 : f32 to vector<128x8xf32>
    %73 = arith.select %71, %69, %72 : vector<128x8xi1>, vector<128x8xf32>
    %cst_26 = arith.constant dense<0xFF800000> : vector<128xf32>
    %74 = vector.multi_reduction <maximumf>, %73, %cst_26 [1] : vector<128x8xf32> to vector<128xf32>
    %75 = vector.shape_cast %74 : vector<128xf32> to vector<128x1xf32>
    %76 = tpu.iota {dimensions = array<i32: 1>} : vector<128x8xi32>
    %77 = vector.broadcast %75 : vector<128x1xf32> to vector<128x8xf32>
    %78 = arith.cmpf oeq, %73, %77 : vector<128x8xf32>
    %c8_i32 = arith.constant 8 : i32
    %79 = vector.broadcast %c8_i32 : i32 to vector<128x8xi32>
    %80 = arith.select %78, %76, %79 : vector<128x8xi1>, vector<128x8xi32>
    %cst_27 = arith.constant dense<2147483647> : vector<128xi32>
    %81 = vector.multi_reduction <minsi>, %80, %cst_27 [1] : vector<128x8xi32> to vector<128xi32>
    %82 = vector.shape_cast %81 : vector<128xi32> to vector<128x1xi32>
    %cst_28 = arith.constant 5.000000e-01 : f32
    %83 = vector.broadcast %cst_28 : f32 to vector<128x1xf32>
    %84 = arith.cmpf oge, %75, %83 : vector<128x1xf32>
    %85 = arith.andi %84, %21 : vector<128x1xi1>
    %cst_29 = arith.constant 5.000000e-01 : f32
    %86 = vector.broadcast %cst_29 : f32 to vector<128x1xf32>
    %87 = arith.cmpf oge, %75, %86 : vector<128x1xf32>
    %cst_30 = arith.constant 4.000000e-01 : f32
    %88 = vector.broadcast %cst_30 : f32 to vector<128x1xf32>
    %89 = arith.cmpf olt, %75, %88 : vector<128x1xf32>
    %90 = arith.ori %87, %89 : vector<128x1xi1>
    %91 = arith.andi %90, %21 : vector<128x1xi1>
    %92 = vector.broadcast %82 : vector<128x1xi32> to vector<128x8xi32>
    %93 = arith.cmpi eq, %76, %92 : vector<128x8xi32>
    %94 = vector.broadcast %85 : vector<128x1xi1> to vector<128x8xi1>
    %95 = arith.andi %93, %94 : vector<128x8xi1>
    %cst_31 = arith.constant 1.000000e+00 : f32
    %cst_32 = arith.constant 0.000000e+00 : f32
    %96 = vector.broadcast %cst_31 : f32 to vector<128x8xf32>
    %97 = vector.broadcast %cst_32 : f32 to vector<128x8xf32>
    %98 = arith.select %95, %96, %97 : vector<128x8xi1>, vector<128x8xf32>
    %99 = vector.extract_strided_slice %13 {offsets = [0, 5], sizes = [8, 40], strides = [1, 1]} : vector<8x45xf32> to vector<8x40xf32>
    %cst_33 = arith.constant dense<0.000000e+00> : vector<128x40xf32>
    %100 = tpu.matmul %98, %99, %cst_33 {dimension_numbers = #tpu.dot_dimension_numbers<[1], [0], [0], [1], [0, 0, 1, 1], [], []>} : vector<128x8xf32>, vector<8x40xf32>, vector<128x40xf32> -> vector<128x40xf32>
    %101 = vector.extract_strided_slice %100 {offsets = [0, 0], sizes = [128, 8], strides = [1, 1]} : vector<128x40xf32> to vector<128x8xf32>
    %102 = vector.extract_strided_slice %100 {offsets = [0, 8], sizes = [128, 32], strides = [1, 1]} : vector<128x40xf32> to vector<128x32xf32>
    %cst_34 = arith.constant 9.99999974E-5 : f32
    %cst_35 = arith.constant 0.999899983 : f32
    %103 = vector.broadcast %cst_34 : f32 to vector<128x8xf32>
    %104 = arith.maximumf %103, %7 : vector<128x8xf32>
    %105 = vector.broadcast %cst_35 : f32 to vector<128x8xf32>
    %106 = arith.minimumf %105, %104 : vector<128x8xf32>
    %cst_36 = arith.constant 5.000000e-01 : f32
    %107 = vector.broadcast %cst_36 : f32 to vector<128x8xf32>
    %108 = arith.cmpf ogt, %101, %107 : vector<128x8xf32>
    %cst_37 = arith.constant 1.000000e+00 : f32
    %109 = vector.broadcast %cst_37 : f32 to vector<128x8xf32>
    %110 = arith.subf %109, %106 : vector<128x8xf32>
    %111 = arith.select %108, %106, %110 : vector<128x8xi1>, vector<128x8xf32>
    %cst_38 = arith.constant 1.000000e+00 : f32
    %112 = vector.broadcast %cst_38 : f32 to vector<128x8xf32>
    %113 = arith.subf %112, %111 : vector<128x8xf32>
    %cst_39 = arith.constant -5.000000e-01 : f32
    %114 = vector.broadcast %cst_39 : f32 to vector<128x8xf32>
    %115 = arith.mulf %114, %101 : vector<128x8xf32>
    %cst_40 = arith.constant 7.500000e-01 : f32
    %116 = vector.broadcast %cst_40 : f32 to vector<128x8xf32>
    %117 = arith.addf %116, %115 : vector<128x8xf32>
    %118 = math.log %111 : vector<128x8xf32>
    %cst_41 = arith.constant 0.000000e+00 : f32
    %119 = vector.broadcast %cst_41 : f32 to vector<128x8xf32>
    %120 = arith.subf %119, %118 : vector<128x8xf32>
    %121 = arith.mulf %113, %113 : vector<128x8xf32>
    %122 = arith.mulf %117, %121 : vector<128x8xf32>
    %123 = arith.mulf %122, %120 : vector<128x8xf32>
    %cst_42 = arith.constant dense<0.000000e+00> : vector<128xf32>
    %124 = vector.multi_reduction <add>, %123, %cst_42 [1] : vector<128x8xf32> to vector<128xf32>
    %125 = vector.shape_cast %124 : vector<128xf32> to vector<128x1xf32>
    %cst_43 = arith.constant 0.000000e+00 : f32
    %126 = vector.broadcast %cst_43 : f32 to vector<128x1xf32>
    %127 = arith.select %91, %125, %126 : vector<128x1xi1>, vector<128x1xf32>
    %128 = vector.shape_cast %127 : vector<128x1xf32> to vector<1x128x1xf32>
    %cst_44 = arith.constant dense<0.000000e+00> : vector<1xf32>
    %129 = vector.multi_reduction <add>, %128, %cst_44 [1, 2] : vector<1x128x1xf32> to vector<1xf32>
    %130 = vector.shape_cast %129 : vector<1xf32> to vector<1x1x1xf32>
    %131 = vector.extract %130[0, 0, 0] : f32 from vector<1x1x1xf32>
    %132 = arith.mulf %9, %9 : vector<128x32xf32>
    %cst_45 = arith.constant dense<0.000000e+00> : vector<128xf32>
    %133 = vector.multi_reduction <add>, %132, %cst_45 [1] : vector<128x32xf32> to vector<128xf32>
    %134 = vector.shape_cast %133 : vector<128xf32> to vector<128x1xf32>
    %cst_46 = arith.constant 9.99999996E-13 : f32
    %135 = vector.broadcast %cst_46 : f32 to vector<128x1xf32>
    %136 = arith.maximumf %134, %135 : vector<128x1xf32>
    %137 = math.rsqrt %136 : vector<128x1xf32>
    %138 = arith.mulf %9, %102 : vector<128x32xf32>
    %cst_47 = arith.constant dense<0.000000e+00> : vector<128xf32>
    %139 = vector.multi_reduction <add>, %138, %cst_47 [1] : vector<128x32xf32> to vector<128xf32>
    %140 = vector.shape_cast %139 : vector<128xf32> to vector<128x1xf32>
    %141 = arith.mulf %140, %137 : vector<128x1xf32>
    %cst_48 = arith.constant 1.000000e+00 : f32
    %142 = vector.broadcast %cst_48 : f32 to vector<128x1xf32>
    %143 = arith.subf %142, %141 : vector<128x1xf32>
    %cst_49 = arith.constant 0.000000e+00 : f32
    %144 = vector.broadcast %cst_49 : f32 to vector<128x1xf32>
    %145 = arith.select %85, %143, %144 : vector<128x1xi1>, vector<128x1xf32>
    %146 = vector.shape_cast %145 : vector<128x1xf32> to vector<1x128x1xf32>
    %cst_50 = arith.constant dense<0.000000e+00> : vector<1xf32>
    %147 = vector.multi_reduction <add>, %146, %cst_50 [1, 2] : vector<1x128x1xf32> to vector<1xf32>
    %148 = vector.shape_cast %147 : vector<1xf32> to vector<1x1x1xf32>
    %149 = vector.extract %148[0, 0, 0] : f32 from vector<1x1x1xf32>
    %150 = vector.extract_strided_slice %3 {offsets = [0, 0], sizes = [1, 128], strides = [1, 1]} : vector<4x128xf32> to vector<1x128xf32>
    %151 = vector.extract_strided_slice %3 {offsets = [1, 0], sizes = [1, 128], strides = [1, 1]} : vector<4x128xf32> to vector<1x128xf32>
    %152 = vector.extract_strided_slice %3 {offsets = [2, 0], sizes = [1, 128], strides = [1, 1]} : vector<4x128xf32> to vector<1x128xf32>
    %153 = vector.extract_strided_slice %3 {offsets = [3, 0], sizes = [1, 128], strides = [1, 1]} : vector<4x128xf32> to vector<1x128xf32>
    %154 = vector.extract_strided_slice %13 {offsets = [0, 0], sizes = [8, 1], strides = [1, 1]} : vector<8x45xf32> to vector<8x1xf32>
    %155 = vector.extract_strided_slice %13 {offsets = [0, 1], sizes = [8, 1], strides = [1, 1]} : vector<8x45xf32> to vector<8x1xf32>
    %156 = vector.extract_strided_slice %13 {offsets = [0, 2], sizes = [8, 1], strides = [1, 1]} : vector<8x45xf32> to vector<8x1xf32>
    %157 = vector.extract_strided_slice %13 {offsets = [0, 3], sizes = [8, 1], strides = [1, 1]} : vector<8x45xf32> to vector<8x1xf32>
    %158 = vector.extract_strided_slice %13 {offsets = [0, 4], sizes = [8, 1], strides = [1, 1]} : vector<8x45xf32> to vector<8x1xf32>
    %cst_51 = arith.constant -1.000000e+00 : f32
    %159 = vector.broadcast %cst_51 : f32 to vector<8x1xf32>
    %160 = arith.cmpf one, %158, %159 : vector<8x1xf32>
    %161 = arith.subf %152, %150 : vector<1x128xf32>
    %162 = arith.subf %153, %151 : vector<1x128xf32>
    %163 = arith.mulf %161, %162 : vector<1x128xf32>
    %164 = arith.subf %156, %154 : vector<8x1xf32>
    %165 = arith.subf %157, %155 : vector<8x1xf32>
    %166 = arith.mulf %164, %165 : vector<8x1xf32>
    %167 = vector.broadcast %152 : vector<1x128xf32> to vector<8x128xf32>
    %168 = vector.broadcast %156 : vector<8x1xf32> to vector<8x128xf32>
    %169 = arith.minimumf %167, %168 : vector<8x128xf32>
    %170 = vector.broadcast %150 : vector<1x128xf32> to vector<8x128xf32>
    %171 = vector.broadcast %154 : vector<8x1xf32> to vector<8x128xf32>
    %172 = arith.maximumf %170, %171 : vector<8x128xf32>
    %173 = arith.subf %169, %172 : vector<8x128xf32>
    %cst_52 = arith.constant 0.000000e+00 : f32
    %174 = vector.broadcast %cst_52 : f32 to vector<8x128xf32>
    %175 = arith.maximumf %173, %174 : vector<8x128xf32>
    %176 = vector.broadcast %153 : vector<1x128xf32> to vector<8x128xf32>
    %177 = vector.broadcast %157 : vector<8x1xf32> to vector<8x128xf32>
    %178 = arith.minimumf %176, %177 : vector<8x128xf32>
    %179 = vector.broadcast %151 : vector<1x128xf32> to vector<8x128xf32>
    %180 = vector.broadcast %155 : vector<8x1xf32> to vector<8x128xf32>
    %181 = arith.maximumf %179, %180 : vector<8x128xf32>
    %182 = arith.subf %178, %181 : vector<8x128xf32>
    %cst_53 = arith.constant 0.000000e+00 : f32
    %183 = vector.broadcast %cst_53 : f32 to vector<8x128xf32>
    %184 = arith.maximumf %182, %183 : vector<8x128xf32>
    %185 = arith.mulf %175, %184 : vector<8x128xf32>
    %186 = vector.broadcast %163 : vector<1x128xf32> to vector<8x128xf32>
    %187 = vector.broadcast %166 : vector<8x1xf32> to vector<8x128xf32>
    %188 = arith.addf %186, %187 : vector<8x128xf32>
    %189 = arith.subf %188, %185 : vector<8x128xf32>
    %cst_54 = arith.constant 9.99999993E-9 : f32
    %190 = vector.broadcast %cst_54 : f32 to vector<8x128xf32>
    %191 = arith.maximumf %189, %190 : vector<8x128xf32>
    %192 = arith.divf %185, %191 : vector<8x128xf32>
    %cst_55 = arith.constant -1.000000e+00 : f32
    %193 = vector.shape_cast %160 : vector<8x1xi1> to vector<8x1xi1>
    %194 = vector.broadcast %193 : vector<8x1xi1> to vector<8x128xi1>
    %195 = vector.broadcast %cst_55 : f32 to vector<8x128xf32>
    %196 = arith.select %194, %192, %195 : vector<8x128xi1>, vector<8x128xf32>
    %cst_56 = arith.constant dense<0xFF800000> : vector<128xf32>
    %197 = vector.multi_reduction <maximumf>, %196, %cst_56 [0] : vector<8x128xf32> to vector<128xf32>
    %198 = vector.shape_cast %197 : vector<128xf32> to vector<1x128xf32>
    %199 = tpu.iota {dimensions = array<i32: 0>} : vector<8x128xi32>
    %200 = vector.broadcast %198 : vector<1x128xf32> to vector<8x128xf32>
    %201 = arith.cmpf oeq, %196, %200 : vector<8x128xf32>
    %c8_i32_57 = arith.constant 8 : i32
    %202 = vector.broadcast %c8_i32_57 : i32 to vector<8x128xi32>
    %203 = arith.select %201, %199, %202 : vector<8x128xi1>, vector<8x128xi32>
    %cst_58 = arith.constant dense<2147483647> : vector<128xi32>
    %204 = vector.multi_reduction <minsi>, %203, %cst_58 [0] : vector<8x128xi32> to vector<128xi32>
    %205 = vector.shape_cast %204 : vector<128xi32> to vector<1x128xi32>
    %206 = vector.broadcast %205 : vector<1x128xi32> to vector<8x128xi32>
    %207 = arith.cmpi eq, %199, %206 : vector<8x128xi32>
    %208 = arith.extui %207 : vector<8x128xi1> to vector<8x128xi32>
    %209 = arith.sitofp %208 : vector<8x128xi32> to vector<8x128xf32>
    %cst_59 = arith.constant 5.000000e-01 : f32
    %210 = vector.broadcast %cst_59 : f32 to vector<1x128xf32>
    %211 = arith.cmpf oge, %198, %210 : vector<1x128xf32>
    %212 = arith.andi %211, %26 : vector<1x128xi1>
    %cst_60 = arith.constant dense<0.000000e+00> : vector<8x128xf32>
    %213 = tpu.matmul %11, %209, %cst_60 {dimension_numbers = #tpu.dot_dimension_numbers<[1], [0], [0], [1], [0, 0, 1, 1], [], []>} : vector<8x8xf32>, vector<8x128xf32>, vector<8x128xf32> -> vector<8x128xf32>
    %214 = vector.extract_strided_slice %213 {offsets = [0, 0], sizes = [1, 128], strides = [1, 1]} : vector<8x128xf32> to vector<1x128xf32>
    %215 = vector.extract_strided_slice %213 {offsets = [1, 0], sizes = [1, 128], strides = [1, 1]} : vector<8x128xf32> to vector<1x128xf32>
    %216 = vector.extract_strided_slice %213 {offsets = [2, 0], sizes = [1, 128], strides = [1, 1]} : vector<8x128xf32> to vector<1x128xf32>
    %217 = vector.extract_strided_slice %213 {offsets = [3, 0], sizes = [1, 128], strides = [1, 1]} : vector<8x128xf32> to vector<1x128xf32>
    %218 = arith.subf %152, %150 : vector<1x128xf32>
    %219 = arith.subf %153, %151 : vector<1x128xf32>
    %cst_61 = arith.constant 5.000000e-01 : f32
    %220 = vector.broadcast %cst_61 : f32 to vector<1x128xf32>
    %221 = arith.mulf %220, %218 : vector<1x128xf32>
    %222 = arith.addf %150, %221 : vector<1x128xf32>
    %cst_62 = arith.constant 5.000000e-01 : f32
    %223 = vector.broadcast %cst_62 : f32 to vector<1x128xf32>
    %224 = arith.mulf %223, %219 : vector<1x128xf32>
    %225 = arith.addf %151, %224 : vector<1x128xf32>
    %226 = arith.subf %216, %214 : vector<1x128xf32>
    %cst_63 = arith.constant 1.000000e+00 : f32
    %227 = vector.broadcast %cst_63 : f32 to vector<1x128xf32>
    %228 = arith.maximumf %226, %227 : vector<1x128xf32>
    %229 = arith.subf %217, %215 : vector<1x128xf32>
    %cst_64 = arith.constant 1.000000e+00 : f32
    %230 = vector.broadcast %cst_64 : f32 to vector<1x128xf32>
    %231 = arith.maximumf %229, %230 : vector<1x128xf32>
    %232 = arith.subf %216, %214 : vector<1x128xf32>
    %cst_65 = arith.constant 5.000000e-01 : f32
    %233 = vector.broadcast %cst_65 : f32 to vector<1x128xf32>
    %234 = arith.mulf %233, %232 : vector<1x128xf32>
    %235 = arith.addf %214, %234 : vector<1x128xf32>
    %236 = arith.subf %217, %215 : vector<1x128xf32>
    %cst_66 = arith.constant 5.000000e-01 : f32
    %237 = vector.broadcast %cst_66 : f32 to vector<1x128xf32>
    %238 = arith.mulf %237, %236 : vector<1x128xf32>
    %239 = arith.addf %215, %238 : vector<1x128xf32>
    %240 = arith.subf %235, %222 : vector<1x128xf32>
    %241 = arith.divf %240, %218 : vector<1x128xf32>
    %cst_67 = arith.constant 1.000000e+01 : f32
    %242 = vector.broadcast %cst_67 : f32 to vector<1x128xf32>
    %243 = arith.mulf %241, %242 : vector<1x128xf32>
    %244 = arith.subf %239, %225 : vector<1x128xf32>
    %245 = arith.divf %244, %219 : vector<1x128xf32>
    %cst_68 = arith.constant 1.000000e+01 : f32
    %246 = vector.broadcast %cst_68 : f32 to vector<1x128xf32>
    %247 = arith.mulf %245, %246 : vector<1x128xf32>
    %248 = arith.divf %228, %218 : vector<1x128xf32>
    %249 = math.log %248 : vector<1x128xf32>
    %cst_69 = arith.constant 5.000000e+00 : f32
    %250 = vector.broadcast %cst_69 : f32 to vector<1x128xf32>
    %251 = arith.mulf %249, %250 : vector<1x128xf32>
    %252 = arith.divf %231, %219 : vector<1x128xf32>
    %253 = math.log %252 : vector<1x128xf32>
    %cst_70 = arith.constant 5.000000e+00 : f32
    %254 = vector.broadcast %cst_70 : f32 to vector<1x128xf32>
    %255 = arith.mulf %253, %254 : vector<1x128xf32>
    %256 = vector.extract_strided_slice %5 {offsets = [0, 0], sizes = [1, 128], strides = [1, 1]} : vector<4x128xf32> to vector<1x128xf32>
    %257 = arith.subf %243, %256 : vector<1x128xf32>
    %258 = math.absf %257 : vector<1x128xf32>
    %cst_71 = arith.constant 0.111111112 : f32
    %259 = vector.broadcast %cst_71 : f32 to vector<1x128xf32>
    %260 = arith.cmpf ole, %258, %259 : vector<1x128xf32>
    %cst_72 = arith.constant 4.500000e+00 : f32
    %261 = vector.broadcast %cst_72 : f32 to vector<1x128xf32>
    %262 = arith.mulf %261, %258 : vector<1x128xf32>
    %263 = arith.mulf %262, %258 : vector<1x128xf32>
    %cst_73 = arith.constant 0.055555556 : f32
    %264 = vector.broadcast %cst_73 : f32 to vector<1x128xf32>
    %265 = arith.subf %258, %264 : vector<1x128xf32>
    %266 = arith.select %260, %263, %265 : vector<1x128xi1>, vector<1x128xf32>
    %267 = vector.extract_strided_slice %5 {offsets = [1, 0], sizes = [1, 128], strides = [1, 1]} : vector<4x128xf32> to vector<1x128xf32>
    %268 = arith.subf %247, %267 : vector<1x128xf32>
    %269 = math.absf %268 : vector<1x128xf32>
    %cst_74 = arith.constant 0.111111112 : f32
    %270 = vector.broadcast %cst_74 : f32 to vector<1x128xf32>
    %271 = arith.cmpf ole, %269, %270 : vector<1x128xf32>
    %cst_75 = arith.constant 4.500000e+00 : f32
    %272 = vector.broadcast %cst_75 : f32 to vector<1x128xf32>
    %273 = arith.mulf %272, %269 : vector<1x128xf32>
    %274 = arith.mulf %273, %269 : vector<1x128xf32>
    %cst_76 = arith.constant 0.055555556 : f32
    %275 = vector.broadcast %cst_76 : f32 to vector<1x128xf32>
    %276 = arith.subf %269, %275 : vector<1x128xf32>
    %277 = arith.select %271, %274, %276 : vector<1x128xi1>, vector<1x128xf32>
    %278 = arith.addf %266, %277 : vector<1x128xf32>
    %279 = vector.extract_strided_slice %5 {offsets = [2, 0], sizes = [1, 128], strides = [1, 1]} : vector<4x128xf32> to vector<1x128xf32>
    %280 = arith.subf %251, %279 : vector<1x128xf32>
    %281 = math.absf %280 : vector<1x128xf32>
    %cst_77 = arith.constant 0.111111112 : f32
    %282 = vector.broadcast %cst_77 : f32 to vector<1x128xf32>
    %283 = arith.cmpf ole, %281, %282 : vector<1x128xf32>
    %cst_78 = arith.constant 4.500000e+00 : f32
    %284 = vector.broadcast %cst_78 : f32 to vector<1x128xf32>
    %285 = arith.mulf %284, %281 : vector<1x128xf32>
    %286 = arith.mulf %285, %281 : vector<1x128xf32>
    %cst_79 = arith.constant 0.055555556 : f32
    %287 = vector.broadcast %cst_79 : f32 to vector<1x128xf32>
    %288 = arith.subf %281, %287 : vector<1x128xf32>
    %289 = arith.select %283, %286, %288 : vector<1x128xi1>, vector<1x128xf32>
    %290 = arith.addf %278, %289 : vector<1x128xf32>
    %291 = vector.extract_strided_slice %5 {offsets = [3, 0], sizes = [1, 128], strides = [1, 1]} : vector<4x128xf32> to vector<1x128xf32>
    %292 = arith.subf %255, %291 : vector<1x128xf32>
    %293 = math.absf %292 : vector<1x128xf32>
    %cst_80 = arith.constant 0.111111112 : f32
    %294 = vector.broadcast %cst_80 : f32 to vector<1x128xf32>
    %295 = arith.cmpf ole, %293, %294 : vector<1x128xf32>
    %cst_81 = arith.constant 4.500000e+00 : f32
    %296 = vector.broadcast %cst_81 : f32 to vector<1x128xf32>
    %297 = arith.mulf %296, %293 : vector<1x128xf32>
    %298 = arith.mulf %297, %293 : vector<1x128xf32>
    %cst_82 = arith.constant 0.055555556 : f32
    %299 = vector.broadcast %cst_82 : f32 to vector<1x128xf32>
    %300 = arith.subf %293, %299 : vector<1x128xf32>
    %301 = arith.select %295, %298, %300 : vector<1x128xi1>, vector<1x128xf32>
    %302 = arith.addf %290, %301 : vector<1x128xf32>
    %cst_83 = arith.constant 0.000000e+00 : f32
    %303 = vector.broadcast %cst_83 : f32 to vector<1x128xf32>
    %304 = arith.select %212, %302, %303 : vector<1x128xi1>, vector<1x128xf32>
    %305 = vector.shape_cast %304 : vector<1x128xf32> to vector<1x1x128xf32>
    %cst_84 = arith.constant dense<0.000000e+00> : vector<1xf32>
    %306 = vector.multi_reduction <add>, %305, %cst_84 [1, 2] : vector<1x1x128xf32> to vector<1xf32>
    %307 = vector.shape_cast %306 : vector<1xf32> to vector<1x1x1xf32>
    %308 = vector.extract %307[0, 0, 0] : f32 from vector<1x1x1xf32>
    %309 = arith.extui %212 : vector<1x128xi1> to vector<1x128xi32>
    %310 = arith.sitofp %309 : vector<1x128xi32> to vector<1x128xf32>
    %311 = vector.shape_cast %310 : vector<1x128xf32> to vector<1x1x128xf32>
    %cst_85 = arith.constant dense<0.000000e+00> : vector<1xf32>
    %312 = vector.multi_reduction <add>, %311, %cst_85 [1, 2] : vector<1x1x128xf32> to vector<1xf32>
    %313 = vector.shape_cast %312 : vector<1xf32> to vector<1x1x1xf32>
    %314 = vector.extract %313[0, 0, 0] : f32 from vector<1x1x1xf32>
    %cst_86 = arith.constant 4.000000e+00 : f32
    %315 = arith.mulf %314, %cst_86 : f32
    %316 = tpu.iota {dimensions = array<i32: 0>} : vector<8x128xi32>
    %c0_i32 = arith.constant 0 : i32
    %317 = vector.broadcast %c0_i32 : i32 to vector<8x128xi32>
    %318 = arith.cmpi eq, %316, %317 : vector<8x128xi32>
    %cst_87 = arith.constant 0.000000e+00 : f32
    %319 = vector.broadcast %131 : f32 to vector<8x128xf32>
    %320 = vector.broadcast %cst_87 : f32 to vector<8x128xf32>
    %321 = arith.select %318, %319, %320 : vector<8x128xi1>, vector<8x128xf32>
    %c1_i32_88 = arith.constant 1 : i32
    %322 = vector.broadcast %c1_i32_88 : i32 to vector<8x128xi32>
    %323 = arith.cmpi eq, %316, %322 : vector<8x128xi32>
    %cst_89 = arith.constant 0.000000e+00 : f32
    %324 = vector.broadcast %314 : f32 to vector<8x128xf32>
    %325 = vector.broadcast %cst_89 : f32 to vector<8x128xf32>
    %326 = arith.select %323, %324, %325 : vector<8x128xi1>, vector<8x128xf32>
    %327 = arith.addf %321, %326 : vector<8x128xf32>
    %c2_i32 = arith.constant 2 : i32
    %328 = vector.broadcast %c2_i32 : i32 to vector<8x128xi32>
    %329 = arith.cmpi eq, %316, %328 : vector<8x128xi32>
    %cst_90 = arith.constant 0.000000e+00 : f32
    %330 = vector.broadcast %308 : f32 to vector<8x128xf32>
    %331 = vector.broadcast %cst_90 : f32 to vector<8x128xf32>
    %332 = arith.select %329, %330, %331 : vector<8x128xi1>, vector<8x128xf32>
    %333 = arith.addf %327, %332 : vector<8x128xf32>
    %c3_i32 = arith.constant 3 : i32
    %334 = vector.broadcast %c3_i32 : i32 to vector<8x128xi32>
    %335 = arith.cmpi eq, %316, %334 : vector<8x128xi32>
    %cst_91 = arith.constant 0.000000e+00 : f32
    %336 = vector.broadcast %315 : f32 to vector<8x128xf32>
    %337 = vector.broadcast %cst_91 : f32 to vector<8x128xf32>
    %338 = arith.select %335, %336, %337 : vector<8x128xi1>, vector<8x128xf32>
    %339 = arith.addf %333, %338 : vector<8x128xf32>
    %c4_i32 = arith.constant 4 : i32
    %340 = vector.broadcast %c4_i32 : i32 to vector<8x128xi32>
    %341 = arith.cmpi eq, %316, %340 : vector<8x128xi32>
    %cst_92 = arith.constant 0.000000e+00 : f32
    %342 = vector.broadcast %149 : f32 to vector<8x128xf32>
    %343 = vector.broadcast %cst_92 : f32 to vector<8x128xf32>
    %344 = arith.select %341, %342, %343 : vector<8x128xi1>, vector<8x128xf32>
    %345 = arith.addf %339, %344 : vector<8x128xf32>
    %c5_i32 = arith.constant 5 : i32
    %346 = vector.broadcast %c5_i32 : i32 to vector<8x128xi32>
    %347 = arith.cmpi eq, %316, %346 : vector<8x128xi32>
    %cst_93 = arith.constant 0.000000e+00 : f32
    %348 = vector.broadcast %314 : f32 to vector<8x128xf32>
    %349 = vector.broadcast %cst_93 : f32 to vector<8x128xf32>
    %350 = arith.select %347, %348, %349 : vector<8x128xi1>, vector<8x128xf32>
    %351 = arith.addf %345, %350 : vector<8x128xf32>
    %c0_i32_94 = arith.constant 0 : i32
    %352 = arith.cmpi eq, %arg2, %c0_i32_94 : i32
    %353 = arith.extui %352 : i1 to i32
    %c0_i32_95 = arith.constant 0 : i32
    %354 = arith.cmpi ne, %353, %c0_i32_95 : i32
    scf.if %354 {
      %cst_104 = arith.constant 0.000000e+00 : f32
      %359 = vector.broadcast %cst_104 : f32 to vector<1x1x8x128xf32>
      %c0_105 = arith.constant 0 : index
      %c0_106 = arith.constant 0 : index
      %c0_107 = arith.constant 0 : index
      %c0_108 = arith.constant 0 : index
      %360 = vector.load %arg10[%c0_105, %c0_106, %c0_107, %c0_108] : memref<1x1x8x128xf32, #tpu.memory_space<vmem>>, vector<1x1x8x128xf32>
      tpu.vector_store %arg10[%c0_105, %c0_106, %c0_107, %c0_108], %359 {strides = array<i32>} : memref<1x1x8x128xf32, #tpu.memory_space<vmem>>, vector<1x1x8x128xf32>,
    } else {
    }
    %c0_96 = arith.constant 0 : index
    %c0_97 = arith.constant 0 : index
    %c0_98 = arith.constant 0 : index
    %c0_99 = arith.constant 0 : index
    %355 = vector.load %arg10[%c0_96, %c0_97, %c0_98, %c0_99] : memref<1x1x8x128xf32, #tpu.memory_space<vmem>>, vector<1x1x8x128xf32>
    %356 = vector.shape_cast %351 : vector<8x128xf32> to vector<1x1x8x128xf32>
    %357 = arith.addf %355, %356 : vector<1x1x8x128xf32>
    %c0_100 = arith.constant 0 : index
    %c0_101 = arith.constant 0 : index
    %c0_102 = arith.constant 0 : index
    %c0_103 = arith.constant 0 : index
    %358 = vector.load %arg10[%c0_100, %c0_101, %c0_102, %c0_103] : memref<1x1x8x128xf32, #tpu.memory_space<vmem>>, vector<1x1x8x128xf32>
    tpu.vector_store %arg10[%c0_100, %c0_101, %c0_102, %c0_103], %357 {strides = array<i32>} : memref<1x1x8x128xf32, #tpu.memory_space<vmem>>, vector<1x1x8x128xf32>,
    return
  }
  func.func @transform_0(%arg0: i32, %arg1: i32, %arg2: i32) -> (i32, i32, i32) {
    %c1_i32 = arith.constant 1 : i32
    %0 = arith.muli %arg1, %c1_i32 : i32
    %1 = arith.addi %0, %arg2 : i32
    %c0_i32 = arith.constant 0 : i32
    %c0_i32_0 = arith.constant 0 : i32
    return %arg0, %1, %c0_i32 : i32, i32, i32
  }
  func.func @transform_1(%arg0: i32, %arg1: i32, %arg2: i32) -> (i32, i32, i32) {
    %c1_i32 = arith.constant 1 : i32
    %0 = arith.muli %arg1, %c1_i32 : i32
    %1 = arith.addi %0, %arg2 : i32
    %c0_i32 = arith.constant 0 : i32
    %c0_i32_0 = arith.constant 0 : i32
    return %arg0, %c0_i32, %1 : i32, i32, i32
  }
  func.func @transform_2(%arg0: i32, %arg1: i32, %arg2: i32) -> (i32, i32, i32) {
    %c1_i32 = arith.constant 1 : i32
    %0 = arith.muli %arg1, %c1_i32 : i32
    %1 = arith.addi %0, %arg2 : i32
    %c0_i32 = arith.constant 0 : i32
    %c0_i32_0 = arith.constant 0 : i32
    return %arg0, %c0_i32, %1 : i32, i32, i32
  }
  func.func @transform_3(%arg0: i32, %arg1: i32, %arg2: i32) -> (i32, i32, i32) {
    %c1_i32 = arith.constant 1 : i32
    %0 = arith.muli %arg1, %c1_i32 : i32
    %1 = arith.addi %0, %arg2 : i32
    %c0_i32 = arith.constant 0 : i32
    %c0_i32_0 = arith.constant 0 : i32
    return %arg0, %1, %c0_i32 : i32, i32, i32
  }
  func.func @transform_4(%arg0: i32, %arg1: i32, %arg2: i32) -> (i32, i32, i32) {
    %c1_i32 = arith.constant 1 : i32
    %0 = arith.muli %arg1, %c1_i32 : i32
    %1 = arith.addi %0, %arg2 : i32
    %c0_i32 = arith.constant 0 : i32
    %c0_i32_0 = arith.constant 0 : i32
    return %arg0, %1, %c0_i32 : i32, i32, i32
  }
  func.func @transform_5(%arg0: i32, %arg1: i32, %arg2: i32) -> (i32, i32, i32) {
    %c0_i32 = arith.constant 0 : i32
    %c0_i32_0 = arith.constant 0 : i32
    %c0_i32_1 = arith.constant 0 : i32
    return %arg0, %c0_i32, %c0_i32_0 : i32, i32, i32
  }
  func.func @transform_6(%arg0: i32, %arg1: i32, %arg2: i32) -> (i32, i32, i32) {
    %c0_i32 = arith.constant 0 : i32
    %c0_i32_0 = arith.constant 0 : i32
    %c0_i32_1 = arith.constant 0 : i32
    return %arg0, %c0_i32, %c0_i32_0 : i32, i32, i32
  }
  func.func @transform_7(%arg0: i32, %arg1: i32, %arg2: i32) -> (i32, i32, i32, i32) {
    %c0_i32 = arith.constant 0 : i32
    %c0_i32_0 = arith.constant 0 : i32
    %c0_i32_1 = arith.constant 0 : i32
    return %arg0, %arg1, %c0_i32, %c0_i32_0 : i32, i32, i32, i32
  }
}

</mosaic_0001>

<llo_original>
// kernel: dlde_net_loss.3
$region0: #{dlde_net_loss.3}
  #allocation0 [shape = 'u32[]', space=smem, size = 0x4, offset = 0x4, fixed_abs, tag = 'smem constant byte address 0x4 - core index']
  #allocation1 [shape = 'u32[144,128]{1,0:T(1,128)}', space=vmem, size = 0x12000, scoped, tag = 'internal scratch']
  %s0 = inlined_call_operand.vmem [shape: f32[8,32], index: 0, kind: input, shape index: {}]
  %s1 = inlined_call_operand.vmem [shape: f32[32,8], index: 1, kind: input, shape index: {}]
  %s2 = inlined_call_operand.vmem [shape: f32[8,128], index: 2, kind: output, shape index: {}]
  %s3 = sld [smem:[#allocation0]]
  $region18: #{dlde_net_loss.3} parent=0
    _
  %s5 = ssub.s32 1, %s3
  %s6 = scalar_select 0, %s5, %s3
  // Predicated region
  $region2: #{dlde_net_loss.3} parent=0 // pred_check
    _
  $region3: #{dlde_net_loss.3} parent=0 // pred_check_branch
    %8 = sbr.rel (0) target = $region5
  $region4: #{dlde_net_loss.3} parent=0 // pred_region
    _
  $region5: #{dlde_net_loss.3} parent=0 // pred_fallthru
    _
  // Predicated region
  $region6: #{dlde_net_loss.3} parent=0 // pred_check
    _
  $region7: #{dlde_net_loss.3} parent=0 // pred_check_branch
    %10 = sbr.rel (0) target = $region9
  $region8: #{dlde_net_loss.3} parent=0 // pred_region
    _
  $region9: #{dlde_net_loss.3} parent=0 // pred_fallthru
    _
  %v11 = vld [vmem:[%s0] sm:$0xff]
  %v12 = vld [vmem:[%s1] sm:$0xff]
  %v13 = vld [vmem:[%s1 + $0x8] sm:$0xff]
  %v14 = vld [vmem:[%s1 + $0x10] sm:$0xff]
  %v15 = vld [vmem:[%s1 + $0x18] sm:$0xff]
  %vm16 = vcmask 261120
  %v18 = vsel %vm16, %v11, 0
  %20 = vmatprep.subr.mxu0 0.0
  %21 = vmatpush1.msra.mxu0 %v12
  %22 = vmatprep.subr.mxu0 0.0
  %23 = vmatpush1.msra.mxu0 %v13
  %24 = vmatprep.subr.mxu0 0.0
  %25 = vmatpush1.msra.mxu0 %v14
  %26 = vmatprep.subr.mxu0 0.0
  %27 = vmatpush1.msra.mxu0 %v15
  %28 = vmatprep.subr.mxu0 0.0
  %29 = vmatpush1.msra.mxu0 0.0
  %30 = vmatprep.subr.mxu0 0.0
  %31 = vmatpush1.msra.mxu0 0.0
  %32 = vmatprep.subr.mxu0 0.0
  %33 = vmatpush1.msra.mxu0 0.0
  %34 = vmatprep.subr.mxu0 0.0
  %35 = vmatpush1.msra.mxu0 0.0
  %36 = vmatprep.subr.mxu0 0.0
  %37 = vmatpush1.msra.mxu0 0.0
  %38 = vmatprep.subr.mxu0 0.0
  %39 = vmatpush1.msra.mxu0 0.0
  %40 = vmatprep.subr.mxu0 0.0
  %41 = vmatpush1.msra.mxu0 0.0
  %42 = vmatprep.subr.mxu0 0.0
  %43 = vmatpush1.msra.mxu0 0.0
  %44 = vmatprep.subr.mxu0 0.0
  %45 = vmatpush1.msra.mxu0 0.0
  %46 = vmatprep.subr.mxu0 0.0
  %47 = vmatpush1.msra.mxu0 0.0
  %48 = vmatprep.subr.mxu0 0.0
  %49 = vmatpush1.msra.mxu0 0.0
  %50 = vmatprep.subr.mxu0 0.0
  %51 = vmatpush1.msra.mxu0 0.0
  %52 = vmatprep.subr.mxu0 0.0
  %53 = vmatpush1.msra.mxu0 0.0
  %54 = vmatprep.subr.mxu0 0.0
  %55 = vmatpush1.msra.mxu0 0.0
  %56 = vmatprep.subr.mxu0 0.0
  %57 = vmatpush1.msra.mxu0 0.0
  %58 = vmatprep.subr.mxu0 0.0
  %59 = vmatpush1.msra.mxu0 0.0
  %60 = vmatprep.subr.mxu0 0.0
  %61 = vmatpush1.msra.mxu0 0.0
  %62 = vmatprep.subr.mxu0 0.0
  %63 = vmatpush1.msra.mxu0 0.0
  %64 = vmatprep.subr.mxu0 0.0
  %65 = vmatpush1.msra.mxu0 0.0
  %66 = vmatprep.subr.mxu0 0.0
  %67 = vmatpush1.msra.mxu0 0.0
  %68 = vmatprep.subr.mxu0 0.0
  %69 = vmatpush1.msra.mxu0 0.0
  %70 = vmatprep.subr.mxu0 0.0
  %71 = vmatpush1.msra.mxu0 0.0
  %72 = vmatprep.subr.mxu0 0.0
  %73 = vmatpush1.msra.mxu0 0.0
  %74 = vmatprep.subr.mxu0 0.0
  %75 = vmatpush1.msra.mxu0 0.0
  %76 = vmatprep.subr.mxu0 0.0
  %77 = vmatpush1.msra.mxu0 0.0
  %78 = vmatprep.subr.mxu0 0.0
  %79 = vmatpush1.msra.mxu0 0.0
  %80 = vmatprep.subr.mxu0 0.0
  %81 = vmatpush1.msra.mxu0 0.0
  %82 = vmatprep.subr.mxu0 0.0
  %83 = vmatpush1.msra.mxu0 0.0
  %84 = vmatprep.mubr.f32.mxu0 0.0
  %85 = vmatmul.mubr.f32.gmra.mrb[0].mxu0 %v18
  %v86 = vpop.f32.mrb[0].mxu0
  %v87 = vadd.f32 0.0, %v86
  %v88 = vpop.f32.mrb[0].mxu0
  %89 = vdwg.mxu0
  %v90 = vlaneseq
  %v91 = vshrl.u32 %v90, 7
  %v92 = vlaneseq
  %v93 = vand.u32 %v92, 127
  %vm94 = vcmp.eq.s32.totalorder %v91, %v93
  %v95 = vsel %vm94, -2.0, %v87
  %vm96 = vcmask 64512
  %v97 = vsel %vm96, %v95, -inf
  %98 = vmax.xlane.f32.xlu0 %v97
  %v99 = vpop.xlane.xlu0 %98
  %vm100 = vcmask 7168
  %v101 = vsel %vm100, %v99, 0.0
  %102 = vadd.xlane.f32.xlu0 %v101
  %v103 = vpop.xlane.xlu0 %102
  %v104 = vrot.slane %v103, 4
  %v105 = vadd.f32 %v103, %v104
  %v106 = vrot.slane %v105, 2
  %v107 = vadd.f32 %v105, %v106
  %v108 = vrot.slane %v107, 1
  %v109 = vadd.f32 %v107, %v108
  %s110 = vtos %v109
  %v111 = vrcp.pop 8.0
  %s112 = vtos %v111
  %s113 = smul.f32 %s110, %s112
  %v114 = vstv %s113
  %115 = vst [vmem:[%s2] sm:$0xff] %v114
  // Predicated region
  $region10: #{dlde_net_loss.3} parent=0 // pred_check
    _
  $region11: #{dlde_net_loss.3} parent=0 // pred_check_branch
    %117 = sbr.rel (0) target = $region13
  $region12: #{dlde_net_loss.3} parent=0 // pred_region
    _
  $region13: #{dlde_net_loss.3} parent=0 // pred_fallthru
    _
  // Predicated region
  $region14: #{dlde_net_loss.3} parent=0 // pred_check
    _
  $region15: #{dlde_net_loss.3} parent=0 // pred_check_branch
    %119 = sbr.rel (0) target = $region17
  $region16: #{dlde_net_loss.3} parent=0 // pred_region
    _
  $region17: #{dlde_net_loss.3} parent=0 // pred_fallthru
    _

// kernel: dlde_net_loss.2
$region0: #{dlde_net_loss.2}
  #allocation0 [shape = 'u32[]', space=smem, size = 0x4, offset = 0x4, fixed_abs, tag = 'smem constant byte address 0x4 - core index']
  #allocation1 [shape = 'u32[144,128]{1,0:T(1,128)}', space=vmem, size = 0x12000, scoped, tag = 'internal scratch']
  %s0 = inlined_call_operand.vmem [shape: f32[2,128,4], index: 0, kind: input, shape index: {}]
  %s1 = inlined_call_operand.vmem [shape: f32[2,4,128], index: 1, kind: input, shape index: {}]
  %s2 = inlined_call_operand.vmem [shape: f32[2,4,128], index: 2, kind: input, shape index: {}]
  %s3 = inlined_call_operand.vmem [shape: f32[2,128,8], index: 3, kind: input, shape index: {}]
  %s4 = inlined_call_operand.vmem [shape: f32[2,128,32], index: 4, kind: input, shape index: {}]
  %s5 = inlined_call_operand.vmem [shape: f32[2,8,8], index: 5, kind: input, shape index: {}]
  %s6 = inlined_call_operand.vmem [shape: f32[2,8,45], index: 6, kind: input, shape index: {}]
  %s7 = inlined_call_operand.vmem [shape: f32[2,1,8,128], index: 7, kind: output, shape index: {}]
  %s8 = sld [smem:[#allocation0]]
  $region65: #{dlde_net_loss.2} parent=0
    _
  %s10 = ssub.s32 1, %s8
  %s11 = scalar_select 0, %s10, %s8
  loop: start=0, step=1, limit=4
  $region2: #{dlde_net_loss.2} parent=0 // loop_pre_header
    _
  $region3: #{dlde_net_loss.2} parent=0 // loop_header
    %s13 = sphi 0, %s17
    %p14 = scmp.ge.s32.totalorder %s13, 4
    %s20 = sphi 0, %s39
    %s21 = sphi 0, %s35
    %s22 = sphi 0, %s31
    %s23 = sphi 0, %s20
    %s24 = sphi 0, %s21
    %s25 = sphi 0, %s22
    %s26 = sphi 0, %s23
    %s27 = sphi 0, %s24
    %s28 = sphi 0, %s25
    %s46 = sphi 0, %s48
    %s49 = sphi 0, %s46
    %s50 = sphi 0, %s49
    %s66 = sphi 0, %s50
    %s76 = sphi 0, %s78
    %s79 = sphi 0, %s76
    %s80 = sphi 0, %s79
    %s96 = sphi 0, %s80
    %s106 = sphi 0, %s108
    %s109 = sphi 0, %s106
    %s110 = sphi 0, %s109
    %s126 = sphi 0, %s110
    %s136 = sphi 0, %s138
    %s139 = sphi 0, %s136
    %s140 = sphi 0, %s139
    %s156 = sphi 0, %s140
    %s166 = sphi 0, %s168
    %s169 = sphi 0, %s166
    %s170 = sphi 0, %s169
    %s186 = sphi 0, %s170
    %s192 = sphi 0, %s194
    %s195 = sphi 0, %s192
    %s196 = sphi 0, %s195
    %s212 = sphi 0, %s196
    %s218 = sphi 0, %s220
    %s221 = sphi 0, %s218
    %s222 = sphi 0, %s221
    %s238 = sphi 0, %s222
    %s246 = sphi 0, %s248
    %s249 = sphi 0, %s246
    %s250 = sphi 0, %s249
    %s266 = sphi 0, %s250
  $region4: #{dlde_net_loss.2} parent=0 // loop_header_branch
    %16 = sbr.rel (%p14) target = $region8
  $region5: #{dlde_net_loss.2} parent=0 // loop_body
    %s18 = ssub.s32 %s13, 1
    %s19 = ssub.s32 %s13, 2
    %s29 = sadd.s32 1, %s22
    %p30 = scmp.ge.s32.totalorder %s29, 1
    %s31 = scalar_select %p30, 0, %s29
    %s32 = sadd.s32 1, %s21
    %s33 = scalar_select %p30, %s32, %s21
    %p34 = scmp.ge.s32.totalorder %s33, 1
    %s35 = scalar_select %p34, 0, %s33
    %s36 = sadd.s32 1, %s20
    %s37 = scalar_select %p34, %s36, %s20
    %p38 = scmp.ge.s32.totalorder %s37, 2
    %s39 = scalar_select %p38, 0, %s37
    %s40 = sadd.s32 %s21, %s22
    %s41 = sadd.s32 %s35, %s31
    %s42 = ssub.s32 %s20, %s39
    %s43 = ssub.s32 %s40, %s41
    %s44 = sor.u32 %s42, %s43
    %p45 = scmp.eq.s32.totalorder %s44, 0
    %s47 = sadd.s32 %s46, 1
    %s48 = scalar_select %p45, %s46, %s47
    %p51 = pneg %p45
    %p52 = scmp.eq.s32.totalorder %s13, 1
    %p53 = por %p51, %p52
    %p54 = scmp.ne.s32.totalorder %s46, %s49
    %p55 = scmp.eq.s32.totalorder %s13, 0
    %p56 = por %p54, %p55
    %p57 = scmp.ne.s32.totalorder %s46, %s49
    %p58 = scmp.eq.s32.totalorder %s18, 1
    %p59 = por %p57, %p58
    %p60 = scmp.ne.s32.totalorder %s49, %s50
    %p61 = scmp.eq.s32.totalorder %s18, 0
    %p62 = por %p60, %p61
    %p63 = scmp.ne.s32.totalorder %s49, %s50
    %p64 = scmp.eq.s32.totalorder %s19, 1
    %p65 = por %p63, %p64
    %p67 = scmp.ne.s32.totalorder %s50, %s66
    %p68 = scmp.eq.s32.totalorder %s19, 0
    %p69 = por %p67, %p68
    %s70 = sadd.s32 %s21, %s22
    %s71 = sadd.s32 %s35, %s31
    %s72 = ssub.s32 %s20, %s39
    %s73 = ssub.s32 %s70, %s71
    %s74 = sor.u32 %s72, %s73
    %p75 = scmp.eq.s32.totalorder %s74, 0
    %s77 = sadd.s32 %s76, 1
    %s78 = scalar_select %p75, %s76, %s77
    %p81 = pneg %p75
    %p82 = scmp.eq.s32.totalorder %s13, 1
    %p83 = por %p81, %p82
    %p84 = scmp.ne.s32.totalorder %s76, %s79
    %p85 = scmp.eq.s32.totalorder %s13, 0
    %p86 = por %p84, %p85
    %p87 = scmp.ne.s32.totalorder %s76, %s79
    %p88 = scmp.eq.s32.totalorder %s18, 1
    %p89 = por %p87, %p88
    %p90 = scmp.ne.s32.totalorder %s79, %s80
    %p91 = scmp.eq.s32.totalorder %s18, 0
    %p92 = por %p90, %p91
    %p93 = scmp.ne.s32.totalorder %s79, %s80
    %p94 = scmp.eq.s32.totalorder %s19, 1
    %p95 = por %p93, %p94
    %p97 = scmp.ne.s32.totalorder %s80, %s96
    %p98 = scmp.eq.s32.totalorder %s19, 0
    %p99 = por %p97, %p98
    %s100 = sadd.s32 %s21, %s22
    %s101 = sadd.s32 %s35, %s31
    %s102 = ssub.s32 %s20, %s39
    %s103 = ssub.s32 %s100, %s101
    %s104 = sor.u32 %s102, %s103
    %p105 = scmp.eq.s32.totalorder %s104, 0
    %s107 = sadd.s32 %s106, 1
    %s108 = scalar_select %p105, %s106, %s107
    %p111 = pneg %p105
    %p112 = scmp.eq.s32.totalorder %s13, 1
    %p113 = por %p111, %p112
    %p114 = scmp.ne.s32.totalorder %s106, %s109
    %p115 = scmp.eq.s32.totalorder %s13, 0
    %p116 = por %p114, %p115
    %p117 = scmp.ne.s32.totalorder %s106, %s109
    %p118 = scmp.eq.s32.totalorder %s18, 1
    %p119 = por %p117, %p118
    %p120 = scmp.ne.s32.totalorder %s109, %s110
    %p121 = scmp.eq.s32.totalorder %s18, 0
    %p122 = por %p120, %p121
    %p123 = scmp.ne.s32.totalorder %s109, %s110
    %p124 = scmp.eq.s32.totalorder %s19, 1
    %p125 = por %p123, %p124
    %p127 = scmp.ne.s32.totalorder %s110, %s126
    %p128 = scmp.eq.s32.totalorder %s19, 0
    %p129 = por %p127, %p128
    %s130 = sadd.s32 %s21, %s22
    %s131 = sadd.s32 %s35, %s31
    %s132 = ssub.s32 %s20, %s39
    %s133 = ssub.s32 %s130, %s131
    %s134 = sor.u32 %s132, %s133
    %p135 = scmp.eq.s32.totalorder %s134, 0
    %s137 = sadd.s32 %s136, 1
    %s138 = scalar_select %p135, %s136, %s137
    %p141 = pneg %p135
    %p142 = scmp.eq.s32.totalorder %s13, 1
    %p143 = por %p141, %p142
    %p144 = scmp.ne.s32.totalorder %s136, %s139
    %p145 = scmp.eq.s32.totalorder %s13, 0
    %p146 = por %p144, %p145
    %p147 = scmp.ne.s32.totalorder %s136, %s139
    %p148 = scmp.eq.s32.totalorder %s18, 1
    %p149 = por %p147, %p148
    %p150 = scmp.ne.s32.totalorder %s139, %s140
    %p151 = scmp.eq.s32.totalorder %s18, 0
    %p152 = por %p150, %p151
    %p153 = scmp.ne.s32.totalorder %s139, %s140
    %p154 = scmp.eq.s32.totalorder %s19, 1
    %p155 = por %p153, %p154
    %p157 = scmp.ne.s32.totalorder %s140, %s156
    %p158 = scmp.eq.s32.totalorder %s19, 0
    %p159 = por %p157, %p158
    %s160 = sadd.s32 %s21, %s22
    %s161 = sadd.s32 %s35, %s31
    %s162 = ssub.s32 %s20, %s39
    %s163 = ssub.s32 %s160, %s161
    %s164 = sor.u32 %s162, %s163
    %p165 = scmp.eq.s32.totalorder %s164, 0
    %s167 = sadd.s32 %s166, 1
    %s168 = scalar_select %p165, %s166, %s167
    %p171 = pneg %p165
    %p172 = scmp.eq.s32.totalorder %s13, 1
    %p173 = por %p171, %p172
    %p174 = scmp.ne.s32.totalorder %s166, %s169
    %p175 = scmp.eq.s32.totalorder %s13, 0
    %p176 = por %p174, %p175
    %p177 = scmp.ne.s32.totalorder %s166, %s169
    %p178 = scmp.eq.s32.totalorder %s18, 1
    %p179 = por %p177, %p178
    %p180 = scmp.ne.s32.totalorder %s169, %s170
    %p181 = scmp.eq.s32.totalorder %s18, 0
    %p182 = por %p180, %p181
    %p183 = scmp.ne.s32.totalorder %s169, %s170
    %p184 = scmp.eq.s32.totalorder %s19, 1
    %p185 = por %p183, %p184
    %p187 = scmp.ne.s32.totalorder %s170, %s186
    %p188 = scmp.eq.s32.totalorder %s19, 0
    %p189 = por %p187, %p188
    %s190 = ssub.s32 %s20, %s39
    %p191 = scmp.eq.s32.totalorder %s190, 0
    %s193 = sadd.s32 %s192, 1
    %s194 = scalar_select %p191, %s192, %s193
    %p197 = pneg %p191
    %p198 = scmp.eq.s32.totalorder %s13, 1
    %p199 = por %p197, %p198
    %p200 = scmp.ne.s32.totalorder %s192, %s195
    %p201 = scmp.eq.s32.totalorder %s13, 0
    %p202 = por %p200, %p201
    %p203 = scmp.ne.s32.totalorder %s192, %s195
    %p204 = scmp.eq.s32.totalorder %s18, 1
    %p205 = por %p203, %p204
    %p206 = scmp.ne.s32.totalorder %s195, %s196
    %p207 = scmp.eq.s32.totalorder %s18, 0
    %p208 = por %p206, %p207
    %p209 = scmp.ne.s32.totalorder %s195, %s196
    %p210 = scmp.eq.s32.totalorder %s19, 1
    %p211 = por %p209, %p210
    %p213 = scmp.ne.s32.totalorder %s196, %s212
    %p214 = scmp.eq.s32.totalorder %s19, 0
    %p215 = por %p213, %p214
    %s216 = ssub.s32 %s20, %s39
    %p217 = scmp.eq.s32.totalorder %s216, 0
    %s219 = sadd.s32 %s218, 1
    %s220 = scalar_select %p217, %s218, %s219
    %p223 = pneg %p217
    %p224 = scmp.eq.s32.totalorder %s13, 1
    %p225 = por %p223, %p224
    %p226 = scmp.ne.s32.totalorder %s218, %s221
    %p227 = scmp.eq.s32.totalorder %s13, 0
    %p228 = por %p226, %p227
    %p229 = scmp.ne.s32.totalorder %s218, %s221
    %p230 = scmp.eq.s32.totalorder %s18, 1
    %p231 = por %p229, %p230
    %p232 = scmp.ne.s32.totalorder %s221, %s222
    %p233 = scmp.eq.s32.totalorder %s18, 0
    %p234 = por %p232, %p233
    %p235 = scmp.ne.s32.totalorder %s221, %s222
    %p236 = scmp.eq.s32.totalorder %s19, 1
    %p237 = por %p235, %p236
    %p239 = scmp.ne.s32.totalorder %s222, %s238
    %p240 = scmp.eq.s32.totalorder %s19, 0
    %p241 = por %p239, %p240
    %s242 = ssub.s32 %s20, %s39
    %s243 = ssub.s32 %s21, %s35
    %s244 = sor.u32 %s242, %s243
    %p245 = scmp.eq.s32.totalorder %s244, 0
    %s247 = sadd.s32 %s246, 1
    %s248 = scalar_select %p245, %s246, %s247
    %p251 = pneg %p245
    %p252 = scmp.eq.s32.totalorder %s13, 1
    %p253 = por %p251, %p252
    %p254 = scmp.ne.s32.totalorder %s246, %s249
    %p255 = scmp.eq.s32.totalorder %s13, 0
    %p256 = por %p254, %p255
    %p257 = scmp.ne.s32.totalorder %s246, %s249
    %p258 = scmp.eq.s32.totalorder %s18, 1
    %p259 = por %p257, %p258
    %p260 = scmp.ne.s32.totalorder %s249, %s250
    %p261 = scmp.eq.s32.totalorder %s18, 0
    %p262 = por %p260, %p261
    %p263 = scmp.ne.s32.totalorder %s249, %s250
    %p264 = scmp.eq.s32.totalorder %s19, 1
    %p265 = por %p263, %p264
    %p267 = scmp.ne.s32.totalorder %s250, %s266
    %p268 = scmp.eq.s32.totalorder %s19, 0
    %p269 = por %p267, %p268
    %p270 = scmp.le.s32.totalorder 1, %s13
    %p271 = scmp.lt.s32.totalorder %s13, 3
    %p272 = pnand %p270, %p271
    %p273 = pneg %p272
    // Predicated region
    $region9: #{dlde_net_loss.2} parent=5 // pred_check
      _
    $region10: #{dlde_net_loss.2} parent=5 // pred_check_branch
      %275 = sbr.rel (%p272) target = $region12
    $region11: #{dlde_net_loss.2} parent=5 // pred_region
      %s276 = ssub.s32 %s13, 1
    $region12: #{dlde_net_loss.2} parent=5 // pred_fallthru
      _
    %p277 = scmp.lt.s32.totalorder %s13, 2
    // Predicated region
    $region13: #{dlde_net_loss.2} parent=5 // pred_check
      %p278 = pneg %p277
    $region14: #{dlde_net_loss.2} parent=5 // pred_check_branch
      %280 = sbr.rel (%p278) target = $region16
    $region15: #{dlde_net_loss.2} parent=5 // pred_region
      // Predicated region
      $region17: #{dlde_net_loss.2} parent=15 // pred_check
        %p281 = pneg %p56
      $region18: #{dlde_net_loss.2} parent=15 // pred_check_branch
        %283 = sbr.rel (%p281) target = $region20
      $region19: #{dlde_net_loss.2} parent=15 // pred_region
        %s284 = sadd.s32 %s21, %s22
        %s285 = smul.u32 16, %s284
        %p286 = scmp.lt.s32.totalorder %s20, 1
        %s287 = scalar_select %p286, %s20, 1
        %p288 = scmp.lt.s32.totalorder %s285, 15
        %s289 = scalar_select %p288, %s285, 15
        %s290 = smul.addr %s287, 16
        %s291 = sadd.s32 %s289, %s290
        %s292 = smul.addr %s291, 8
        %s293 = scalar_lea.vmem %s0, %s292
        %s294 = sadd.s32 %s21, %s22
        %s295 = smul.u32 16, %s294
      $region20: #{dlde_net_loss.2} parent=15 // pred_fallthru
        _
      // Predicated region
      $region21: #{dlde_net_loss.2} parent=15 // pred_check
        %p296 = pneg %p86
      $region22: #{dlde_net_loss.2} parent=15 // pred_check_branch
        %298 = sbr.rel (%p296) target = $region24
      $region23: #{dlde_net_loss.2} parent=15 // pred_region
        %s299 = sadd.s32 %s21, %s22
        %p300 = scmp.lt.s32.totalorder %s20, 1
        %s301 = scalar_select %p300, %s20, 1
        %p302 = scmp.lt.s32.totalorder %s299, 0
        %s303 = scalar_select %p302, %s299, 0
        %s304 = sadd.s32 %s303, %s301
        %s305 = smul.addr %s304, 4
        %s306 = scalar_lea.vmem %s1, %s305
        %s307 = sadd.s32 %s21, %s22
      $region24: #{dlde_net_loss.2} parent=15 // pred_fallthru
        _
      // Predicated region
      $region25: #{dlde_net_loss.2} parent=15 // pred_check
        %p308 = pneg %p116
      $region26: #{dlde_net_loss.2} parent=15 // pred_check_branch
        %310 = sbr.rel (%p308) target = $region28
      $region27: #{dlde_net_loss.2} parent=15 // pred_region
        %s311 = sadd.s32 %s21, %s22
        %p312 = scmp.lt.s32.totalorder %s20, 1
        %s313 = scalar_select %p312, %s20, 1
        %p314 = scmp.lt.s32.totalorder %s311, 0
        %s315 = scalar_select %p314, %s311, 0
        %s316 = sadd.s32 %s315, %s313
        %s317 = smul.addr %s316, 4
        %s318 = scalar_lea.vmem %s2, %s317
        %s319 = sadd.s32 %s21, %s22
      $region28: #{dlde_net_loss.2} parent=15 // pred_fallthru
        _
      // Predicated region
      $region29: #{dlde_net_loss.2} parent=15 // pred_check
        %p320 = pneg %p146
      $region30: #{dlde_net_loss.2} parent=15 // pred_check_branch
        %322 = sbr.rel (%p320) target = $region32
      $region31: #{dlde_net_loss.2} parent=15 // pred_region
        %s323 = sadd.s32 %s21, %s22
        %s324 = smul.u32 16, %s323
        %p325 = scmp.lt.s32.totalorder %s20, 1
        %s326 = scalar_select %p325, %s20, 1
        %p327 = scmp.lt.s32.totalorder %s324, 15
        %s328 = scalar_select %p327, %s324, 15
        %s329 = smul.addr %s326, 16
        %s330 = sadd.s32 %s328, %s329
        %s331 = smul.addr %s330, 8
        %s332 = scalar_lea.vmem %s3, %s331
        %s333 = sadd.s32 %s21, %s22
        %s334 = smul.u32 16, %s333
      $region32: #{dlde_net_loss.2} parent=15 // pred_fallthru
        _
      // Predicated region
      $region33: #{dlde_net_loss.2} parent=15 // pred_check
        %p335 = pneg %p176
      $region34: #{dlde_net_loss.2} parent=15 // pred_check_branch
        %337 = sbr.rel (%p335) target = $region36
      $region35: #{dlde_net_loss.2} parent=15 // pred_region
        %s338 = sadd.s32 %s21, %s22
        %s339 = smul.u32 16, %s338
        %p340 = scmp.lt.s32.totalorder %s20, 1
        %s341 = scalar_select %p340, %s20, 1
        %p342 = scmp.lt.s32.totalorder %s339, 15
        %s343 = scalar_select %p342, %s339, 15
        %s344 = smul.addr %s341, 16
        %s345 = sadd.s32 %s343, %s344
        %s346 = smul.addr %s345, 8
        %s347 = scalar_lea.vmem %s4, %s346
        %s348 = sadd.s32 %s21, %s22
        %s349 = smul.u32 16, %s348
      $region36: #{dlde_net_loss.2} parent=15 // pred_fallthru
        _
      // Predicated region
      $region37: #{dlde_net_loss.2} parent=15 // pred_check
        %p350 = pneg %p202
      $region38: #{dlde_net_loss.2} parent=15 // pred_check_branch
        %352 = sbr.rel (%p350) target = $region40
      $region39: #{dlde_net_loss.2} parent=15 // pred_region
        %p353 = scmp.lt.s32.totalorder %s20, 1
        %s354 = scalar_select %p353, %s20, 1
        %s355 = smul.addr %s354, 8
        %s356 = scalar_lea.vmem %s5, %s355
      $region40: #{dlde_net_loss.2} parent=15 // pred_fallthru
        _
      // Predicated region
      $region41: #{dlde_net_loss.2} parent=15 // pred_check
        %p357 = pneg %p228
      $region42: #{dlde_net_loss.2} parent=15 // pred_check_branch
        %359 = sbr.rel (%p357) target = $region44
      $region43: #{dlde_net_loss.2} parent=15 // pred_region
        %p360 = scmp.lt.s32.totalorder %s20, 1
        %s361 = scalar_select %p360, %s20, 1
        %s362 = smul.addr %s361, 8
        %s363 = scalar_lea.vmem %s6, %s362
      $region44: #{dlde_net_loss.2} parent=15 // pred_fallthru
        _
    $region16: #{dlde_net_loss.2} parent=5 // pred_fallthru
      _
    %p364 = scmp.le.s32.totalorder 1, %s13
    %p365 = scmp.lt.s32.totalorder %s13, 3
    %p366 = pnand %p364, %p365
    %p367 = pneg %p366
    // Predicated region
    $region45: #{dlde_net_loss.2} parent=5 // pred_check
      _
    $region46: #{dlde_net_loss.2} parent=5 // pred_check_branch
      %369 = sbr.rel (%p366) target = $region48
    $region47: #{dlde_net_loss.2} parent=5 // pred_region
      %s370 = ssub.s32 %s13, 1
      %s371 = sadd.s32 %s24, %s25
      %s372 = smul.u32 16, %s371
      %p373 = scmp.lt.s32.totalorder %s23, 1
      %s374 = scalar_select %p373, %s23, 1
      %p375 = scmp.lt.s32.totalorder %s372, 15
      %s376 = scalar_select %p375, %s372, 15
      %s377 = smul.addr %s374, 16
      %s378 = sadd.s32 %s376, %s377
      %s379 = smul.addr %s378, 8
      %s380 = scalar_lea.vmem %s0, %s379
      %p381 = pneg %p62
      %p382 = pneg %p59
      %s383 = sadd.s32 %s24, %s25
      %p384 = scmp.lt.s32.totalorder %s23, 1
      %s385 = scalar_select %p384, %s23, 1
      %p386 = scmp.lt.s32.totalorder %s383, 0
      %s387 = scalar_select %p386, %s383, 0
      %s388 = sadd.s32 %s387, %s385
      %s389 = smul.addr %s388, 4
      %s390 = scalar_lea.vmem %s1, %s389
      %p391 = pneg %p92
      %p392 = pneg %p89
      %s393 = sadd.s32 %s24, %s25
      %p394 = scmp.lt.s32.totalorder %s23, 1
      %s395 = scalar_select %p394, %s23, 1
      %p396 = scmp.lt.s32.totalorder %s393, 0
      %s397 = scalar_select %p396, %s393, 0
      %s398 = sadd.s32 %s397, %s395
      %s399 = smul.addr %s398, 4
      %s400 = scalar_lea.vmem %s2, %s399
      %p401 = pneg %p122
      %p402 = pneg %p119
      %s403 = sadd.s32 %s24, %s25
      %s404 = smul.u32 16, %s403
      %p405 = scmp.lt.s32.totalorder %s23, 1
      %s406 = scalar_select %p405, %s23, 1
      %p407 = scmp.lt.s32.totalorder %s404, 15
      %s408 = scalar_select %p407, %s404, 15
      %s409 = smul.addr %s406, 16
      %s410 = sadd.s32 %s408, %s409
      %s411 = smul.addr %s410, 8
      %s412 = scalar_lea.vmem %s3, %s411
      %p413 = pneg %p152
      %p414 = pneg %p149
      %s415 = sadd.s32 %s24, %s25
      %s416 = smul.u32 16, %s415
      %p417 = scmp.lt.s32.totalorder %s23, 1
      %s418 = scalar_select %p417, %s23, 1
      %p419 = scmp.lt.s32.totalorder %s416, 15
      %s420 = scalar_select %p419, %s416, 15
      %s421 = smul.addr %s418, 16
      %s422 = sadd.s32 %s420, %s421
      %s423 = smul.addr %s422, 8
      %s424 = scalar_lea.vmem %s4, %s423
      %p425 = pneg %p182
      %p426 = pneg %p179
      %p427 = scmp.lt.s32.totalorder %s23, 1
      %s428 = scalar_select %p427, %s23, 1
      %s429 = smul.addr %s428, 8
      %s430 = scalar_lea.vmem %s5, %s429
      %p431 = pneg %p208
      %p432 = pneg %p205
      %p433 = scmp.lt.s32.totalorder %s23, 1
      %s434 = scalar_select %p433, %s23, 1
      %s435 = smul.addr %s434, 8
      %s436 = scalar_lea.vmem %s6, %s435
      %p437 = pneg %p234
      %p438 = pneg %p231
      %p439 = pneg %p262
      %p440 = pneg %p259
      %p441 = scmp.lt.s32.totalorder %s23, 1
      %s442 = scalar_select %p441, %s23, 1
      %p443 = scmp.lt.s32.totalorder %s24, 0
      %s444 = scalar_select %p443, %s24, 0
      %s445 = sadd.s32 %s444, %s442
      %s446 = smul.addr %s445, 8
      %s447 = scalar_lea.vmem %s7, %s446
      %s448 = sadd.s32 %s24, %s25
      %s449 = smul.u32 16, %s448
      %p450 = scmp.lt.s32.totalorder %s23, 1
      %s451 = scalar_select %p450, %s23, 1
      %p452 = scmp.lt.s32.totalorder %s449, 15
      %s453 = scalar_select %p452, %s449, 15
      %s454 = smul.addr %s451, 16
      %s455 = sadd.s32 %s453, %s454
      %s456 = smul.addr %s455, 8
      %s457 = scalar_lea.vmem %s0, %s456
      %s458 = sadd.s32 %s24, %s25
      %s459 = smul.u32 16, %s458
      %s460 = sadd.s32 %s24, %s25
      %p461 = scmp.lt.s32.totalorder %s23, 1
      %s462 = scalar_select %p461, %s23, 1
      %p463 = scmp.lt.s32.totalorder %s460, 0
      %s464 = scalar_select %p463, %s460, 0
      %s465 = sadd.s32 %s464, %s462
      %s466 = smul.addr %s465, 4
      %s467 = scalar_lea.vmem %s1, %s466
      %s468 = sadd.s32 %s24, %s25
      %s469 = sadd.s32 %s24, %s25
      %p470 = scmp.lt.s32.totalorder %s23, 1
      %s471 = scalar_select %p470, %s23, 1
      %p472 = scmp.lt.s32.totalorder %s469, 0
      %s473 = scalar_select %p472, %s469, 0
      %s474 = sadd.s32 %s473, %s471
      %s475 = smul.addr %s474, 4
      %s476 = scalar_lea.vmem %s2, %s475
      %s477 = sadd.s32 %s24, %s25
      %s478 = sadd.s32 %s24, %s25
      %s479 = smul.u32 16, %s478
      %p480 = scmp.lt.s32.totalorder %s23, 1
      %s481 = scalar_select %p480, %s23, 1
      %p482 = scmp.lt.s32.totalorder %s479, 15
      %s483 = scalar_select %p482, %s479, 15
      %s484 = smul.addr %s481, 16
      %s485 = sadd.s32 %s483, %s484
      %s486 = smul.addr %s485, 8
      %s487 = scalar_lea.vmem %s3, %s486
      %s488 = sadd.s32 %s24, %s25
      %s489 = smul.u32 16, %s488
      %s490 = sadd.s32 %s24, %s25
      %s491 = smul.u32 16, %s490
      %p492 = scmp.lt.s32.totalorder %s23, 1
      %s493 = scalar_select %p492, %s23, 1
      %p494 = scmp.lt.s32.totalorder %s491, 15
      %s495 = scalar_select %p494, %s491, 15
      %s496 = smul.addr %s493, 16
      %s497 = sadd.s32 %s495, %s496
      %s498 = smul.addr %s497, 8
      %s499 = scalar_lea.vmem %s4, %s498
      %s500 = sadd.s32 %s24, %s25
      %s501 = smul.u32 16, %s500
      %p502 = scmp.lt.s32.totalorder %s23, 1
      %s503 = scalar_select %p502, %s23, 1
      %s504 = smul.addr %s503, 8
      %s505 = scalar_lea.vmem %s5, %s504
      %p506 = scmp.lt.s32.totalorder %s23, 1
      %s507 = scalar_select %p506, %s23, 1
      %s508 = smul.addr %s507, 8
      %s509 = scalar_lea.vmem %s6, %s508
      %p510 = scmp.lt.s32.totalorder %s23, 1
      %s511 = scalar_select %p510, %s23, 1
      %p512 = scmp.lt.s32.totalorder %s24, 0
      %s513 = scalar_select %p512, %s24, 0
      %s514 = sadd.s32 %s513, %s511
      %s515 = smul.addr %s514, 8
      %s516 = scalar_lea.vmem %s7, %s515
      %v517 = vld [vmem:[%s457] sm:$0xff]
      %v518 = vld [vmem:[%s457 + $0x8] sm:$0xff]
      %v519 = vld [vmem:[%s457 + $0x10] sm:$0xff]
      %v520 = vld [vmem:[%s457 + $0x18] sm:$0xff]
      %v521 = vld [vmem:[%s457 + $0x20] sm:$0xff]
      %v522 = vld [vmem:[%s457 + $0x28] sm:$0xff]
      %v523 = vld [vmem:[%s457 + $0x30] sm:$0xff]
      %v524 = vld [vmem:[%s457 + $0x38] sm:$0xff]
      %v525 = vld [vmem:[%s457 + $0x40] sm:$0xff]
      %v526 = vld [vmem:[%s457 + $0x48] sm:$0xff]
      %v527 = vld [vmem:[%s457 + $0x50] sm:$0xff]
      %v528 = vld [vmem:[%s457 + $0x58] sm:$0xff]
      %v529 = vld [vmem:[%s457 + $0x60] sm:$0xff]
      %v530 = vld [vmem:[%s457 + $0x68] sm:$0xff]
      %v531 = vld [vmem:[%s457 + $0x70] sm:$0xff]
      %v532 = vld [vmem:[%s457 + $0x78] sm:$0xff]
      %v533 = vld [vmem:[%s467] sm:$0xf]
      %v534 = vld [vmem:[%s476] sm:$0xf]
      %v535 = vld [vmem:[%s487] sm:$0xff]
      %v536 = vld [vmem:[%s487 + $0x8] sm:$0xff]
      %v537 = vld [vmem:[%s487 + $0x10] sm:$0xff]
      %v538 = vld [vmem:[%s487 + $0x18] sm:$0xff]
      %v539 = vld [vmem:[%s487 + $0x20] sm:$0xff]
      %v540 = vld [vmem:[%s487 + $0x28] sm:$0xff]
      %v541 = vld [vmem:[%s487 + $0x30] sm:$0xff]
      %v542 = vld [vmem:[%s487 + $0x38] sm:$0xff]
      %v543 = vld [vmem:[%s487 + $0x40] sm:$0xff]
      %v544 = vld [vmem:[%s487 + $0x48] sm:$0xff]
      %v545 = vld [vmem:[%s487 + $0x50] sm:$0xff]
      %v546 = vld [vmem:[%s487 + $0x58] sm:$0xff]
      %v547 = vld [vmem:[%s487 + $0x60] sm:$0xff]
      %v548 = vld [vmem:[%s487 + $0x68] sm:$0xff]
      %v549 = vld [vmem:[%s487 + $0x70] sm:$0xff]
      %v550 = vld [vmem:[%s487 + $0x78] sm:$0xff]
      %v551 = vld [vmem:[%s499] sm:$0xff]
      %v552 = vld [vmem:[%s499 + $0x8] sm:$0xff]
      %v553 = vld [vmem:[%s499 + $0x10] sm:$0xff]
      %v554 = vld [vmem:[%s499 + $0x18] sm:$0xff]
      %v555 = vld [vmem:[%s499 + $0x20] sm:$0xff]
      %v556 = vld [vmem:[%s499 + $0x28] sm:$0xff]
      %v557 = vld [vmem:[%s499 + $0x30] sm:$0xff]
      %v558 = vld [vmem:[%s499 + $0x38] sm:$0xff]
      %v559 = vld [vmem:[%s499 + $0x40] sm:$0xff]
      %v560 = vld [vmem:[%s499 + $0x48] sm:$0xff]
      %v561 = vld [vmem:[%s499 + $0x50] sm:$0xff]
      %v562 = vld [vmem:[%s499 + $0x58] sm:$0xff]
      %v563 = vld [vmem:[%s499 + $0x60] sm:$0xff]
      %v564 = vld [vmem:[%s499 + $0x68] sm:$0xff]
      %v565 = vld [vmem:[%s499 + $0x70] sm:$0xff]
      %v566 = vld [vmem:[%s499 + $0x78] sm:$0xff]
      %v567 = vld [vmem:[%s505] sm:$0xff]
      %v568 = vld [vmem:[%s509] sm:$0xff]
      %s569 = sadd.s32 %s24, %s25
      %s570 = smul.u32 %s569, 128
      %v571 = vlaneseq
      %v572 = vshrl.u32 %v571, 7
      %v573 = vadd.s32 %v572, 8
      %v574 = vadd.s32 %v572, 16
      %v575 = vadd.s32 %v572, 24
      %v576 = vadd.s32 %v572, 32
      %v577 = vadd.s32 %v572, 40
      %v578 = vadd.s32 %v572, 48
      %v579 = vadd.s32 %v572, 56
      %v580 = vadd.s32 %v572, 64
      %v581 = vadd.s32 %v572, 72
      %v582 = vadd.s32 %v572, 80
      %v583 = vadd.s32 %v572, 88
      %v584 = vadd.s32 %v572, 96
      %v585 = vadd.s32 %v572, 104
      %v586 = vadd.s32 %v572, 112
      %v587 = vadd.s32 %v572, 120
      %v588 = vstv %s570
      %v589 = vadd.s32 %v572, %v588
      %v590 = vadd.s32 %v573, %v588
      %v591 = vadd.s32 %v574, %v588
      %v592 = vadd.s32 %v575, %v588
      %v593 = vadd.s32 %v576, %v588
      %v594 = vadd.s32 %v577, %v588
      %v595 = vadd.s32 %v578, %v588
      %v596 = vadd.s32 %v579, %v588
      %v597 = vadd.s32 %v580, %v588
      %v598 = vadd.s32 %v581, %v588
      %v599 = vadd.s32 %v582, %v588
      %v600 = vadd.s32 %v583, %v588
      %v601 = vadd.s32 %v584, %v588
      %v602 = vadd.s32 %v585, %v588
      %v603 = vadd.s32 %v586, %v588
      %v604 = vadd.s32 %v587, %v588
      %vm605 = vcmp.lt.s32.totalorder %v589, 128
      %vm606 = vcmp.lt.s32.totalorder %v590, 128
      %vm607 = vcmp.lt.s32.totalorder %v591, 128
      %vm608 = vcmp.lt.s32.totalorder %v592, 128
      %vm609 = vcmp.lt.s32.totalorder %v593, 128
      %vm610 = vcmp.lt.s32.totalorder %v594, 128
      %vm611 = vcmp.lt.s32.totalorder %v595, 128
      %vm612 = vcmp.lt.s32.totalorder %v596, 128
      %vm613 = vcmp.lt.s32.totalorder %v597, 128
      %vm614 = vcmp.lt.s32.totalorder %v598, 128
      %vm615 = vcmp.lt.s32.totalorder %v599, 128
      %vm616 = vcmp.lt.s32.totalorder %v600, 128
      %vm617 = vcmp.lt.s32.totalorder %v601, 128
      %vm618 = vcmp.lt.s32.totalorder %v602, 128
      %vm619 = vcmp.lt.s32.totalorder %v603, 128
      %vm620 = vcmp.lt.s32.totalorder %v604, 128
      %v621 = vlaneseq
      %v622 = vand.u32 %v621, 127
      %v623 = vadd.s32 %v622, %v588
      %vm624 = vcmp.lt.s32.totalorder %v623, 128
      %vm625 = vcmp.ne.f32.partialorder %v567, -1.0
      %642 = vrot.lane.b32.xlu0 %v517, 2
      %v643 = vpop.permute.xlu0 %642
      %644 = vrot.lane.b32.xlu0 %v518, 2
      %v645 = vpop.permute.xlu0 %644
      %646 = vrot.lane.b32.xlu0 %v519, 2
      %v647 = vpop.permute.xlu0 %646
      %648 = vrot.lane.b32.xlu0 %v520, 2
      %v649 = vpop.permute.xlu0 %648
      %650 = vrot.lane.b32.xlu0 %v521, 2
      %v651 = vpop.permute.xlu0 %650
      %652 = vrot.lane.b32.xlu0 %v522, 2
      %v653 = vpop.permute.xlu0 %652
      %654 = vrot.lane.b32.xlu0 %v523, 2
      %v655 = vpop.permute.xlu0 %654
      %656 = vrot.lane.b32.xlu0 %v524, 2
      %v657 = vpop.permute.xlu0 %656
      %658 = vrot.lane.b32.xlu0 %v525, 2
      %v659 = vpop.permute.xlu0 %658
      %660 = vrot.lane.b32.xlu0 %v526, 2
      %v661 = vpop.permute.xlu0 %660
      %662 = vrot.lane.b32.xlu0 %v527, 2
      %v663 = vpop.permute.xlu0 %662
      %664 = vrot.lane.b32.xlu0 %v528, 2
      %v665 = vpop.permute.xlu0 %664
      %666 = vrot.lane.b32.xlu0 %v529, 2
      %v667 = vpop.permute.xlu0 %666
      %668 = vrot.lane.b32.xlu0 %v530, 2
      %v669 = vpop.permute.xlu0 %668
      %670 = vrot.lane.b32.xlu0 %v531, 2
      %v671 = vpop.permute.xlu0 %670
      %672 = vrot.lane.b32.xlu0 %v532, 2
      %v673 = vpop.permute.xlu0 %672
      %v690 = vsub.f32 %v517, %v643
      %v691 = vsub.f32 %v518, %v645
      %v692 = vsub.f32 %v519, %v647
      %v693 = vsub.f32 %v520, %v649
      %v694 = vsub.f32 %v521, %v651
      %v695 = vsub.f32 %v522, %v653
      %v696 = vsub.f32 %v523, %v655
      %v697 = vsub.f32 %v524, %v657
      %v698 = vsub.f32 %v525, %v659
      %v699 = vsub.f32 %v526, %v661
      %v700 = vsub.f32 %v527, %v663
      %v701 = vsub.f32 %v528, %v665
      %v702 = vsub.f32 %v529, %v667
      %v703 = vsub.f32 %v530, %v669
      %v704 = vsub.f32 %v531, %v671
      %v705 = vsub.f32 %v532, %v673
      %722 = vrot.lane.b32.xlu0 %v690, 127
      %v723 = vpop.permute.xlu0 %722
      %724 = vrot.lane.b32.xlu0 %v691, 127
      %v725 = vpop.permute.xlu0 %724
      %726 = vrot.lane.b32.xlu0 %v692, 127
      %v727 = vpop.permute.xlu0 %726
      %728 = vrot.lane.b32.xlu0 %v693, 127
      %v729 = vpop.permute.xlu0 %728
      %730 = vrot.lane.b32.xlu0 %v694, 127
      %v731 = vpop.permute.xlu0 %730
      %732 = vrot.lane.b32.xlu0 %v695, 127
      %v733 = vpop.permute.xlu0 %732
      %734 = vrot.lane.b32.xlu0 %v696, 127
      %v735 = vpop.permute.xlu0 %734
      %736 = vrot.lane.b32.xlu0 %v697, 127
      %v737 = vpop.permute.xlu0 %736
      %738 = vrot.lane.b32.xlu0 %v698, 127
      %v739 = vpop.permute.xlu0 %738
      %740 = vrot.lane.b32.xlu0 %v699, 127
      %v741 = vpop.permute.xlu0 %740
      %742 = vrot.lane.b32.xlu0 %v700, 127
      %v743 = vpop.permute.xlu0 %742
      %744 = vrot.lane.b32.xlu0 %v701, 127
      %v745 = vpop.permute.xlu0 %744
      %746 = vrot.lane.b32.xlu0 %v702, 127
      %v747 = vpop.permute.xlu0 %746
      %748 = vrot.lane.b32.xlu0 %v703, 127
      %v749 = vpop.permute.xlu0 %748
      %750 = vrot.lane.b32.xlu0 %v704, 127
      %v751 = vpop.permute.xlu0 %750
      %752 = vrot.lane.b32.xlu0 %v705, 127
      %v753 = vpop.permute.xlu0 %752
      %v770 = vmul.f32 %v690, %v723
      %v771 = vmul.f32 %v691, %v725
      %v772 = vmul.f32 %v692, %v727
      %v773 = vmul.f32 %v693, %v729
      %v774 = vmul.f32 %v694, %v731
      %v775 = vmul.f32 %v695, %v733
      %v776 = vmul.f32 %v696, %v735
      %v777 = vmul.f32 %v697, %v737
      %v778 = vmul.f32 %v698, %v739
      %v779 = vmul.f32 %v699, %v741
      %v780 = vmul.f32 %v700, %v743
      %v781 = vmul.f32 %v701, %v745
      %v782 = vmul.f32 %v702, %v747
      %v783 = vmul.f32 %v703, %v749
      %v784 = vmul.f32 %v704, %v751
      %v785 = vmul.f32 %v705, %v753
      %v787 = vrot.slane %v567, 6
      %v789 = vsub.f32 %v567, %v787
      %v791 = vrot.slane %v789, 1
      %v793 = vmul.f32 %v789, %v791
      %794 = vset.pattern.permute.xlu0 2
      %795 = vperm.xlu0 %794, %v517
      %v796 = vpop.permute.xlu0 %795
      %798 = vset.pattern.permute.xlu0 2
      %799 = vperm.xlu0 %798, %v518
      %v800 = vpop.permute.xlu0 %799
      %802 = vset.pattern.permute.xlu0 2
      %803 = vperm.xlu0 %802, %v519
      %v804 = vpop.permute.xlu0 %803
      %806 = vset.pattern.permute.xlu0 2
      %807 = vperm.xlu0 %806, %v520
      %v808 = vpop.permute.xlu0 %807
      %810 = vset.pattern.permute.xlu0 2
      %811 = vperm.xlu0 %810, %v521
      %v812 = vpop.permute.xlu0 %811
      %814 = vset.pattern.permute.xlu0 2
      %815 = vperm.xlu0 %814, %v522
      %v816 = vpop.permute.xlu0 %815
      %818 = vset.pattern.permute.xlu0 2
      %819 = vperm.xlu0 %818, %v523
      %v820 = vpop.permute.xlu0 %819
      %822 = vset.pattern.permute.xlu0 2
      %823 = vperm.xlu0 %822, %v524
      %v824 = vpop.permute.xlu0 %823
      %826 = vset.pattern.permute.xlu0 2
      %827 = vperm.xlu0 %826, %v525
      %v828 = vpop.permute.xlu0 %827
      %830 = vset.pattern.permute.xlu0 2
      %831 = vperm.xlu0 %830, %v526
      %v832 = vpop.permute.xlu0 %831
      %834 = vset.pattern.permute.xlu0 2
      %835 = vperm.xlu0 %834, %v527
      %v836 = vpop.permute.xlu0 %835
      %838 = vset.pattern.permute.xlu0 2
      %839 = vperm.xlu0 %838, %v528
      %v840 = vpop.permute.xlu0 %839
      %842 = vset.pattern.permute.xlu0 2
      %843 = vperm.xlu0 %842, %v529
      %v844 = vpop.permute.xlu0 %843
      %846 = vset.pattern.permute.xlu0 2
      %847 = vperm.xlu0 %846, %v530
      %v848 = vpop.permute.xlu0 %847
      %850 = vset.pattern.permute.xlu0 2
      %851 = vperm.xlu0 %850, %v531
      %v852 = vpop.permute.xlu0 %851
      %854 = vset.pattern.permute.xlu0 2
      %855 = vperm.xlu0 %854, %v532
      %v856 = vpop.permute.xlu0 %855
      %v858 = vlaneseq
      %v859 = vshrl.u32 %v858, 7
      %v860 = vsub.s32 2, %v859
      %v861 = vrot.slane %v567, %v860
      %v862 = vmin.f32 %v796, %v861
      %v863 = vmin.f32 %v800, %v861
      %v864 = vmin.f32 %v804, %v861
      %v865 = vmin.f32 %v808, %v861
      %v866 = vmin.f32 %v812, %v861
      %v867 = vmin.f32 %v816, %v861
      %v868 = vmin.f32 %v820, %v861
      %v869 = vmin.f32 %v824, %v861
      %v870 = vmin.f32 %v828, %v861
      %v871 = vmin.f32 %v832, %v861
      %v872 = vmin.f32 %v836, %v861
      %v873 = vmin.f32 %v840, %v861
      %v874 = vmin.f32 %v844, %v861
      %v875 = vmin.f32 %v848, %v861
      %v876 = vmin.f32 %v852, %v861
      %v877 = vmin.f32 %v856, %v861
      %878 = vset.pattern.permute.xlu0 0
      %879 = vperm.xlu0 %878, %v517
      %v880 = vpop.permute.xlu0 %879
      %882 = vset.pattern.permute.xlu0 0
      %883 = vperm.xlu0 %882, %v518
      %v884 = vpop.permute.xlu0 %883
      %886 = vset.pattern.permute.xlu0 0
      %887 = vperm.xlu0 %886, %v519
      %v888 = vpop.permute.xlu0 %887
      %890 = vset.pattern.permute.xlu0 0
      %891 = vperm.xlu0 %890, %v520
      %v892 = vpop.permute.xlu0 %891
      %894 = vset.pattern.permute.xlu0 0
      %895 = vperm.xlu0 %894, %v521
      %v896 = vpop.permute.xlu0 %895
      %898 = vset.pattern.permute.xlu0 0
      %899 = vperm.xlu0 %898, %v522
      %v900 = vpop.permute.xlu0 %899
      %902 = vset.pattern.permute.xlu0 0
      %903 = vperm.xlu0 %902, %v523
      %v904 = vpop.permute.xlu0 %903
      %906 = vset.pattern.permute.xlu0 0
      %907 = vperm.xlu0 %906, %v524
      %v908 = vpop.permute.xlu0 %907
      %910 = vset.pattern.permute.xlu0 0
      %911 = vperm.xlu0 %910, %v525
      %v912 = vpop.permute.xlu0 %911
      %914 = vset.pattern.permute.xlu0 0
      %915 = vperm.xlu0 %914, %v526
      %v916 = vpop.permute.xlu0 %915
      %918 = vset.pattern.permute.xlu0 0
      %919 = vperm.xlu0 %918, %v527
      %v920 = vpop.permute.xlu0 %919
      %922 = vset.pattern.permute.xlu0 0
      %923 = vperm.xlu0 %922, %v528
      %v924 = vpop.permute.xlu0 %923
      %926 = vset.pattern.permute.xlu0 0
      %927 = vperm.xlu0 %926, %v529
      %v928 = vpop.permute.xlu0 %927
      %930 = vset.pattern.permute.xlu0 0
      %931 = vperm.xlu0 %930, %v530
      %v932 = vpop.permute.xlu0 %931
      %934 = vset.pattern.permute.xlu0 0
      %935 = vperm.xlu0 %934, %v531
      %v936 = vpop.permute.xlu0 %935
      %938 = vset.pattern.permute.xlu0 0
      %939 = vperm.xlu0 %938, %v532
      %v940 = vpop.permute.xlu0 %939
      %v942 = vlaneseq
      %v943 = vshrl.u32 %v942, 7
      %v944 = vsub.s32 0, %v943
      %v945 = vrot.slane %v567, %v944
      %v946 = vmax.f32 %v880, %v945
      %v947 = vmax.f32 %v884, %v945
      %v948 = vmax.f32 %v888, %v945
      %v949 = vmax.f32 %v892, %v945
      %v950 = vmax.f32 %v896, %v945
      %v951 = vmax.f32 %v900, %v945
      %v952 = vmax.f32 %v904, %v945
      %v953 = vmax.f32 %v908, %v945
      %v954 = vmax.f32 %v912, %v945
      %v955 = vmax.f32 %v916, %v945
      %v956 = vmax.f32 %v920, %v945
      %v957 = vmax.f32 %v924, %v945
      %v958 = vmax.f32 %v928, %v945
      %v959 = vmax.f32 %v932, %v945
      %v960 = vmax.f32 %v936, %v945
      %v961 = vmax.f32 %v940, %v945
      %v962 = vsub.f32 %v862, %v946
      %v963 = vsub.f32 %v863, %v947
      %v964 = vsub.f32 %v864, %v948
      %v965 = vsub.f32 %v865, %v949
      %v966 = vsub.f32 %v866, %v950
      %v967 = vsub.f32 %v867, %v951
      %v968 = vsub.f32 %v868, %v952
      %v969 = vsub.f32 %v869, %v953
      %v970 = vsub.f32 %v870, %v954
      %v971 = vsub.f32 %v871, %v955
      %v972 = vsub.f32 %v872, %v956
      %v973 = vsub.f32 %v873, %v957
      %v974 = vsub.f32 %v874, %v958
      %v975 = vsub.f32 %v875, %v959
      %v976 = vsub.f32 %v876, %v960
      %v977 = vsub.f32 %v877, %v961
      %v978 = vmax.f32 %v962, 0.0
      %v979 = vmax.f32 %v963, 0.0
      %v980 = vmax.f32 %v964, 0.0
      %v981 = vmax.f32 %v965, 0.0
      %v982 = vmax.f32 %v966, 0.0
      %v983 = vmax.f32 %v967, 0.0
      %v984 = vmax.f32 %v968, 0.0
      %v985 = vmax.f32 %v969, 0.0
      %v986 = vmax.f32 %v970, 0.0
      %v987 = vmax.f32 %v971, 0.0
      %v988 = vmax.f32 %v972, 0.0
      %v989 = vmax.f32 %v973, 0.0
      %v990 = vmax.f32 %v974, 0.0
      %v991 = vmax.f32 %v975, 0.0
      %v992 = vmax.f32 %v976, 0.0
      %v993 = vmax.f32 %v977, 0.0
      %994 = vset.pattern.permute.xlu0 3
      %995 = vperm.xlu0 %994, %v517
      %v996 = vpop.permute.xlu0 %995
      %998 = vset.pattern.permute.xlu0 3
      %999 = vperm.xlu0 %998, %v518
      %v1000 = vpop.permute.xlu0 %999
      %1002 = vset.pattern.permute.xlu0 3
      %1003 = vperm.xlu0 %1002, %v519
      %v1004 = vpop.permute.xlu0 %1003
      %1006 = vset.pattern.permute.xlu0 3
      %1007 = vperm.xlu0 %1006, %v520
      %v1008 = vpop.permute.xlu0 %1007
      %1010 = vset.pattern.permute.xlu0 3
      %1011 = vperm.xlu0 %1010, %v521
      %v1012 = vpop.permute.xlu0 %1011
      %1014 = vset.pattern.permute.xlu0 3
      %1015 = vperm.xlu0 %1014, %v522
      %v1016 = vpop.permute.xlu0 %1015
      %1018 = vset.pattern.permute.xlu0 3
      %1019 = vperm.xlu0 %1018, %v523
      %v1020 = vpop.permute.xlu0 %1019
      %1022 = vset.pattern.permute.xlu0 3
      %1023 = vperm.xlu0 %1022, %v524
      %v1024 = vpop.permute.xlu0 %1023
      %1026 = vset.pattern.permute.xlu0 3
      %1027 = vperm.xlu0 %1026, %v525
      %v1028 = vpop.permute.xlu0 %1027
      %1030 = vset.pattern.permute.xlu0 3
      %1031 = vperm.xlu0 %1030, %v526
      %v1032 = vpop.permute.xlu0 %1031
      %1034 = vset.pattern.permute.xlu0 3
      %1035 = vperm.xlu0 %1034, %v527
      %v1036 = vpop.permute.xlu0 %1035
      %1038 = vset.pattern.permute.xlu0 3
      %1039 = vperm.xlu0 %1038, %v528
      %v1040 = vpop.permute.xlu0 %1039
      %1042 = vset.pattern.permute.xlu0 3
      %1043 = vperm.xlu0 %1042, %v529
      %v1044 = vpop.permute.xlu0 %1043
      %1046 = vset.pattern.permute.xlu0 3
      %1047 = vperm.xlu0 %1046, %v530
      %v1048 = vpop.permute.xlu0 %1047
      %1050 = vset.pattern.permute.xlu0 3
      %1051 = vperm.xlu0 %1050, %v531
      %v1052 = vpop.permute.xlu0 %1051
      %1054 = vset.pattern.permute.xlu0 3
      %1055 = vperm.xlu0 %1054, %v532
      %v1056 = vpop.permute.xlu0 %1055
      %v1058 = vlaneseq
      %v1059 = vshrl.u32 %v1058, 7
      %v1060 = vsub.s32 3, %v1059
      %v1061 = vrot.slane %v567, %v1060
      %v1062 = vmin.f32 %v996, %v1061
      %v1063 = vmin.f32 %v1000, %v1061
      %v1064 = vmin.f32 %v1004, %v1061
      %v1065 = vmin.f32 %v1008, %v1061
      %v1066 = vmin.f32 %v1012, %v1061
      %v1067 = vmin.f32 %v1016, %v1061
      %v1068 = vmin.f32 %v1020, %v1061
      %v1069 = vmin.f32 %v1024, %v1061
      %v1070 = vmin.f32 %v1028, %v1061
      %v1071 = vmin.f32 %v1032, %v1061
      %v1072 = vmin.f32 %v1036, %v1061
      %v1073 = vmin.f32 %v1040, %v1061
      %v1074 = vmin.f32 %v1044, %v1061
      %v1075 = vmin.f32 %v1048, %v1061
      %v1076 = vmin.f32 %v1052, %v1061
      %v1077 = vmin.f32 %v1056, %v1061
      %1078 = vset.pattern.permute.xlu0 1
      %1079 = vperm.xlu0 %1078, %v517
      %v1080 = vpop.permute.xlu0 %1079
      %1082 = vset.pattern.permute.xlu0 1
      %1083 = vperm.xlu0 %1082, %v518
      %v1084 = vpop.permute.xlu0 %1083
      %1086 = vset.pattern.permute.xlu0 1
      %1087 = vperm.xlu0 %1086, %v519
      %v1088 = vpop.permute.xlu0 %1087
      %1090 = vset.pattern.permute.xlu0 1
      %1091 = vperm.xlu0 %1090, %v520
      %v1092 = vpop.permute.xlu0 %1091
      %1094 = vset.pattern.permute.xlu0 1
      %1095 = vperm.xlu0 %1094, %v521
      %v1096 = vpop.permute.xlu0 %1095
      %1098 = vset.pattern.permute.xlu0 1
      %1099 = vperm.xlu0 %1098, %v522
      %v1100 = vpop.permute.xlu0 %1099
      %1102 = vset.pattern.permute.xlu0 1
      %1103 = vperm.xlu0 %1102, %v523
      %v1104 = vpop.permute.xlu0 %1103
      %1106 = vset.pattern.permute.xlu0 1
      %1107 = vperm.xlu0 %1106, %v524
      %v1108 = vpop.permute.xlu0 %1107
      %1110 = vset.pattern.permute.xlu0 1
      %1111 = vperm.xlu0 %1110, %v525
      %v1112 = vpop.permute.xlu0 %1111
      %1114 = vset.pattern.permute.xlu0 1
      %1115 = vperm.xlu0 %1114, %v526
      %v1116 = vpop.permute.xlu0 %1115
      %1118 = vset.pattern.permute.xlu0 1
      %1119 = vperm.xlu0 %1118, %v527
      %v1120 = vpop.permute.xlu0 %1119
      %1122 = vset.pattern.permute.xlu0 1
      %1123 = vperm.xlu0 %1122, %v528
      %v1124 = vpop.permute.xlu0 %1123
      %1126 = vset.pattern.permute.xlu0 1
      %1127 = vperm.xlu0 %1126, %v529
      %v1128 = vpop.permute.xlu0 %1127
      %1130 = vset.pattern.permute.xlu0 1
      %1131 = vperm.xlu0 %1130, %v530
      %v1132 = vpop.permute.xlu0 %1131
      %1134 = vset.pattern.permute.xlu0 1
      %1135 = vperm.xlu0 %1134, %v531
      %v1136 = vpop.permute.xlu0 %1135
      %1138 = vset.pattern.permute.xlu0 1
      %1139 = vperm.xlu0 %1138, %v532
      %v1140 = vpop.permute.xlu0 %1139
      %v1142 = vlaneseq
      %v1143 = vshrl.u32 %v1142, 7
      %v1144 = vsub.s32 1, %v1143
      %v1145 = vrot.slane %v567, %v1144
      %v1146 = vmax.f32 %v1080, %v1145
      %v1147 = vmax.f32 %v1084, %v1145
      %v1148 = vmax.f32 %v1088, %v1145
      %v1149 = vmax.f32 %v1092, %v1145
      %v1150 = vmax.f32 %v1096, %v1145
      %v1151 = vmax.f32 %v1100, %v1145
      %v1152 = vmax.f32 %v1104, %v1145
      %v1153 = vmax.f32 %v1108, %v1145
      %v1154 = vmax.f32 %v1112, %v1145
      %v1155 = vmax.f32 %v1116, %v1145
      %v1156 = vmax.f32 %v1120, %v1145
      %v1157 = vmax.f32 %v1124, %v1145
      %v1158 = vmax.f32 %v1128, %v1145
      %v1159 = vmax.f32 %v1132, %v1145
      %v1160 = vmax.f32 %v1136, %v1145
      %v1161 = vmax.f32 %v1140, %v1145
      %v1162 = vsub.f32 %v1062, %v1146
      %v1163 = vsub.f32 %v1063, %v1147
      %v1164 = vsub.f32 %v1064, %v1148
      %v1165 = vsub.f32 %v1065, %v1149
      %v1166 = vsub.f32 %v1066, %v1150
      %v1167 = vsub.f32 %v1067, %v1151
      %v1168 = vsub.f32 %v1068, %v1152
      %v1169 = vsub.f32 %v1069, %v1153
      %v1170 = vsub.f32 %v1070, %v1154
      %v1171 = vsub.f32 %v1071, %v1155
      %v1172 = vsub.f32 %v1072, %v1156
      %v1173 = vsub.f32 %v1073, %v1157
      %v1174 = vsub.f32 %v1074, %v1158
      %v1175 = vsub.f32 %v1075, %v1159
      %v1176 = vsub.f32 %v1076, %v1160
      %v1177 = vsub.f32 %v1077, %v1161
      %v1178 = vmax.f32 %v1162, 0.0
      %v1179 = vmax.f32 %v1163, 0.0
      %v1180 = vmax.f32 %v1164, 0.0
      %v1181 = vmax.f32 %v1165, 0.0
      %v1182 = vmax.f32 %v1166, 0.0
      %v1183 = vmax.f32 %v1167, 0.0
      %v1184 = vmax.f32 %v1168, 0.0
      %v1185 = vmax.f32 %v1169, 0.0
      %v1186 = vmax.f32 %v1170, 0.0
      %v1187 = vmax.f32 %v1171, 0.0
      %v1188 = vmax.f32 %v1172, 0.0
      %v1189 = vmax.f32 %v1173, 0.0
      %v1190 = vmax.f32 %v1174, 0.0
      %v1191 = vmax.f32 %v1175, 0.0
      %v1192 = vmax.f32 %v1176, 0.0
      %v1193 = vmax.f32 %v1177, 0.0
      %v1194 = vmul.f32 %v978, %v1178
      %v1195 = vmul.f32 %v979, %v1179
      %v1196 = vmul.f32 %v980, %v1180
      %v1197 = vmul.f32 %v981, %v1181
      %v1198 = vmul.f32 %v982, %v1182
      %v1199 = vmul.f32 %v983, %v1183
      %v1200 = vmul.f32 %v984, %v1184
      %v1201 = vmul.f32 %v985, %v1185
      %v1202 = vmul.f32 %v986, %v1186
      %v1203 = vmul.f32 %v987, %v1187
      %v1204 = vmul.f32 %v988, %v1188
      %v1205 = vmul.f32 %v989, %v1189
      %v1206 = vmul.f32 %v990, %v1190
      %v1207 = vmul.f32 %v991, %v1191
      %v1208 = vmul.f32 %v992, %v1192
      %v1209 = vmul.f32 %v993, %v1193
      %1211 = vset.pattern.permute.xlu0 2
      %1212 = vperm.xlu0 %1211, %v770
      %v1213 = vpop.permute.xlu0 %1212
      %1216 = vset.pattern.permute.xlu0 2
      %1217 = vperm.xlu0 %1216, %v771
      %v1218 = vpop.permute.xlu0 %1217
      %1221 = vset.pattern.permute.xlu0 2
      %1222 = vperm.xlu0 %1221, %v772
      %v1223 = vpop.permute.xlu0 %1222
      %1226 = vset.pattern.permute.xlu0 2
      %1227 = vperm.xlu0 %1226, %v773
      %v1228 = vpop.permute.xlu0 %1227
      %1231 = vset.pattern.permute.xlu0 2
      %1232 = vperm.xlu0 %1231, %v774
      %v1233 = vpop.permute.xlu0 %1232
      %1236 = vset.pattern.permute.xlu0 2
      %1237 = vperm.xlu0 %1236, %v775
      %v1238 = vpop.permute.xlu0 %1237
      %1241 = vset.pattern.permute.xlu0 2
      %1242 = vperm.xlu0 %1241, %v776
      %v1243 = vpop.permute.xlu0 %1242
      %1246 = vset.pattern.permute.xlu0 2
      %1247 = vperm.xlu0 %1246, %v777
      %v1248 = vpop.permute.xlu0 %1247
      %1251 = vset.pattern.permute.xlu0 2
      %1252 = vperm.xlu0 %1251, %v778
      %v1253 = vpop.permute.xlu0 %1252
      %1256 = vset.pattern.permute.xlu0 2
      %1257 = vperm.xlu0 %1256, %v779
      %v1258 = vpop.permute.xlu0 %1257
      %1261 = vset.pattern.permute.xlu0 2
      %1262 = vperm.xlu0 %1261, %v780
      %v1263 = vpop.permute.xlu0 %1262
      %1266 = vset.pattern.permute.xlu0 2
      %1267 = vperm.xlu0 %1266, %v781
      %v1268 = vpop.permute.xlu0 %1267
      %1271 = vset.pattern.permute.xlu0 2
      %1272 = vperm.xlu0 %1271, %v782
      %v1273 = vpop.permute.xlu0 %1272
      %1276 = vset.pattern.permute.xlu0 2
      %1277 = vperm.xlu0 %1276, %v783
      %v1278 = vpop.permute.xlu0 %1277
      %1281 = vset.pattern.permute.xlu0 2
      %1282 = vperm.xlu0 %1281, %v784
      %v1283 = vpop.permute.xlu0 %1282
      %1286 = vset.pattern.permute.xlu0 2
      %1287 = vperm.xlu0 %1286, %v785
      %v1288 = vpop.permute.xlu0 %1287
      %v1290 = vlaneseq
      %v1291 = vshrl.u32 %v1290, 7
      %v1292 = vsub.s32 2, %v1291
      %v1293 = vrot.slane %v793, %v1292
      %v1294 = vadd.f32 %v1213, %v1293
      %v1295 = vadd.f32 %v1218, %v1293
      %v1296 = vadd.f32 %v1223, %v1293
      %v1297 = vadd.f32 %v1228, %v1293
      %v1298 = vadd.f32 %v1233, %v1293
      %v1299 = vadd.f32 %v1238, %v1293
      %v1300 = vadd.f32 %v1243, %v1293
      %v1301 = vadd.f32 %v1248, %v1293
      %v1302 = vadd.f32 %v1253, %v1293
      %v1303 = vadd.f32 %v1258, %v1293
      %v1304 = vadd.f32 %v1263, %v1293
      %v1305 = vadd.f32 %v1268, %v1293
      %v1306 = vadd.f32 %v1273, %v1293
      %v1307 = vadd.f32 %v1278, %v1293
      %v1308 = vadd.f32 %v1283, %v1293
      %v1309 = vadd.f32 %v1288, %v1293
      %v1310 = vsub.f32 %v1294, %v1194
      %v1311 = vsub.f32 %v1295, %v1195
      %v1312 = vsub.f32 %v1296, %v1196
      %v1313 = vsub.f32 %v1297, %v1197
      %v1314 = vsub.f32 %v1298, %v1198
      %v1315 = vsub.f32 %v1299, %v1199
      %v1316 = vsub.f32 %v1300, %v1200
      %v1317 = vsub.f32 %v1301, %v1201
      %v1318 = vsub.f32 %v1302, %v1202
      %v1319 = vsub.f32 %v1303, %v1203
      %v1320 = vsub.f32 %v1304, %v1204
      %v1321 = vsub.f32 %v1305, %v1205
      %v1322 = vsub.f32 %v1306, %v1206
      %v1323 = vsub.f32 %v1307, %v1207
      %v1324 = vsub.f32 %v1308, %v1208
      %v1325 = vsub.f32 %v1309, %v1209
      %v1326 = vmax.f32 %v1310, 1e-08
      %v1327 = vmax.f32 %v1311, 1e-08
      %v1328 = vmax.f32 %v1312, 1e-08
      %v1329 = vmax.f32 %v1313, 1e-08
      %v1330 = vmax.f32 %v1314, 1e-08
      %v1331 = vmax.f32 %v1315, 1e-08
      %v1332 = vmax.f32 %v1316, 1e-08
      %v1333 = vmax.f32 %v1317, 1e-08
      %v1334 = vmax.f32 %v1318, 1e-08
      %v1335 = vmax.f32 %v1319, 1e-08
      %v1336 = vmax.f32 %v1320, 1e-08
      %v1337 = vmax.f32 %v1321, 1e-08
      %v1338 = vmax.f32 %v1322, 1e-08
      %v1339 = vmax.f32 %v1323, 1e-08
      %v1340 = vmax.f32 %v1324, 1e-08
      %v1341 = vmax.f32 %v1325, 1e-08
      %v1342 = vrcp.pop %v1326
      %v1343 = vmul.f32 %v1194, %v1342
      %v1344 = vrcp.pop %v1327
      %v1345 = vmul.f32 %v1195, %v1344
      %v1346 = vrcp.pop %v1328
      %v1347 = vmul.f32 %v1196, %v1346
      %v1348 = vrcp.pop %v1329
      %v1349 = vmul.f32 %v1197, %v1348
      %v1350 = vrcp.pop %v1330
      %v1351 = vmul.f32 %v1198, %v1350
      %v1352 = vrcp.pop %v1331
      %v1353 = vmul.f32 %v1199, %v1352
      %v1354 = vrcp.pop %v1332
      %v1355 = vmul.f32 %v1200, %v1354
      %v1356 = vrcp.pop %v1333
      %v1357 = vmul.f32 %v1201, %v1356
      %v1358 = vrcp.pop %v1334
      %v1359 = vmul.f32 %v1202, %v1358
      %v1360 = vrcp.pop %v1335
      %v1361 = vmul.f32 %v1203, %v1360
      %v1362 = vrcp.pop %v1336
      %v1363 = vmul.f32 %v1204, %v1362
      %v1364 = vrcp.pop %v1337
      %v1365 = vmul.f32 %v1205, %v1364
      %v1366 = vrcp.pop %v1338
      %v1367 = vmul.f32 %v1206, %v1366
      %v1368 = vrcp.pop %v1339
      %v1369 = vmul.f32 %v1207, %v1368
      %v1370 = vrcp.pop %v1340
      %v1371 = vmul.f32 %v1208, %v1370
      %v1372 = vrcp.pop %v1341
      %v1373 = vmul.f32 %v1209, %v1372
      %v1374 = vsel %vm625, 1, 0
      %v1375 = vlaneseq
      %v1376 = vshrl.u32 %v1375, 7
      %v1377 = vsub.s32 4, %v1376
      %v1378 = vrot.slane %v1374, %v1377
      %vm1379 = vcmp.eq.s32.totalorder %v1378, 1
      %v1380 = vsel %vm1379, %v1343, -1.0
      %v1381 = vsel %vm1379, %v1345, -1.0
      %v1382 = vsel %vm1379, %v1347, -1.0
      %v1383 = vsel %vm1379, %v1349, -1.0
      %v1384 = vsel %vm1379, %v1351, -1.0
      %v1385 = vsel %vm1379, %v1353, -1.0
      %v1386 = vsel %vm1379, %v1355, -1.0
      %v1387 = vsel %vm1379, %v1357, -1.0
      %v1388 = vsel %vm1379, %v1359, -1.0
      %v1389 = vsel %vm1379, %v1361, -1.0
      %v1390 = vsel %vm1379, %v1363, -1.0
      %v1391 = vsel %vm1379, %v1365, -1.0
      %v1392 = vsel %vm1379, %v1367, -1.0
      %v1393 = vsel %vm1379, %v1369, -1.0
      %v1394 = vsel %vm1379, %v1371, -1.0
      %v1395 = vsel %vm1379, %v1373, -1.0
      %vm1396 = vcmask 64512
      %v1397 = vsel %vm1396, %v1380, -inf
      %1398 = vmax.xlane.f32.xlu0 %v1397
      %v1399 = vpop.xlane.xlu0 %1398
      %v1400 = vsel %vm1396, %v1381, -inf
      %1401 = vmax.xlane.f32.xlu0 %v1400
      %v1402 = vpop.xlane.xlu0 %1401
      %v1403 = vsel %vm1396, %v1382, -inf
      %1404 = vmax.xlane.f32.xlu0 %v1403
      %v1405 = vpop.xlane.xlu0 %1404
      %v1406 = vsel %vm1396, %v1383, -inf
      %1407 = vmax.xlane.f32.xlu0 %v1406
      %v1408 = vpop.xlane.xlu0 %1407
      %v1409 = vsel %vm1396, %v1384, -inf
      %1410 = vmax.xlane.f32.xlu0 %v1409
      %v1411 = vpop.xlane.xlu0 %1410
      %v1412 = vsel %vm1396, %v1385, -inf
      %1413 = vmax.xlane.f32.xlu0 %v1412
      %v1414 = vpop.xlane.xlu0 %1413
      %v1415 = vsel %vm1396, %v1386, -inf
      %1416 = vmax.xlane.f32.xlu0 %v1415
      %v1417 = vpop.xlane.xlu0 %1416
      %v1418 = vsel %vm1396, %v1387, -inf
      %1419 = vmax.xlane.f32.xlu0 %v1418
      %v1420 = vpop.xlane.xlu0 %1419
      %v1421 = vsel %vm1396, %v1388, -inf
      %1422 = vmax.xlane.f32.xlu0 %v1421
      %v1423 = vpop.xlane.xlu0 %1422
      %v1424 = vsel %vm1396, %v1389, -inf
      %1425 = vmax.xlane.f32.xlu0 %v1424
      %v1426 = vpop.xlane.xlu0 %1425
      %v1427 = vsel %vm1396, %v1390, -inf
      %1428 = vmax.xlane.f32.xlu0 %v1427
      %v1429 = vpop.xlane.xlu0 %1428
      %v1430 = vsel %vm1396, %v1391, -inf
      %1431 = vmax.xlane.f32.xlu0 %v1430
      %v1432 = vpop.xlane.xlu0 %1431
      %v1433 = vsel %vm1396, %v1392, -inf
      %1434 = vmax.xlane.f32.xlu0 %v1433
      %v1435 = vpop.xlane.xlu0 %1434
      %v1436 = vsel %vm1396, %v1393, -inf
      %1437 = vmax.xlane.f32.xlu0 %v1436
      %v1438 = vpop.xlane.xlu0 %1437
      %v1439 = vsel %vm1396, %v1394, -inf
      %1440 = vmax.xlane.f32.xlu0 %v1439
      %v1441 = vpop.xlane.xlu0 %1440
      %v1442 = vsel %vm1396, %v1395, -inf
      %1443 = vmax.xlane.f32.xlu0 %v1442
      %v1444 = vpop.xlane.xlu0 %1443
      %vm1445 = vcmp.eq.f32.partialorder %v1380, %v1399
      %vm1446 = vcmp.eq.f32.partialorder %v1381, %v1402
      %vm1447 = vcmp.eq.f32.partialorder %v1382, %v1405
      %vm1448 = vcmp.eq.f32.partialorder %v1383, %v1408
      %vm1449 = vcmp.eq.f32.partialorder %v1384, %v1411
      %vm1450 = vcmp.eq.f32.partialorder %v1385, %v1414
      %vm1451 = vcmp.eq.f32.partialorder %v1386, %v1417
      %vm1452 = vcmp.eq.f32.partialorder %v1387, %v1420
      %vm1453 = vcmp.eq.f32.partialorder %v1388, %v1423
      %vm1454 = vcmp.eq.f32.partialorder %v1389, %v1426
      %vm1455 = vcmp.eq.f32.partialorder %v1390, %v1429
      %vm1456 = vcmp.eq.f32.partialorder %v1391, %v1432
      %vm1457 = vcmp.eq.f32.partialorder %v1392, %v1435
      %vm1458 = vcmp.eq.f32.partialorder %v1393, %v1438
      %vm1459 = vcmp.eq.f32.partialorder %v1394, %v1441
      %vm1460 = vcmp.eq.f32.partialorder %v1395, %v1444
      %v1461 = vsel %vm1445, %v622, 8
      %v1462 = vsel %vm1446, %v622, 8
      %v1463 = vsel %vm1447, %v622, 8
      %v1464 = vsel %vm1448, %v622, 8
      %v1465 = vsel %vm1449, %v622, 8
      %v1466 = vsel %vm1450, %v622, 8
      %v1467 = vsel %vm1451, %v622, 8
      %v1468 = vsel %vm1452, %v622, 8
      %v1469 = vsel %vm1453, %v622, 8
      %v1470 = vsel %vm1454, %v622, 8
      %v1471 = vsel %vm1455, %v622, 8
      %v1472 = vsel %vm1456, %v622, 8
      %v1473 = vsel %vm1457, %v622, 8
      %v1474 = vsel %vm1458, %v622, 8
      %v1475 = vsel %vm1459, %v622, 8
      %v1476 = vsel %vm1460, %v622, 8
      %v1477 = vsel %vm1396, %v1461, 2147483647
      %v1478 = vand.u32 %v1477, 65535
      %v1479 = vshra.s32 %v1477, 16
      %v1480 = vcvt.s32.f32 %v1478
      %v1481 = vcvt.s32.f32 %v1479
      %1482 = vmin.xlane.f32.xlu0 %v1481
      %v1483 = vpop.xlane.xlu0 %1482
      %vm1484 = vcmp.eq.f32.partialorder %v1481, %v1483
      %v1485 = vsel %vm1484, %v1480, inf
      %1486 = vmin.xlane.f32.xlu0 %v1485
      %v1487 = vpop.xlane.xlu0 %1486
      %v1488 = vcvt.f32.s32 %v1487
      %v1489 = vcvt.f32.s32 %v1483
      %v1490 = vshll.u32 %v1489, 16
      %v1491 = vadd.s32 %v1490, %v1488
      %v1492 = vsel %vm1396, %v1462, 2147483647
      %v1493 = vand.u32 %v1492, 65535
      %v1494 = vshra.s32 %v1492, 16
      %v1495 = vcvt.s32.f32 %v1493
      %v1496 = vcvt.s32.f32 %v1494
      %1497 = vmin.xlane.f32.xlu0 %v1496
      %v1498 = vpop.xlane.xlu0 %1497
      %vm1499 = vcmp.eq.f32.partialorder %v1496, %v1498
      %v1500 = vsel %vm1499, %v1495, inf
      %1501 = vmin.xlane.f32.xlu0 %v1500
      %v1502 = vpop.xlane.xlu0 %1501
      %v1503 = vcvt.f32.s32 %v1502
      %v1504 = vcvt.f32.s32 %v1498
      %v1505 = vshll.u32 %v1504, 16
      %v1506 = vadd.s32 %v1505, %v1503
      %v1507 = vsel %vm1396, %v1463, 2147483647
      %v1508 = vand.u32 %v1507, 65535
      %v1509 = vshra.s32 %v1507, 16
      %v1510 = vcvt.s32.f32 %v1508
      %v1511 = vcvt.s32.f32 %v1509
      %1512 = vmin.xlane.f32.xlu0 %v1511
      %v1513 = vpop.xlane.xlu0 %1512
      %vm1514 = vcmp.eq.f32.partialorder %v1511, %v1513
      %v1515 = vsel %vm1514, %v1510, inf
      %1516 = vmin.xlane.f32.xlu0 %v1515
      %v1517 = vpop.xlane.xlu0 %1516
      %v1518 = vcvt.f32.s32 %v1517
      %v1519 = vcvt.f32.s32 %v1513
      %v1520 = vshll.u32 %v1519, 16
      %v1521 = vadd.s32 %v1520, %v1518
      %v1522 = vsel %vm1396, %v1464, 2147483647
      %v1523 = vand.u32 %v1522, 65535
      %v1524 = vshra.s32 %v1522, 16
      %v1525 = vcvt.s32.f32 %v1523
      %v1526 = vcvt.s32.f32 %v1524
      %1527 = vmin.xlane.f32.xlu0 %v1526
      %v1528 = vpop.xlane.xlu0 %1527
      %vm1529 = vcmp.eq.f32.partialorder %v1526, %v1528
      %v1530 = vsel %vm1529, %v1525, inf
      %1531 = vmin.xlane.f32.xlu0 %v1530
      %v1532 = vpop.xlane.xlu0 %1531
      %v1533 = vcvt.f32.s32 %v1532
      %v1534 = vcvt.f32.s32 %v1528
      %v1535 = vshll.u32 %v1534, 16
      %v1536 = vadd.s32 %v1535, %v1533
      %v1537 = vsel %vm1396, %v1465, 2147483647
      %v1538 = vand.u32 %v1537, 65535
      %v1539 = vshra.s32 %v1537, 16
      %v1540 = vcvt.s32.f32 %v1538
      %v1541 = vcvt.s32.f32 %v1539
      %1542 = vmin.xlane.f32.xlu0 %v1541
      %v1543 = vpop.xlane.xlu0 %1542
      %vm1544 = vcmp.eq.f32.partialorder %v1541, %v1543
      %v1545 = vsel %vm1544, %v1540, inf
      %1546 = vmin.xlane.f32.xlu0 %v1545
      %v1547 = vpop.xlane.xlu0 %1546
      %v1548 = vcvt.f32.s32 %v1547
      %v1549 = vcvt.f32.s32 %v1543
      %v1550 = vshll.u32 %v1549, 16
      %v1551 = vadd.s32 %v1550, %v1548
      %v1552 = vsel %vm1396, %v1466, 2147483647
      %v1553 = vand.u32 %v1552, 65535
      %v1554 = vshra.s32 %v1552, 16
      %v1555 = vcvt.s32.f32 %v1553
      %v1556 = vcvt.s32.f32 %v1554
      %1557 = vmin.xlane.f32.xlu0 %v1556
      %v1558 = vpop.xlane.xlu0 %1557
      %vm1559 = vcmp.eq.f32.partialorder %v1556, %v1558
      %v1560 = vsel %vm1559, %v1555, inf
      %1561 = vmin.xlane.f32.xlu0 %v1560
      %v1562 = vpop.xlane.xlu0 %1561
      %v1563 = vcvt.f32.s32 %v1562
      %v1564 = vcvt.f32.s32 %v1558
      %v1565 = vshll.u32 %v1564, 16
      %v1566 = vadd.s32 %v1565, %v1563
      %v1567 = vsel %vm1396, %v1467, 2147483647
      %v1568 = vand.u32 %v1567, 65535
      %v1569 = vshra.s32 %v1567, 16
      %v1570 = vcvt.s32.f32 %v1568
      %v1571 = vcvt.s32.f32 %v1569
      %1572 = vmin.xlane.f32.xlu0 %v1571
      %v1573 = vpop.xlane.xlu0 %1572
      %vm1574 = vcmp.eq.f32.partialorder %v1571, %v1573
      %v1575 = vsel %vm1574, %v1570, inf
      %1576 = vmin.xlane.f32.xlu0 %v1575
      %v1577 = vpop.xlane.xlu0 %1576
      %v1578 = vcvt.f32.s32 %v1577
      %v1579 = vcvt.f32.s32 %v1573
      %v1580 = vshll.u32 %v1579, 16
      %v1581 = vadd.s32 %v1580, %v1578
      %v1582 = vsel %vm1396, %v1468, 2147483647
      %v1583 = vand.u32 %v1582, 65535
      %v1584 = vshra.s32 %v1582, 16
      %v1585 = vcvt.s32.f32 %v1583
      %v1586 = vcvt.s32.f32 %v1584
      %1587 = vmin.xlane.f32.xlu0 %v1586
      %v1588 = vpop.xlane.xlu0 %1587
      %vm1589 = vcmp.eq.f32.partialorder %v1586, %v1588
      %v1590 = vsel %vm1589, %v1585, inf
      %1591 = vmin.xlane.f32.xlu0 %v1590
      %v1592 = vpop.xlane.xlu0 %1591
      %v1593 = vcvt.f32.s32 %v1592
      %v1594 = vcvt.f32.s32 %v1588
      %v1595 = vshll.u32 %v1594, 16
      %v1596 = vadd.s32 %v1595, %v1593
      %v1597 = vsel %vm1396, %v1469, 2147483647
      %v1598 = vand.u32 %v1597, 65535
      %v1599 = vshra.s32 %v1597, 16
      %v1600 = vcvt.s32.f32 %v1598
      %v1601 = vcvt.s32.f32 %v1599
      %1602 = vmin.xlane.f32.xlu0 %v1601
      %v1603 = vpop.xlane.xlu0 %1602
      %vm1604 = vcmp.eq.f32.partialorder %v1601, %v1603
      %v1605 = vsel %vm1604, %v1600, inf
      %1606 = vmin.xlane.f32.xlu0 %v1605
      %v1607 = vpop.xlane.xlu0 %1606
      %v1608 = vcvt.f32.s32 %v1607
      %v1609 = vcvt.f32.s32 %v1603
      %v1610 = vshll.u32 %v1609, 16
      %v1611 = vadd.s32 %v1610, %v1608
      %v1612 = vsel %vm1396, %v1470, 2147483647
      %v1613 = vand.u32 %v1612, 65535
      %v1614 = vshra.s32 %v1612, 16
      %v1615 = vcvt.s32.f32 %v1613
      %v1616 = vcvt.s32.f32 %v1614
      %1617 = vmin.xlane.f32.xlu0 %v1616
      %v1618 = vpop.xlane.xlu0 %1617
      %vm1619 = vcmp.eq.f32.partialorder %v1616, %v1618
      %v1620 = vsel %vm1619, %v1615, inf
      %1621 = vmin.xlane.f32.xlu0 %v1620
      %v1622 = vpop.xlane.xlu0 %1621
      %v1623 = vcvt.f32.s32 %v1622
      %v1624 = vcvt.f32.s32 %v1618
      %v1625 = vshll.u32 %v1624, 16
      %v1626 = vadd.s32 %v1625, %v1623
      %v1627 = vsel %vm1396, %v1471, 2147483647
      %v1628 = vand.u32 %v1627, 65535
      %v1629 = vshra.s32 %v1627, 16
      %v1630 = vcvt.s32.f32 %v1628
      %v1631 = vcvt.s32.f32 %v1629
      %1632 = vmin.xlane.f32.xlu0 %v1631
      %v1633 = vpop.xlane.xlu0 %1632
      %vm1634 = vcmp.eq.f32.partialorder %v1631, %v1633
      %v1635 = vsel %vm1634, %v1630, inf
      %1636 = vmin.xlane.f32.xlu0 %v1635
      %v1637 = vpop.xlane.xlu0 %1636
      %v1638 = vcvt.f32.s32 %v1637
      %v1639 = vcvt.f32.s32 %v1633
      %v1640 = vshll.u32 %v1639, 16
      %v1641 = vadd.s32 %v1640, %v1638
      %v1642 = vsel %vm1396, %v1472, 2147483647
      %v1643 = vand.u32 %v1642, 65535
      %v1644 = vshra.s32 %v1642, 16
      %v1645 = vcvt.s32.f32 %v1643
      %v1646 = vcvt.s32.f32 %v1644
      %1647 = vmin.xlane.f32.xlu0 %v1646
      %v1648 = vpop.xlane.xlu0 %1647
      %vm1649 = vcmp.eq.f32.partialorder %v1646, %v1648
      %v1650 = vsel %vm1649, %v1645, inf
      %1651 = vmin.xlane.f32.xlu0 %v1650
      %v1652 = vpop.xlane.xlu0 %1651
      %v1653 = vcvt.f32.s32 %v1652
      %v1654 = vcvt.f32.s32 %v1648
      %v1655 = vshll.u32 %v1654, 16
      %v1656 = vadd.s32 %v1655, %v1653
      %v1657 = vsel %vm1396, %v1473, 2147483647
      %v1658 = vand.u32 %v1657, 65535
      %v1659 = vshra.s32 %v1657, 16
      %v1660 = vcvt.s32.f32 %v1658
      %v1661 = vcvt.s32.f32 %v1659
      %1662 = vmin.xlane.f32.xlu0 %v1661
      %v1663 = vpop.xlane.xlu0 %1662
      %vm1664 = vcmp.eq.f32.partialorder %v1661, %v1663
      %v1665 = vsel %vm1664, %v1660, inf
      %1666 = vmin.xlane.f32.xlu0 %v1665
      %v1667 = vpop.xlane.xlu0 %1666
      %v1668 = vcvt.f32.s32 %v1667
      %v1669 = vcvt.f32.s32 %v1663
      %v1670 = vshll.u32 %v1669, 16
      %v1671 = vadd.s32 %v1670, %v1668
      %v1672 = vsel %vm1396, %v1474, 2147483647
      %v1673 = vand.u32 %v1672, 65535
      %v1674 = vshra.s32 %v1672, 16
      %v1675 = vcvt.s32.f32 %v1673
      %v1676 = vcvt.s32.f32 %v1674
      %1677 = vmin.xlane.f32.xlu0 %v1676
      %v1678 = vpop.xlane.xlu0 %1677
      %vm1679 = vcmp.eq.f32.partialorder %v1676, %v1678
      %v1680 = vsel %vm1679, %v1675, inf
      %1681 = vmin.xlane.f32.xlu0 %v1680
      %v1682 = vpop.xlane.xlu0 %1681
      %v1683 = vcvt.f32.s32 %v1682
      %v1684 = vcvt.f32.s32 %v1678
      %v1685 = vshll.u32 %v1684, 16
      %v1686 = vadd.s32 %v1685, %v1683
      %v1687 = vsel %vm1396, %v1475, 2147483647
      %v1688 = vand.u32 %v1687, 65535
      %v1689 = vshra.s32 %v1687, 16
      %v1690 = vcvt.s32.f32 %v1688
      %v1691 = vcvt.s32.f32 %v1689
      %1692 = vmin.xlane.f32.xlu0 %v1691
      %v1693 = vpop.xlane.xlu0 %1692
      %vm1694 = vcmp.eq.f32.partialorder %v1691, %v1693
      %v1695 = vsel %vm1694, %v1690, inf
      %1696 = vmin.xlane.f32.xlu0 %v1695
      %v1697 = vpop.xlane.xlu0 %1696
      %v1698 = vcvt.f32.s32 %v1697
      %v1699 = vcvt.f32.s32 %v1693
      %v1700 = vshll.u32 %v1699, 16
      %v1701 = vadd.s32 %v1700, %v1698
      %v1702 = vsel %vm1396, %v1476, 2147483647
      %v1703 = vand.u32 %v1702, 65535
      %v1704 = vshra.s32 %v1702, 16
      %v1705 = vcvt.s32.f32 %v1703
      %v1706 = vcvt.s32.f32 %v1704
      %1707 = vmin.xlane.f32.xlu0 %v1706
      %v1708 = vpop.xlane.xlu0 %1707
      %vm1709 = vcmp.eq.f32.partialorder %v1706, %v1708
      %v1710 = vsel %vm1709, %v1705, inf
      %1711 = vmin.xlane.f32.xlu0 %v1710
      %v1712 = vpop.xlane.xlu0 %1711
      %v1713 = vcvt.f32.s32 %v1712
      %v1714 = vcvt.f32.s32 %v1708
      %v1715 = vshll.u32 %v1714, 16
      %v1716 = vadd.s32 %v1715, %v1713
      %vm1717 = vcmp.ge.f32.partialorder %v1399, 0.5
      %vm1718 = vcmp.ge.f32.partialorder %v1402, 0.5
      %vm1719 = vcmp.ge.f32.partialorder %v1405, 0.5
      %vm1720 = vcmp.ge.f32.partialorder %v1408, 0.5
      %vm1721 = vcmp.ge.f32.partialorder %v1411, 0.5
      %vm1722 = vcmp.ge.f32.partialorder %v1414, 0.5
      %vm1723 = vcmp.ge.f32.partialorder %v1417, 0.5
      %vm1724 = vcmp.ge.f32.partialorder %v1420, 0.5
      %vm1725 = vcmp.ge.f32.partialorder %v1423, 0.5
      %vm1726 = vcmp.ge.f32.partialorder %v1426, 0.5
      %vm1727 = vcmp.ge.f32.partialorder %v1429, 0.5
      %vm1728 = vcmp.ge.f32.partialorder %v1432, 0.5
      %vm1729 = vcmp.ge.f32.partialorder %v1435, 0.5
      %vm1730 = vcmp.ge.f32.partialorder %v1438, 0.5
      %vm1731 = vcmp.ge.f32.partialorder %v1441, 0.5
      %vm1732 = vcmp.ge.f32.partialorder %v1444, 0.5
      %vm1733 = vmand %vm1717, %vm605
      %vm1734 = vmand %vm1718, %vm606
      %vm1735 = vmand %vm1719, %vm607
      %vm1736 = vmand %vm1720, %vm608
      %vm1737 = vmand %vm1721, %vm609
      %vm1738 = vmand %vm1722, %vm610
      %vm1739 = vmand %vm1723, %vm611
      %vm1740 = vmand %vm1724, %vm612
      %vm1741 = vmand %vm1725, %vm613
      %vm1742 = vmand %vm1726, %vm614
      %vm1743 = vmand %vm1727, %vm615
      %vm1744 = vmand %vm1728, %vm616
      %vm1745 = vmand %vm1729, %vm617
      %vm1746 = vmand %vm1730, %vm618
      %vm1747 = vmand %vm1731, %vm619
      %vm1748 = vmand %vm1732, %vm620
      %vm1749 = vcmp.lt.f32.partialorder %v1399, 0.4
      %vm1750 = vcmp.lt.f32.partialorder %v1402, 0.4
      %vm1751 = vcmp.lt.f32.partialorder %v1405, 0.4
      %vm1752 = vcmp.lt.f32.partialorder %v1408, 0.4
      %vm1753 = vcmp.lt.f32.partialorder %v1411, 0.4
      %vm1754 = vcmp.lt.f32.partialorder %v1414, 0.4
      %vm1755 = vcmp.lt.f32.partialorder %v1417, 0.4
      %vm1756 = vcmp.lt.f32.partialorder %v1420, 0.4
      %vm1757 = vcmp.lt.f32.partialorder %v1423, 0.4
      %vm1758 = vcmp.lt.f32.partialorder %v1426, 0.4
      %vm1759 = vcmp.lt.f32.partialorder %v1429, 0.4
      %vm1760 = vcmp.lt.f32.partialorder %v1432, 0.4
      %vm1761 = vcmp.lt.f32.partialorder %v1435, 0.4
      %vm1762 = vcmp.lt.f32.partialorder %v1438, 0.4
      %vm1763 = vcmp.lt.f32.partialorder %v1441, 0.4
      %vm1764 = vcmp.lt.f32.partialorder %v1444, 0.4
      %vm1765 = vmor %vm1717, %vm1749
      %vm1766 = vmor %vm1718, %vm1750
      %vm1767 = vmor %vm1719, %vm1751
      %vm1768 = vmor %vm1720, %vm1752
      %vm1769 = vmor %vm1721, %vm1753
      %vm1770 = vmor %vm1722, %vm1754
      %vm1771 = vmor %vm1723, %vm1755
      %vm1772 = vmor %vm1724, %vm1756
      %vm1773 = vmor %vm1725, %vm1757
      %vm1774 = vmor %vm1726, %vm1758
      %vm1775 = vmor %vm1727, %vm1759
      %vm1776 = vmor %vm1728, %vm1760
      %vm1777 = vmor %vm1729, %vm1761
      %vm1778 = vmor %vm1730, %vm1762
      %vm1779 = vmor %vm1731, %vm1763
      %vm1780 = vmor %vm1732, %vm1764
      %vm1781 = vmand %vm1765, %vm605
      %vm1782 = vmand %vm1766, %vm606
      %vm1783 = vmand %vm1767, %vm607
      %vm1784 = vmand %vm1768, %vm608
      %vm1785 = vmand %vm1769, %vm609
      %vm1786 = vmand %vm1770, %vm610
      %vm1787 = vmand %vm1771, %vm611
      %vm1788 = vmand %vm1772, %vm612
      %vm1789 = vmand %vm1773, %vm613
      %vm1790 = vmand %vm1774, %vm614
      %vm1791 = vmand %vm1775, %vm615
      %vm1792 = vmand %vm1776, %vm616
      %vm1793 = vmand %vm1777, %vm617
      %vm1794 = vmand %vm1778, %vm618
      %vm1795 = vmand %vm1779, %vm619
      %vm1796 = vmand %vm1780, %vm620
      %vm1797 = vcmp.eq.s32.totalorder %v622, %v1491
      %vm1798 = vcmp.eq.s32.totalorder %v622, %v1506
      %vm1799 = vcmp.eq.s32.totalorder %v622, %v1521
      %vm1800 = vcmp.eq.s32.totalorder %v622, %v1536
      %vm1801 = vcmp.eq.s32.totalorder %v622, %v1551
      %vm1802 = vcmp.eq.s32.totalorder %v622, %v1566
      %vm1803 = vcmp.eq.s32.totalorder %v622, %v1581
      %vm1804 = vcmp.eq.s32.totalorder %v622, %v1596
      %vm1805 = vcmp.eq.s32.totalorder %v622, %v1611
      %vm1806 = vcmp.eq.s32.totalorder %v622, %v1626
      %vm1807 = vcmp.eq.s32.totalorder %v622, %v1641
      %vm1808 = vcmp.eq.s32.totalorder %v622, %v1656
      %vm1809 = vcmp.eq.s32.totalorder %v622, %v1671
      %vm1810 = vcmp.eq.s32.totalorder %v622, %v1686
      %vm1811 = vcmp.eq.s32.totalorder %v622, %v1701
      %vm1812 = vcmp.eq.s32.totalorder %v622, %v1716
      %v1813 = vsel %vm1733, 1, 0
      %v1814 = vsel %vm1734, 1, 0
      %v1815 = vsel %vm1735, 1, 0
      %v1816 = vsel %vm1736, 1, 0
      %v1817 = vsel %vm1737, 1, 0
      %v1818 = vsel %vm1738, 1, 0
      %v1819 = vsel %vm1739, 1, 0
      %v1820 = vsel %vm1740, 1, 0
      %v1821 = vsel %vm1741, 1, 0
      %v1822 = vsel %vm1742, 1, 0
      %v1823 = vsel %vm1743, 1, 0
      %v1824 = vsel %vm1744, 1, 0
      %v1825 = vsel %vm1745, 1, 0
      %v1826 = vsel %vm1746, 1, 0
      %v1827 = vsel %vm1747, 1, 0
      %v1828 = vsel %vm1748, 1, 0
      %vm1829 = vcmp.eq.s32.totalorder %v1813, 1
      %vm1830 = vcmp.eq.s32.totalorder %v1814, 1
      %vm1831 = vcmp.eq.s32.totalorder %v1815, 1
      %vm1832 = vcmp.eq.s32.totalorder %v1816, 1
      %vm1833 = vcmp.eq.s32.totalorder %v1817, 1
      %vm1834 = vcmp.eq.s32.totalorder %v1818, 1
      %vm1835 = vcmp.eq.s32.totalorder %v1819, 1
      %vm1836 = vcmp.eq.s32.totalorder %v1820, 1
      %vm1837 = vcmp.eq.s32.totalorder %v1821, 1
      %vm1838 = vcmp.eq.s32.totalorder %v1822, 1
      %vm1839 = vcmp.eq.s32.totalorder %v1823, 1
      %vm1840 = vcmp.eq.s32.totalorder %v1824, 1
      %vm1841 = vcmp.eq.s32.totalorder %v1825, 1
      %vm1842 = vcmp.eq.s32.totalorder %v1826, 1
      %vm1843 = vcmp.eq.s32.totalorder %v1827, 1
      %vm1844 = vcmp.eq.s32.totalorder %v1828, 1
      %vm1845 = vmand %vm1797, %vm1829
      %vm1846 = vmand %vm1798, %vm1830
      %vm1847 = vmand %vm1799, %vm1831
      %vm1848 = vmand %vm1800, %vm1832
      %vm1849 = vmand %vm1801, %vm1833
      %vm1850 = vmand %vm1802, %vm1834
      %vm1851 = vmand %vm1803, %vm1835
      %vm1852 = vmand %vm1804, %vm1836
      %vm1853 = vmand %vm1805, %vm1837
      %vm1854 = vmand %vm1806, %vm1838
      %vm1855 = vmand %vm1807, %vm1839
      %vm1856 = vmand %vm1808, %vm1840
      %vm1857 = vmand %vm1809, %vm1841
      %vm1858 = vmand %vm1810, %vm1842
      %vm1859 = vmand %vm1811, %vm1843
      %vm1860 = vmand %vm1812, %vm1844
      %v1861 = vsel %vm1845, 1.0, 0.0
      %v1862 = vsel %vm1846, 1.0, 0.0
      %v1863 = vsel %vm1847, 1.0, 0.0
      %v1864 = vsel %vm1848, 1.0, 0.0
      %v1865 = vsel %vm1849, 1.0, 0.0
      %v1866 = vsel %vm1850, 1.0, 0.0
      %v1867 = vsel %vm1851, 1.0, 0.0
      %v1868 = vsel %vm1852, 1.0, 0.0
      %v1869 = vsel %vm1853, 1.0, 0.0
      %v1870 = vsel %vm1854, 1.0, 0.0
      %v1871 = vsel %vm1855, 1.0, 0.0
      %v1872 = vsel %vm1856, 1.0, 0.0
      %v1873 = vsel %vm1857, 1.0, 0.0
      %v1874 = vsel %vm1858, 1.0, 0.0
      %v1875 = vsel %vm1859, 1.0, 0.0
      %v1876 = vsel %vm1860, 1.0, 0.0
      %1878 = vrot.lane.b32.xlu0 %v568, 123
      %v1879 = vpop.permute.xlu0 %1878
      %v1882 = vsel %vm1396, %v1861, 0
      %v1885 = vsel %vm1396, %v1862, 0
      %v1888 = vsel %vm1396, %v1863, 0
      %v1891 = vsel %vm1396, %v1864, 0
      %v1894 = vsel %vm1396, %v1865, 0
      %v1897 = vsel %vm1396, %v1866, 0
      %v1900 = vsel %vm1396, %v1867, 0
      %v1903 = vsel %vm1396, %v1868, 0
      %v1906 = vsel %vm1396, %v1869, 0
      %v1909 = vsel %vm1396, %v1870, 0
      %v1912 = vsel %vm1396, %v1871, 0
      %v1915 = vsel %vm1396, %v1872, 0
      %v1918 = vsel %vm1396, %v1873, 0
      %v1921 = vsel %vm1396, %v1874, 0
      %v1924 = vsel %vm1396, %v1875, 0
      %v1927 = vsel %vm1396, %v1876, 0
      %1929 = vmatprep.subr.mxu0 0.0
      %1930 = vmatpush1.msra.mxu0 %v1879
      %1931 = vmatprep.subr.mxu0 0.0
      %1932 = vmatpush1.msra.mxu0 0.0
      %1933 = vmatprep.subr.mxu0 0.0
      %1934 = vmatpush1.msra.mxu0 0.0
      %1935 = vmatprep.subr.mxu0 0.0
      %1936 = vmatpush1.msra.mxu0 0.0
      %1937 = vmatprep.subr.mxu0 0.0
      %1938 = vmatpush1.msra.mxu0 0.0
      %1939 = vmatprep.subr.mxu0 0.0
      %1940 = vmatpush1.msra.mxu0 0.0
      %1941 = vmatprep.subr.mxu0 0.0
      %1942 = vmatpush1.msra.mxu0 0.0
      %1943 = vmatprep.subr.mxu0 0.0
      %1944 = vmatpush1.msra.mxu0 0.0
      %1945 = vmatprep.subr.mxu0 0.0
      %1946 = vmatpush1.msra.mxu0 0.0
      %1947 = vmatprep.subr.mxu0 0.0
      %1948 = vmatpush1.msra.mxu0 0.0
      %1949 = vmatprep.subr.mxu0 0.0
      %1950 = vmatpush1.msra.mxu0 0.0
      %1951 = vmatprep.subr.mxu0 0.0
      %1952 = vmatpush1.msra.mxu0 0.0
      %1953 = vmatprep.subr.mxu0 0.0
      %1954 = vmatpush1.msra.mxu0 0.0
      %1955 = vmatprep.subr.mxu0 0.0
      %1956 = vmatpush1.msra.mxu0 0.0
      %1957 = vmatprep.subr.mxu0 0.0
      %1958 = vmatpush1.msra.mxu0 0.0
      %1959 = vmatprep.subr.mxu0 0.0
      %1960 = vmatpush1.msra.mxu0 0.0
      %1961 = vmatprep.subr.mxu0 0.0
      %1962 = vmatpush1.msra.mxu0 0.0
      %1963 = vmatprep.subr.mxu0 0.0
      %1964 = vmatpush1.msra.mxu0 0.0
      %1965 = vmatprep.subr.mxu0 0.0
      %1966 = vmatpush1.msra.mxu0 0.0
      %1967 = vmatprep.subr.mxu0 0.0
      %1968 = vmatpush1.msra.mxu0 0.0
      %1969 = vmatprep.subr.mxu0 0.0
      %1970 = vmatpush1.msra.mxu0 0.0
      %1971 = vmatprep.subr.mxu0 0.0
      %1972 = vmatpush1.msra.mxu0 0.0
      %1973 = vmatprep.subr.mxu0 0.0
      %1974 = vmatpush1.msra.mxu0 0.0
      %1975 = vmatprep.subr.mxu0 0.0
      %1976 = vmatpush1.msra.mxu0 0.0
      %1977 = vmatprep.subr.mxu0 0.0
      %1978 = vmatpush1.msra.mxu0 0.0
      %1979 = vmatprep.subr.mxu0 0.0
      %1980 = vmatpush1.msra.mxu0 0.0
      %1981 = vmatprep.subr.mxu0 0.0
      %1982 = vmatpush1.msra.mxu0 0.0
      %1983 = vmatprep.subr.mxu0 0.0
      %1984 = vmatpush1.msra.mxu0 0.0
      %1985 = vmatprep.subr.mxu0 0.0
      %1986 = vmatpush1.msra.mxu0 0.0
      %1987 = vmatprep.subr.mxu0 0.0
      %1988 = vmatpush1.msra.mxu0 0.0
      %1989 = vmatprep.subr.mxu0 0.0
      %1990 = vmatpush1.msra.mxu0 0.0
      %1991 = vmatprep.subr.mxu0 0.0
      %1992 = vmatpush1.msra.mxu0 0.0
      %1993 = vmatprep.mubr.f32.mxu0 0.0
      %1994 = vmatmul.mubr.f32.gmra.mrb[0].mxu0 %v1882
      %v1995 = vpop.f32.mrb[0].mxu0
      %v1996 = vadd.f32 0.0, %v1995
      %v1997 = vpop.f32.mrb[0].mxu0
      %1998 = vmatprep.mubr.f32.mxu0 0.0
      %1999 = vmatmul.mubr.f32.gmra.mrb[0].mxu0 %v1885
      %v2000 = vpop.f32.mrb[0].mxu0
      %v2001 = vadd.f32 0.0, %v2000
      %v2002 = vpop.f32.mrb[0].mxu0
      %2003 = vmatprep.mubr.f32.mxu0 0.0
      %2004 = vmatmul.mubr.f32.gmra.mrb[0].mxu0 %v1888
      %v2005 = vpop.f32.mrb[0].mxu0
      %v2006 = vadd.f32 0.0, %v2005
      %v2007 = vpop.f32.mrb[0].mxu0
      %2008 = vmatprep.mubr.f32.mxu0 0.0
      %2009 = vmatmul.mubr.f32.gmra.mrb[0].mxu0 %v1891
      %v2010 = vpop.f32.mrb[0].mxu0
      %v2011 = vadd.f32 0.0, %v2010
      %v2012 = vpop.f32.mrb[0].mxu0
      %2013 = vmatprep.mubr.f32.mxu0 0.0
      %2014 = vmatmul.mubr.f32.gmra.mrb[0].mxu0 %v1894
      %v2015 = vpop.f32.mrb[0].mxu0
      %v2016 = vadd.f32 0.0, %v2015
      %v2017 = vpop.f32.mrb[0].mxu0
      %2018 = vmatprep.mubr.f32.mxu0 0.0
      %2019 = vmatmul.mubr.f32.gmra.mrb[0].mxu0 %v1897
      %v2020 = vpop.f32.mrb[0].mxu0
      %v2021 = vadd.f32 0.0, %v2020
      %v2022 = vpop.f32.mrb[0].mxu0
      %2023 = vmatprep.mubr.f32.mxu0 0.0
      %2024 = vmatmul.mubr.f32.gmra.mrb[0].mxu0 %v1900
      %v2025 = vpop.f32.mrb[0].mxu0
      %v2026 = vadd.f32 0.0, %v2025
      %v2027 = vpop.f32.mrb[0].mxu0
      %2028 = vmatprep.mubr.f32.mxu0 0.0
      %2029 = vmatmul.mubr.f32.gmra.mrb[0].mxu0 %v1903
      %v2030 = vpop.f32.mrb[0].mxu0
      %v2031 = vadd.f32 0.0, %v2030
      %v2032 = vpop.f32.mrb[0].mxu0
      %2033 = vmatprep.mubr.f32.mxu0 0.0
      %2034 = vmatmul.mubr.f32.gmra.mrb[0].mxu0 %v1906
      %v2035 = vpop.f32.mrb[0].mxu0
      %v2036 = vadd.f32 0.0, %v2035
      %v2037 = vpop.f32.mrb[0].mxu0
      %2038 = vmatprep.mubr.f32.mxu0 0.0
      %2039 = vmatmul.mubr.f32.gmra.mrb[0].mxu0 %v1909
      %v2040 = vpop.f32.mrb[0].mxu0
      %v2041 = vadd.f32 0.0, %v2040
      %v2042 = vpop.f32.mrb[0].mxu0
      %2043 = vmatprep.mubr.f32.mxu0 0.0
      %2044 = vmatmul.mubr.f32.gmra.mrb[0].mxu0 %v1912
      %v2045 = vpop.f32.mrb[0].mxu0
      %v2046 = vadd.f32 0.0, %v2045
      %v2047 = vpop.f32.mrb[0].mxu0
      %2048 = vmatprep.mubr.f32.mxu0 0.0
      %2049 = vmatmul.mubr.f32.gmra.mrb[0].mxu0 %v1915
      %v2050 = vpop.f32.mrb[0].mxu0
      %v2051 = vadd.f32 0.0, %v2050
      %v2052 = vpop.f32.mrb[0].mxu0
      %2053 = vmatprep.mubr.f32.mxu0 0.0
      %2054 = vmatmul.mubr.f32.gmra.mrb[0].mxu0 %v1918
      %v2055 = vpop.f32.mrb[0].mxu0
      %v2056 = vadd.f32 0.0, %v2055
      %v2057 = vpop.f32.mrb[0].mxu0
      %2058 = vmatprep.mubr.f32.mxu0 0.0
      %2059 = vmatmul.mubr.f32.gmra.mrb[0].mxu0 %v1921
      %v2060 = vpop.f32.mrb[0].mxu0
      %v2061 = vadd.f32 0.0, %v2060
      %v2062 = vpop.f32.mrb[0].mxu0
      %2063 = vmatprep.mubr.f32.mxu0 0.0
      %2064 = vmatmul.mubr.f32.gmra.mrb[0].mxu0 %v1924
      %v2065 = vpop.f32.mrb[0].mxu0
      %v2066 = vadd.f32 0.0, %v2065
      %v2067 = vpop.f32.mrb[0].mxu0
      %2068 = vmatprep.mubr.f32.mxu0 0.0
      %2069 = vmatmul.mubr.f32.gmra.mrb[0].mxu0 %v1927
      %v2070 = vpop.f32.mrb[0].mxu0
      %v2071 = vadd.f32 0.0, %v2070
      %v2072 = vpop.f32.mrb[0].mxu0
      %2073 = vdwg.mxu0
      %v2074 = vmax.f32 %v535, 0.0001
      %v2075 = vmax.f32 %v536, 0.0001
      %v2076 = vmax.f32 %v537, 0.0001
      %v2077 = vmax.f32 %v538, 0.0001
      %v2078 = vmax.f32 %v539, 0.0001
      %v2079 = vmax.f32 %v540, 0.0001
      %v2080 = vmax.f32 %v541, 0.0001
      %v2081 = vmax.f32 %v542, 0.0001
      %v2082 = vmax.f32 %v543, 0.0001
      %v2083 = vmax.f32 %v544, 0.0001
      %v2084 = vmax.f32 %v545, 0.0001
      %v2085 = vmax.f32 %v546, 0.0001
      %v2086 = vmax.f32 %v547, 0.0001
      %v2087 = vmax.f32 %v548, 0.0001
      %v2088 = vmax.f32 %v549, 0.0001
      %v2089 = vmax.f32 %v550, 0.0001
      %v2090 = vmin.f32 %v2074, 0.9999
      %v2091 = vmin.f32 %v2075, 0.9999
      %v2092 = vmin.f32 %v2076, 0.9999
      %v2093 = vmin.f32 %v2077, 0.9999
      %v2094 = vmin.f32 %v2078, 0.9999
      %v2095 = vmin.f32 %v2079, 0.9999
      %v2096 = vmin.f32 %v2080, 0.9999
      %v2097 = vmin.f32 %v2081, 0.9999
      %v2098 = vmin.f32 %v2082, 0.9999
      %v2099 = vmin.f32 %v2083, 0.9999
      %v2100 = vmin.f32 %v2084, 0.9999
      %v2101 = vmin.f32 %v2085, 0.9999
      %v2102 = vmin.f32 %v2086, 0.9999
      %v2103 = vmin.f32 %v2087, 0.9999
      %v2104 = vmin.f32 %v2088, 0.9999
      %v2105 = vmin.f32 %v2089, 0.9999
      %vm2106 = vcmp.gt.f32.partialorder %v1996, 0.5
      %vm2107 = vcmp.gt.f32.partialorder %v2001, 0.5
      %vm2108 = vcmp.gt.f32.partialorder %v2006, 0.5
      %vm2109 = vcmp.gt.f32.partialorder %v2011, 0.5
      %vm2110 = vcmp.gt.f32.partialorder %v2016, 0.5
      %vm2111 = vcmp.gt.f32.partialorder %v2021, 0.5
      %vm2112 = vcmp.gt.f32.partialorder %v2026, 0.5
      %vm2113 = vcmp.gt.f32.partialorder %v2031, 0.5
      %vm2114 = vcmp.gt.f32.partialorder %v2036, 0.5
      %vm2115 = vcmp.gt.f32.partialorder %v2041, 0.5
      %vm2116 = vcmp.gt.f32.partialorder %v2046, 0.5
      %vm2117 = vcmp.gt.f32.partialorder %v2051, 0.5
      %vm2118 = vcmp.gt.f32.partialorder %v2056, 0.5
      %vm2119 = vcmp.gt.f32.partialorder %v2061, 0.5
      %vm2120 = vcmp.gt.f32.partialorder %v2066, 0.5
      %vm2121 = vcmp.gt.f32.partialorder %v2071, 0.5
      %v2122 = vsub.f32 1.0, %v2090
      %v2123 = vsub.f32 1.0, %v2091
      %v2124 = vsub.f32 1.0, %v2092
      %v2125 = vsub.f32 1.0, %v2093
      %v2126 = vsub.f32 1.0, %v2094
      %v2127 = vsub.f32 1.0, %v2095
      %v2128 = vsub.f32 1.0, %v2096
      %v2129 = vsub.f32 1.0, %v2097
      %v2130 = vsub.f32 1.0, %v2098
      %v2131 = vsub.f32 1.0, %v2099
      %v2132 = vsub.f32 1.0, %v2100
      %v2133 = vsub.f32 1.0, %v2101
      %v2134 = vsub.f32 1.0, %v2102
      %v2135 = vsub.f32 1.0, %v2103
      %v2136 = vsub.f32 1.0, %v2104
      %v2137 = vsub.f32 1.0, %v2105
      %v2138 = vsel %vm2106, %v2090, %v2122
      %v2139 = vsel %vm2107, %v2091, %v2123
      %v2140 = vsel %vm2108, %v2092, %v2124
      %v2141 = vsel %vm2109, %v2093, %v2125
      %v2142 = vsel %vm2110, %v2094, %v2126
      %v2143 = vsel %vm2111, %v2095, %v2127
      %v2144 = vsel %vm2112, %v2096, %v2128
      %v2145 = vsel %vm2113, %v2097, %v2129
      %v2146 = vsel %vm2114, %v2098, %v2130
      %v2147 = vsel %vm2115, %v2099, %v2131
      %v2148 = vsel %vm2116, %v2100, %v2132
      %v2149 = vsel %vm2117, %v2101, %v2133
      %v2150 = vsel %vm2118, %v2102, %v2134
      %v2151 = vsel %vm2119, %v2103, %v2135
      %v2152 = vsel %vm2120, %v2104, %v2136
      %v2153 = vsel %vm2121, %v2105, %v2137
      %v2154 = vsub.f32 1.0, %v2138
      %v2155 = vsub.f32 1.0, %v2139
      %v2156 = vsub.f32 1.0, %v2140
      %v2157 = vsub.f32 1.0, %v2141
      %v2158 = vsub.f32 1.0, %v2142
      %v2159 = vsub.f32 1.0, %v2143
      %v2160 = vsub.f32 1.0, %v2144
      %v2161 = vsub.f32 1.0, %v2145
      %v2162 = vsub.f32 1.0, %v2146
      %v2163 = vsub.f32 1.0, %v2147
      %v2164 = vsub.f32 1.0, %v2148
      %v2165 = vsub.f32 1.0, %v2149
      %v2166 = vsub.f32 1.0, %v2150
      %v2167 = vsub.f32 1.0, %v2151
      %v2168 = vsub.f32 1.0, %v2152
      %v2169 = vsub.f32 1.0, %v2153
      %v2170 = vmul.f32 %v1996, -0.5
      %v2171 = vmul.f32 %v2001, -0.5
      %v2172 = vmul.f32 %v2006, -0.5
      %v2173 = vmul.f32 %v2011, -0.5
      %v2174 = vmul.f32 %v2016, -0.5
      %v2175 = vmul.f32 %v2021, -0.5
      %v2176 = vmul.f32 %v2026, -0.5
      %v2177 = vmul.f32 %v2031, -0.5
      %v2178 = vmul.f32 %v2036, -0.5
      %v2179 = vmul.f32 %v2041, -0.5
      %v2180 = vmul.f32 %v2046, -0.5
      %v2181 = vmul.f32 %v2051, -0.5
      %v2182 = vmul.f32 %v2056, -0.5
      %v2183 = vmul.f32 %v2061, -0.5
      %v2184 = vmul.f32 %v2066, -0.5
      %v2185 = vmul.f32 %v2071, -0.5
      %v2186 = vadd.f32 %v2170, 0.75
      %v2187 = vadd.f32 %v2171, 0.75
      %v2188 = vadd.f32 %v2172, 0.75
      %v2189 = vadd.f32 %v2173, 0.75
      %v2190 = vadd.f32 %v2174, 0.75
      %v2191 = vadd.f32 %v2175, 0.75
      %v2192 = vadd.f32 %v2176, 0.75
      %v2193 = vadd.f32 %v2177, 0.75
      %v2194 = vadd.f32 %v2178, 0.75
      %v2195 = vadd.f32 %v2179, 0.75
      %v2196 = vadd.f32 %v2180, 0.75
      %v2197 = vadd.f32 %v2181, 0.75
      %v2198 = vadd.f32 %v2182, 0.75
      %v2199 = vadd.f32 %v2183, 0.75
      %v2200 = vadd.f32 %v2184, 0.75
      %v2201 = vadd.f32 %v2185, 0.75
      %v2202 = vlog2.pop %v2138
      %v2203 = vmul.f32 %v2202, 0.6931472
      %v2204 = vlog2.pop %v2139
      %v2205 = vmul.f32 %v2204, 0.6931472
      %v2206 = vlog2.pop %v2140
      %v2207 = vmul.f32 %v2206, 0.6931472
      %v2208 = vlog2.pop %v2141
      %v2209 = vmul.f32 %v2208, 0.6931472
      %v2210 = vlog2.pop %v2142
      %v2211 = vmul.f32 %v2210, 0.6931472
      %v2212 = vlog2.pop %v2143
      %v2213 = vmul.f32 %v2212, 0.6931472
      %v2214 = vlog2.pop %v2144
      %v2215 = vmul.f32 %v2214, 0.6931472
      %v2216 = vlog2.pop %v2145
      %v2217 = vmul.f32 %v2216, 0.6931472
      %v2218 = vlog2.pop %v2146
      %v2219 = vmul.f32 %v2218, 0.6931472
      %v2220 = vlog2.pop %v2147
      %v2221 = vmul.f32 %v2220, 0.6931472
      %v2222 = vlog2.pop %v2148
      %v2223 = vmul.f32 %v2222, 0.6931472
      %v2224 = vlog2.pop %v2149
      %v2225 = vmul.f32 %v2224, 0.6931472
      %v2226 = vlog2.pop %v2150
      %v2227 = vmul.f32 %v2226, 0.6931472
      %v2228 = vlog2.pop %v2151
      %v2229 = vmul.f32 %v2228, 0.6931472
      %v2230 = vlog2.pop %v2152
      %v2231 = vmul.f32 %v2230, 0.6931472
      %v2232 = vlog2.pop %v2153
      %v2233 = vmul.f32 %v2232, 0.6931472
      %v2234 = vsub.f32 0.0, %v2203
      %v2235 = vsub.f32 0.0, %v2205
      %v2236 = vsub.f32 0.0, %v2207
      %v2237 = vsub.f32 0.0, %v2209
      %v2238 = vsub.f32 0.0, %v2211
      %v2239 = vsub.f32 0.0, %v2213
      %v2240 = vsub.f32 0.0, %v2215
      %v2241 = vsub.f32 0.0, %v2217
      %v2242 = vsub.f32 0.0, %v2219
      %v2243 = vsub.f32 0.0, %v2221
      %v2244 = vsub.f32 0.0, %v2223
      %v2245 = vsub.f32 0.0, %v2225
      %v2246 = vsub.f32 0.0, %v2227
      %v2247 = vsub.f32 0.0, %v2229
      %v2248 = vsub.f32 0.0, %v2231
      %v2249 = vsub.f32 0.0, %v2233
      %v2250 = vmul.f32 %v2154, %v2154
      %v2251 = vmul.f32 %v2155, %v2155
      %v2252 = vmul.f32 %v2156, %v2156
      %v2253 = vmul.f32 %v2157, %v2157
      %v2254 = vmul.f32 %v2158, %v2158
      %v2255 = vmul.f32 %v2159, %v2159
      %v2256 = vmul.f32 %v2160, %v2160
      %v2257 = vmul.f32 %v2161, %v2161
      %v2258 = vmul.f32 %v2162, %v2162
      %v2259 = vmul.f32 %v2163, %v2163
      %v2260 = vmul.f32 %v2164, %v2164
      %v2261 = vmul.f32 %v2165, %v2165
      %v2262 = vmul.f32 %v2166, %v2166
      %v2263 = vmul.f32 %v2167, %v2167
      %v2264 = vmul.f32 %v2168, %v2168
      %v2265 = vmul.f32 %v2169, %v2169
      %v2266 = vmul.f32 %v2186, %v2250
      %v2267 = vmul.f32 %v2187, %v2251
      %v2268 = vmul.f32 %v2188, %v2252
      %v2269 = vmul.f32 %v2189, %v2253
      %v2270 = vmul.f32 %v2190, %v2254
      %v2271 = vmul.f32 %v2191, %v2255
      %v2272 = vmul.f32 %v2192, %v2256
      %v2273 = vmul.f32 %v2193, %v2257
      %v2274 = vmul.f32 %v2194, %v2258
      %v2275 = vmul.f32 %v2195, %v2259
      %v2276 = vmul.f32 %v2196, %v2260
      %v2277 = vmul.f32 %v2197, %v2261
      %v2278 = vmul.f32 %v2198, %v2262
      %v2279 = vmul.f32 %v2199, %v2263
      %v2280 = vmul.f32 %v2200, %v2264
      %v2281 = vmul.f32 %v2201, %v2265
      %v2282 = vmul.f32 %v2266, %v2234
      %v2283 = vmul.f32 %v2267, %v2235
      %v2284 = vmul.f32 %v2268, %v2236
      %v2285 = vmul.f32 %v2269, %v2237
      %v2286 = vmul.f32 %v2270, %v2238
      %v2287 = vmul.f32 %v2271, %v2239
      %v2288 = vmul.f32 %v2272, %v2240
      %v2289 = vmul.f32 %v2273, %v2241
      %v2290 = vmul.f32 %v2274, %v2242
      %v2291 = vmul.f32 %v2275, %v2243
      %v2292 = vmul.f32 %v2276, %v2244
      %v2293 = vmul.f32 %v2277, %v2245
      %v2294 = vmul.f32 %v2278, %v2246
      %v2295 = vmul.f32 %v2279, %v2247
      %v2296 = vmul.f32 %v2280, %v2248
      %v2297 = vmul.f32 %v2281, %v2249
      %v2298 = vsel %vm1396, %v2282, 0.0
      %2299 = vadd.xlane.f32.xlu0 %v2298
      %v2300 = vpop.xlane.xlu0 %2299
      %v2301 = vsel %vm1396, %v2283, 0.0
      %2302 = vadd.xlane.f32.xlu0 %v2301
      %v2303 = vpop.xlane.xlu0 %2302
      %v2304 = vsel %vm1396, %v2284, 0.0
      %2305 = vadd.xlane.f32.xlu0 %v2304
      %v2306 = vpop.xlane.xlu0 %2305
      %v2307 = vsel %vm1396, %v2285, 0.0
      %2308 = vadd.xlane.f32.xlu0 %v2307
      %v2309 = vpop.xlane.xlu0 %2308
      %v2310 = vsel %vm1396, %v2286, 0.0
      %2311 = vadd.xlane.f32.xlu0 %v2310
      %v2312 = vpop.xlane.xlu0 %2311
      %v2313 = vsel %vm1396, %v2287, 0.0
      %2314 = vadd.xlane.f32.xlu0 %v2313
      %v2315 = vpop.xlane.xlu0 %2314
      %v2316 = vsel %vm1396, %v2288, 0.0
      %2317 = vadd.xlane.f32.xlu0 %v2316
      %v2318 = vpop.xlane.xlu0 %2317
      %v2319 = vsel %vm1396, %v2289, 0.0
      %2320 = vadd.xlane.f32.xlu0 %v2319
      %v2321 = vpop.xlane.xlu0 %2320
      %v2322 = vsel %vm1396, %v2290, 0.0
      %2323 = vadd.xlane.f32.xlu0 %v2322
      %v2324 = vpop.xlane.xlu0 %2323
      %v2325 = vsel %vm1396, %v2291, 0.0
      %2326 = vadd.xlane.f32.xlu0 %v2325
      %v2327 = vpop.xlane.xlu0 %2326
      %v2328 = vsel %vm1396, %v2292, 0.0
      %2329 = vadd.xlane.f32.xlu0 %v2328
      %v2330 = vpop.xlane.xlu0 %2329
      %v2331 = vsel %vm1396, %v2293, 0.0
      %2332 = vadd.xlane.f32.xlu0 %v2331
      %v2333 = vpop.xlane.xlu0 %2332
      %v2334 = vsel %vm1396, %v2294, 0.0
      %2335 = vadd.xlane.f32.xlu0 %v2334
      %v2336 = vpop.xlane.xlu0 %2335
      %v2337 = vsel %vm1396, %v2295, 0.0
      %2338 = vadd.xlane.f32.xlu0 %v2337
      %v2339 = vpop.xlane.xlu0 %2338
      %v2340 = vsel %vm1396, %v2296, 0.0
      %2341 = vadd.xlane.f32.xlu0 %v2340
      %v2342 = vpop.xlane.xlu0 %2341
      %v2343 = vsel %vm1396, %v2297, 0.0
      %2344 = vadd.xlane.f32.xlu0 %v2343
      %v2345 = vpop.xlane.xlu0 %2344
      %v2346 = vsel %vm1781, %v2300, 0.0
      %v2347 = vsel %vm1782, %v2303, 0.0
      %v2348 = vsel %vm1783, %v2306, 0.0
      %v2349 = vsel %vm1784, %v2309, 0.0
      %v2350 = vsel %vm1785, %v2312, 0.0
      %v2351 = vsel %vm1786, %v2315, 0.0
      %v2352 = vsel %vm1787, %v2318, 0.0
      %v2353 = vsel %vm1788, %v2321, 0.0
      %v2354 = vsel %vm1789, %v2324, 0.0
      %v2355 = vsel %vm1790, %v2327, 0.0
      %v2356 = vsel %vm1791, %v2330, 0.0
      %v2357 = vsel %vm1792, %v2333, 0.0
      %v2358 = vsel %vm1793, %v2336, 0.0
      %v2359 = vsel %vm1794, %v2339, 0.0
      %v2360 = vsel %vm1795, %v2342, 0.0
      %v2361 = vsel %vm1796, %v2345, 0.0
      %vm2362 = vcmask 7168
      %v2363 = vsel %vm2362, %v2346, 0.0
      %v2364 = vsel %vm2362, %v2347, 0.0
      %v2365 = vadd.f32 %v2363, %v2364
      %v2366 = vsel %vm2362, %v2348, 0.0
      %v2367 = vadd.f32 %v2365, %v2366
      %v2368 = vsel %vm2362, %v2349, 0.0
      %v2369 = vadd.f32 %v2367, %v2368
      %v2370 = vsel %vm2362, %v2350, 0.0
      %v2371 = vadd.f32 %v2369, %v2370
      %v2372 = vsel %vm2362, %v2351, 0.0
      %v2373 = vadd.f32 %v2371, %v2372
      %v2374 = vsel %vm2362, %v2352, 0.0
      %v2375 = vadd.f32 %v2373, %v2374
      %v2376 = vsel %vm2362, %v2353, 0.0
      %v2377 = vadd.f32 %v2375, %v2376
      %v2378 = vsel %vm2362, %v2354, 0.0
      %v2379 = vadd.f32 %v2377, %v2378
      %v2380 = vsel %vm2362, %v2355, 0.0
      %v2381 = vadd.f32 %v2379, %v2380
      %v2382 = vsel %vm2362, %v2356, 0.0
      %v2383 = vadd.f32 %v2381, %v2382
      %v2384 = vsel %vm2362, %v2357, 0.0
      %v2385 = vadd.f32 %v2383, %v2384
      %v2386 = vsel %vm2362, %v2358, 0.0
      %v2387 = vadd.f32 %v2385, %v2386
      %v2388 = vsel %vm2362, %v2359, 0.0
      %v2389 = vadd.f32 %v2387, %v2388
      %v2390 = vsel %vm2362, %v2360, 0.0
      %v2391 = vadd.f32 %v2389, %v2390
      %v2392 = vsel %vm2362, %v2361, 0.0
      %v2393 = vadd.f32 %v2391, %v2392
      %2394 = vadd.xlane.f32.xlu0 %v2393
      %v2395 = vpop.xlane.xlu0 %2394
      %v2396 = vrot.slane %v2395, 4
      %v2397 = vadd.f32 %v2395, %v2396
      %v2398 = vrot.slane %v2397, 2
      %v2399 = vadd.f32 %v2397, %v2398
      %v2400 = vrot.slane %v2399, 1
      %v2401 = vadd.f32 %v2399, %v2400
      %s2402 = vtos %v2401
      %v2403 = vmul.f32 %v551, %v551
      %v2404 = vmul.f32 %v552, %v552
      %v2405 = vmul.f32 %v553, %v553
      %v2406 = vmul.f32 %v554, %v554
      %v2407 = vmul.f32 %v555, %v555
      %v2408 = vmul.f32 %v556, %v556
      %v2409 = vmul.f32 %v557, %v557
      %v2410 = vmul.f32 %v558, %v558
      %v2411 = vmul.f32 %v559, %v559
      %v2412 = vmul.f32 %v560, %v560
      %v2413 = vmul.f32 %v561, %v561
      %v2414 = vmul.f32 %v562, %v562
      %v2415 = vmul.f32 %v563, %v563
      %v2416 = vmul.f32 %v564, %v564
      %v2417 = vmul.f32 %v565, %v565
      %v2418 = vmul.f32 %v566, %v566
      %vm2419 = vcmask 261120
      %v2420 = vsel %vm2419, %v2403, 0.0
      %2421 = vadd.xlane.f32.xlu0 %v2420
      %v2422 = vpop.xlane.xlu0 %2421
      %v2423 = vsel %vm2419, %v2404, 0.0
      %2424 = vadd.xlane.f32.xlu0 %v2423
      %v2425 = vpop.xlane.xlu0 %2424
      %v2426 = vsel %vm2419, %v2405, 0.0
      %2427 = vadd.xlane.f32.xlu0 %v2426
      %v2428 = vpop.xlane.xlu0 %2427
      %v2429 = vsel %vm2419, %v2406, 0.0
      %2430 = vadd.xlane.f32.xlu0 %v2429
      %v2431 = vpop.xlane.xlu0 %2430
      %v2432 = vsel %vm2419, %v2407, 0.0
      %2433 = vadd.xlane.f32.xlu0 %v2432
      %v2434 = vpop.xlane.xlu0 %2433
      %v2435 = vsel %vm2419, %v2408, 0.0
      %2436 = vadd.xlane.f32.xlu0 %v2435
      %v2437 = vpop.xlane.xlu0 %2436
      %v2438 = vsel %vm2419, %v2409, 0.0
      %2439 = vadd.xlane.f32.xlu0 %v2438
      %v2440 = vpop.xlane.xlu0 %2439
      %v2441 = vsel %vm2419, %v2410, 0.0
      %2442 = vadd.xlane.f32.xlu0 %v2441
      %v2443 = vpop.xlane.xlu0 %2442
      %v2444 = vsel %vm2419, %v2411, 0.0
      %2445 = vadd.xlane.f32.xlu0 %v2444
      %v2446 = vpop.xlane.xlu0 %2445
      %v2447 = vsel %vm2419, %v2412, 0.0
      %2448 = vadd.xlane.f32.xlu0 %v2447
      %v2449 = vpop.xlane.xlu0 %2448
      %v2450 = vsel %vm2419, %v2413, 0.0
      %2451 = vadd.xlane.f32.xlu0 %v2450
      %v2452 = vpop.xlane.xlu0 %2451
      %v2453 = vsel %vm2419, %v2414, 0.0
      %2454 = vadd.xlane.f32.xlu0 %v2453
      %v2455 = vpop.xlane.xlu0 %2454
      %v2456 = vsel %vm2419, %v2415, 0.0
      %2457 = vadd.xlane.f32.xlu0 %v2456
      %v2458 = vpop.xlane.xlu0 %2457
      %v2459 = vsel %vm2419, %v2416, 0.0
      %2460 = vadd.xlane.f32.xlu0 %v2459
      %v2461 = vpop.xlane.xlu0 %2460
      %v2462 = vsel %vm2419, %v2417, 0.0
      %2463 = vadd.xlane.f32.xlu0 %v2462
      %v2464 = vpop.xlane.xlu0 %2463
      %v2465 = vsel %vm2419, %v2418, 0.0
      %2466 = vadd.xlane.f32.xlu0 %v2465
      %v2467 = vpop.xlane.xlu0 %2466
      %v2468 = vmax.f32 %v2422, 1e-12
      %v2469 = vmax.f32 %v2425, 1e-12
      %v2470 = vmax.f32 %v2428, 1e-12
      %v2471 = vmax.f32 %v2431, 1e-12
      %v2472 = vmax.f32 %v2434, 1e-12
      %v2473 = vmax.f32 %v2437, 1e-12
      %v2474 = vmax.f32 %v2440, 1e-12
      %v2475 = vmax.f32 %v2443, 1e-12
      %v2476 = vmax.f32 %v2446, 1e-12
      %v2477 = vmax.f32 %v2449, 1e-12
      %v2478 = vmax.f32 %v2452, 1e-12
      %v2479 = vmax.f32 %v2455, 1e-12
      %v2480 = vmax.f32 %v2458, 1e-12
      %v2481 = vmax.f32 %v2461, 1e-12
      %v2482 = vmax.f32 %v2464, 1e-12
      %v2483 = vmax.f32 %v2467, 1e-12
      %v2484 = vrsqrt.pop %v2468
      %v2485 = vrsqrt.pop %v2469
      %v2486 = vrsqrt.pop %v2470
      %v2487 = vrsqrt.pop %v2471
      %v2488 = vrsqrt.pop %v2472
      %v2489 = vrsqrt.pop %v2473
      %v2490 = vrsqrt.pop %v2474
      %v2491 = vrsqrt.pop %v2475
      %v2492 = vrsqrt.pop %v2476
      %v2493 = vrsqrt.pop %v2477
      %v2494 = vrsqrt.pop %v2478
      %v2495 = vrsqrt.pop %v2479
      %v2496 = vrsqrt.pop %v2480
      %v2497 = vrsqrt.pop %v2481
      %v2498 = vrsqrt.pop %v2482
      %v2499 = vrsqrt.pop %v2483
      %2516 = vrot.lane.b32.xlu0 %v1996, 120
      %v2517 = vpop.permute.xlu0 %2516
      %2518 = vrot.lane.b32.xlu0 %v2001, 120
      %v2519 = vpop.permute.xlu0 %2518
      %2520 = vrot.lane.b32.xlu0 %v2006, 120
      %v2521 = vpop.permute.xlu0 %2520
      %2522 = vrot.lane.b32.xlu0 %v2011, 120
      %v2523 = vpop.permute.xlu0 %2522
      %2524 = vrot.lane.b32.xlu0 %v2016, 120
      %v2525 = vpop.permute.xlu0 %2524
      %2526 = vrot.lane.b32.xlu0 %v2021, 120
      %v2527 = vpop.permute.xlu0 %2526
      %2528 = vrot.lane.b32.xlu0 %v2026, 120
      %v2529 = vpop.permute.xlu0 %2528
      %2530 = vrot.lane.b32.xlu0 %v2031, 120
      %v2531 = vpop.permute.xlu0 %2530
      %2532 = vrot.lane.b32.xlu0 %v2036, 120
      %v2533 = vpop.permute.xlu0 %2532
      %2534 = vrot.lane.b32.xlu0 %v2041, 120
      %v2535 = vpop.permute.xlu0 %2534
      %2536 = vrot.lane.b32.xlu0 %v2046, 120
      %v2537 = vpop.permute.xlu0 %2536
      %2538 = vrot.lane.b32.xlu0 %v2051, 120
      %v2539 = vpop.permute.xlu0 %2538
      %2540 = vrot.lane.b32.xlu0 %v2056, 120
      %v2541 = vpop.permute.xlu0 %2540
      %2542 = vrot.lane.b32.xlu0 %v2061, 120
      %v2543 = vpop.permute.xlu0 %2542
      %2544 = vrot.lane.b32.xlu0 %v2066, 120
      %v2545 = vpop.permute.xlu0 %2544
      %2546 = vrot.lane.b32.xlu0 %v2071, 120
      %v2547 = vpop.permute.xlu0 %2546
      %v2564 = vmul.f32 %v551, %v2517
      %v2565 = vmul.f32 %v552, %v2519
      %v2566 = vmul.f32 %v553, %v2521
      %v2567 = vmul.f32 %v554, %v2523
      %v2568 = vmul.f32 %v555, %v2525
      %v2569 = vmul.f32 %v556, %v2527
      %v2570 = vmul.f32 %v557, %v2529
      %v2571 = vmul.f32 %v558, %v2531
      %v2572 = vmul.f32 %v559, %v2533
      %v2573 = vmul.f32 %v560, %v2535
      %v2574 = vmul.f32 %v561, %v2537
      %v2575 = vmul.f32 %v562, %v2539
      %v2576 = vmul.f32 %v563, %v2541
      %v2577 = vmul.f32 %v564, %v2543
      %v2578 = vmul.f32 %v565, %v2545
      %v2579 = vmul.f32 %v566, %v2547
      %v2580 = vsel %vm2419, %v2564, 0.0
      %2581 = vadd.xlane.f32.xlu0 %v2580
      %v2582 = vpop.xlane.xlu0 %2581
      %v2583 = vsel %vm2419, %v2565, 0.0
      %2584 = vadd.xlane.f32.xlu0 %v2583
      %v2585 = vpop.xlane.xlu0 %2584
      %v2586 = vsel %vm2419, %v2566, 0.0
      %2587 = vadd.xlane.f32.xlu0 %v2586
      %v2588 = vpop.xlane.xlu0 %2587
      %v2589 = vsel %vm2419, %v2567, 0.0
      %2590 = vadd.xlane.f32.xlu0 %v2589
      %v2591 = vpop.xlane.xlu0 %2590
      %v2592 = vsel %vm2419, %v2568, 0.0
      %2593 = vadd.xlane.f32.xlu0 %v2592
      %v2594 = vpop.xlane.xlu0 %2593
      %v2595 = vsel %vm2419, %v2569, 0.0
      %2596 = vadd.xlane.f32.xlu0 %v2595
      %v2597 = vpop.xlane.xlu0 %2596
      %v2598 = vsel %vm2419, %v2570, 0.0
      %2599 = vadd.xlane.f32.xlu0 %v2598
      %v2600 = vpop.xlane.xlu0 %2599
      %v2601 = vsel %vm2419, %v2571, 0.0
      %2602 = vadd.xlane.f32.xlu0 %v2601
      %v2603 = vpop.xlane.xlu0 %2602
      %v2604 = vsel %vm2419, %v2572, 0.0
      %2605 = vadd.xlane.f32.xlu0 %v2604
      %v2606 = vpop.xlane.xlu0 %2605
      %v2607 = vsel %vm2419, %v2573, 0.0
      %2608 = vadd.xlane.f32.xlu0 %v2607
      %v2609 = vpop.xlane.xlu0 %2608
      %v2610 = vsel %vm2419, %v2574, 0.0
      %2611 = vadd.xlane.f32.xlu0 %v2610
      %v2612 = vpop.xlane.xlu0 %2611
      %v2613 = vsel %vm2419, %v2575, 0.0
      %2614 = vadd.xlane.f32.xlu0 %v2613
      %v2615 = vpop.xlane.xlu0 %2614
      %v2616 = vsel %vm2419, %v2576, 0.0
      %2617 = vadd.xlane.f32.xlu0 %v2616
      %v2618 = vpop.xlane.xlu0 %2617
      %v2619 = vsel %vm2419, %v2577, 0.0
      %2620 = vadd.xlane.f32.xlu0 %v2619
      %v2621 = vpop.xlane.xlu0 %2620
      %v2622 = vsel %vm2419, %v2578, 0.0
      %2623 = vadd.xlane.f32.xlu0 %v2622
      %v2624 = vpop.xlane.xlu0 %2623
      %v2625 = vsel %vm2419, %v2579, 0.0
      %2626 = vadd.xlane.f32.xlu0 %v2625
      %v2627 = vpop.xlane.xlu0 %2626
      %v2628 = vmul.f32 %v2582, %v2484
      %v2629 = vmul.f32 %v2585, %v2485
      %v2630 = vmul.f32 %v2588, %v2486
      %v2631 = vmul.f32 %v2591, %v2487
      %v2632 = vmul.f32 %v2594, %v2488
      %v2633 = vmul.f32 %v2597, %v2489
      %v2634 = vmul.f32 %v2600, %v2490
      %v2635 = vmul.f32 %v2603, %v2491
      %v2636 = vmul.f32 %v2606, %v2492
      %v2637 = vmul.f32 %v2609, %v2493
      %v2638 = vmul.f32 %v2612, %v2494
      %v2639 = vmul.f32 %v2615, %v2495
      %v2640 = vmul.f32 %v2618, %v2496
      %v2641 = vmul.f32 %v2621, %v2497
      %v2642 = vmul.f32 %v2624, %v2498
      %v2643 = vmul.f32 %v2627, %v2499
      %v2644 = vsub.f32 1.0, %v2628
      %v2645 = vsub.f32 1.0, %v2629
      %v2646 = vsub.f32 1.0, %v2630
      %v2647 = vsub.f32 1.0, %v2631
      %v2648 = vsub.f32 1.0, %v2632
      %v2649 = vsub.f32 1.0, %v2633
      %v2650 = vsub.f32 1.0, %v2634
      %v2651 = vsub.f32 1.0, %v2635
      %v2652 = vsub.f32 1.0, %v2636
      %v2653 = vsub.f32 1.0, %v2637
      %v2654 = vsub.f32 1.0, %v2638
      %v2655 = vsub.f32 1.0, %v2639
      %v2656 = vsub.f32 1.0, %v2640
      %v2657 = vsub.f32 1.0, %v2641
      %v2658 = vsub.f32 1.0, %v2642
      %v2659 = vsub.f32 1.0, %v2643
      %v2660 = vsel %vm1733, %v2644, 0.0
      %v2661 = vsel %vm1734, %v2645, 0.0
      %v2662 = vsel %vm1735, %v2646, 0.0
      %v2663 = vsel %vm1736, %v2647, 0.0
      %v2664 = vsel %vm1737, %v2648, 0.0
      %v2665 = vsel %vm1738, %v2649, 0.0
      %v2666 = vsel %vm1739, %v2650, 0.0
      %v2667 = vsel %vm1740, %v2651, 0.0
      %v2668 = vsel %vm1741, %v2652, 0.0
      %v2669 = vsel %vm1742, %v2653, 0.0
      %v2670 = vsel %vm1743, %v2654, 0.0
      %v2671 = vsel %vm1744, %v2655, 0.0
      %v2672 = vsel %vm1745, %v2656, 0.0
      %v2673 = vsel %vm1746, %v2657, 0.0
      %v2674 = vsel %vm1747, %v2658, 0.0
      %v2675 = vsel %vm1748, %v2659, 0.0
      %v2676 = vsel %vm2362, %v2660, 0.0
      %v2677 = vsel %vm2362, %v2661, 0.0
      %v2678 = vadd.f32 %v2676, %v2677
      %v2679 = vsel %vm2362, %v2662, 0.0
      %v2680 = vadd.f32 %v2678, %v2679
      %v2681 = vsel %vm2362, %v2663, 0.0
      %v2682 = vadd.f32 %v2680, %v2681
      %v2683 = vsel %vm2362, %v2664, 0.0
      %v2684 = vadd.f32 %v2682, %v2683
      %v2685 = vsel %vm2362, %v2665, 0.0
      %v2686 = vadd.f32 %v2684, %v2685
      %v2687 = vsel %vm2362, %v2666, 0.0
      %v2688 = vadd.f32 %v2686, %v2687
      %v2689 = vsel %vm2362, %v2667, 0.0
      %v2690 = vadd.f32 %v2688, %v2689
      %v2691 = vsel %vm2362, %v2668, 0.0
      %v2692 = vadd.f32 %v2690, %v2691
      %v2693 = vsel %vm2362, %v2669, 0.0
      %v2694 = vadd.f32 %v2692, %v2693
      %v2695 = vsel %vm2362, %v2670, 0.0
      %v2696 = vadd.f32 %v2694, %v2695
      %v2697 = vsel %vm2362, %v2671, 0.0
      %v2698 = vadd.f32 %v2696, %v2697
      %v2699 = vsel %vm2362, %v2672, 0.0
      %v2700 = vadd.f32 %v2698, %v2699
      %v2701 = vsel %vm2362, %v2673, 0.0
      %v2702 = vadd.f32 %v2700, %v2701
      %v2703 = vsel %vm2362, %v2674, 0.0
      %v2704 = vadd.f32 %v2702, %v2703
      %v2705 = vsel %vm2362, %v2675, 0.0
      %v2706 = vadd.f32 %v2704, %v2705
      %2707 = vadd.xlane.f32.xlu0 %v2706
      %v2708 = vpop.xlane.xlu0 %2707
      %v2709 = vrot.slane %v2708, 4
      %v2710 = vadd.f32 %v2708, %v2709
      %v2711 = vrot.slane %v2710, 2
      %v2712 = vadd.f32 %v2710, %v2711
      %v2713 = vrot.slane %v2712, 1
      %v2714 = vadd.f32 %v2712, %v2713
      %s2715 = vtos %v2714
      %vm2716 = vcmp.ne.f32.partialorder %v568, -1.0
      %v2718 = vrot.slane %v533, 6
      %v2720 = vsub.f32 %v533, %v2718
      %v2722 = vrot.slane %v2720, 1
      %v2724 = vmul.f32 %v2720, %v2722
      %2725 = vrot.lane.b32.xlu0 %v568, 2
      %v2726 = vpop.permute.xlu0 %2725
      %v2728 = vsub.f32 %v568, %v2726
      %2730 = vrot.lane.b32.xlu0 %v2728, 127
      %v2731 = vpop.permute.xlu0 %2730
      %v2733 = vmul.f32 %v2728, %v2731
      %v2734 = vlaneseq
      %v2735 = vshrl.u32 %v2734, 7
      %v2736 = vsub.s32 2, %v2735
      %v2737 = vrot.slane %v533, %v2736
      %2738 = vset.pattern.permute.xlu0 2
      %2739 = vperm.xlu0 %2738, %v568
      %v2740 = vpop.permute.xlu0 %2739
      %v2742 = vmin.f32 %v2737, %v2740
      %v2743 = vlaneseq
      %v2744 = vshrl.u32 %v2743, 7
      %v2745 = vsub.s32 0, %v2744
      %v2746 = vrot.slane %v533, %v2745
      %2747 = vset.pattern.permute.xlu0 0
      %2748 = vperm.xlu0 %2747, %v568
      %v2749 = vpop.permute.xlu0 %2748
      %v2751 = vmax.f32 %v2746, %v2749
      %v2752 = vsub.f32 %v2742, %v2751
      %v2753 = vmax.f32 %v2752, 0.0
      %v2754 = vlaneseq
      %v2755 = vshrl.u32 %v2754, 7
      %v2756 = vsub.s32 3, %v2755
      %v2757 = vrot.slane %v533, %v2756
      %2758 = vset.pattern.permute.xlu0 3
      %2759 = vperm.xlu0 %2758, %v568
      %v2760 = vpop.permute.xlu0 %2759
      %v2762 = vmin.f32 %v2757, %v2760
      %v2763 = vlaneseq
      %v2764 = vshrl.u32 %v2763, 7
      %v2765 = vsub.s32 1, %v2764
      %v2766 = vrot.slane %v533, %v2765
      %2767 = vset.pattern.permute.xlu0 1
      %2768 = vperm.xlu0 %2767, %v568
      %v2769 = vpop.permute.xlu0 %2768
      %v2771 = vmax.f32 %v2766, %v2769
      %v2772 = vsub.f32 %v2762, %v2771
      %v2773 = vmax.f32 %v2772, 0.0
      %v2774 = vmul.f32 %v2753, %v2773
      %v2775 = vlaneseq
      %v2776 = vshrl.u32 %v2775, 7
      %v2777 = vsub.s32 2, %v2776
      %v2778 = vrot.slane %v2724, %v2777
      %2780 = vset.pattern.permute.xlu0 2
      %2781 = vperm.xlu0 %2780, %v2733
      %v2782 = vpop.permute.xlu0 %2781
      %v2784 = vadd.f32 %v2778, %v2782
      %v2785 = vsub.f32 %v2784, %v2774
      %v2786 = vmax.f32 %v2785, 1e-08
      %v2787 = vrcp.pop %v2786
      %v2788 = vmul.f32 %v2774, %v2787
      %v2789 = vsel %vm2716, 1, 0
      %2790 = vset.pattern.permute.xlu0 4
      %2791 = vperm.xlu0 %2790, %v2789
      %v2792 = vpop.permute.xlu0 %2791
      %vm2793 = vcmp.eq.s32.totalorder %v2792, 1
      %v2794 = vsel %vm2793, %v2788, -1.0
      %v2795 = vrot.slane %v2794, 4
      %v2796 = vmax.f32 %v2794, %v2795
      %v2797 = vrot.slane %v2796, 2
      %v2798 = vmax.f32 %v2796, %v2797
      %v2799 = vrot.slane %v2798, 1
      %v2800 = vmax.f32 %v2798, %v2799
      %vm2801 = vcmp.eq.f32.partialorder %v2794, %v2800
      %v2802 = vsel %vm2801, %v572, 8
      %v2803 = vrot.slane %v2802, 4
      %vm2804 = vcmp.lt.s32.totalorder %v2802, %v2803
      %v2805 = vsel %vm2804, %v2802, %v2803
      %v2806 = vrot.slane %v2805, 2
      %vm2807 = vcmp.lt.s32.totalorder %v2805, %v2806
      %v2808 = vsel %vm2807, %v2805, %v2806
      %v2809 = vrot.slane %v2808, 1
      %vm2810 = vcmp.lt.s32.totalorder %v2808, %v2809
      %v2811 = vsel %vm2810, %v2808, %v2809
      %vm2812 = vcmp.eq.s32.totalorder %v572, %v2811
      %v2813 = vsel %vm2812, 1, 0
      %v2814 = vcvt.s32.f32 %v2813
      %vm2815 = vcmp.ge.f32.partialorder %v2800, 0.5
      %vm2816 = vmand %vm2815, %vm624
      %v2817 = vsel %vm1396, %v567, 0
      %2819 = vmatprep.subr.mxu0 0.0
      %2820 = vmatpush1.msra.mxu0 %v2814
      %2821 = vmatprep.subr.mxu0 0.0
      %2822 = vmatpush1.msra.mxu0 0.0
      %2823 = vmatprep.subr.mxu0 0.0
      %2824 = vmatpush1.msra.mxu0 0.0
      %2825 = vmatprep.subr.mxu0 0.0
      %2826 = vmatpush1.msra.mxu0 0.0
      %2827 = vmatprep.subr.mxu0 0.0
      %2828 = vmatpush1.msra.mxu0 0.0
      %2829 = vmatprep.subr.mxu0 0.0
      %2830 = vmatpush1.msra.mxu0 0.0
      %2831 = vmatprep.subr.mxu0 0.0
      %2832 = vmatpush1.msra.mxu0 0.0
      %2833 = vmatprep.subr.mxu0 0.0
      %2834 = vmatpush1.msra.mxu0 0.0
      %2835 = vmatprep.subr.mxu0 0.0
      %2836 = vmatpush1.msra.mxu0 0.0
      %2837 = vmatprep.subr.mxu0 0.0
      %2838 = vmatpush1.msra.mxu0 0.0
      %2839 = vmatprep.subr.mxu0 0.0
      %2840 = vmatpush1.msra.mxu0 0.0
      %2841 = vmatprep.subr.mxu0 0.0
      %2842 = vmatpush1.msra.mxu0 0.0
      %2843 = vmatprep.subr.mxu0 0.0
      %2844 = vmatpush1.msra.mxu0 0.0
      %2845 = vmatprep.subr.mxu0 0.0
      %2846 = vmatpush1.msra.mxu0 0.0
      %2847 = vmatprep.subr.mxu0 0.0
      %2848 = vmatpush1.msra.mxu0 0.0
      %2849 = vmatprep.subr.mxu0 0.0
      %2850 = vmatpush1.msra.mxu0 0.0
      %2851 = vmatprep.subr.mxu0 0.0
      %2852 = vmatpush1.msra.mxu0 0.0
      %2853 = vmatprep.subr.mxu0 0.0
      %2854 = vmatpush1.msra.mxu0 0.0
      %2855 = vmatprep.subr.mxu0 0.0
      %2856 = vmatpush1.msra.mxu0 0.0
      %2857 = vmatprep.subr.mxu0 0.0
      %2858 = vmatpush1.msra.mxu0 0.0
      %2859 = vmatprep.subr.mxu0 0.0
      %2860 = vmatpush1.msra.mxu0 0.0
      %2861 = vmatprep.subr.mxu0 0.0
      %2862 = vmatpush1.msra.mxu0 0.0
      %2863 = vmatprep.subr.mxu0 0.0
      %2864 = vmatpush1.msra.mxu0 0.0
      %2865 = vmatprep.subr.mxu0 0.0
      %2866 = vmatpush1.msra.mxu0 0.0
      %2867 = vmatprep.subr.mxu0 0.0
      %2868 = vmatpush1.msra.mxu0 0.0
      %2869 = vmatprep.subr.mxu0 0.0
      %2870 = vmatpush1.msra.mxu0 0.0
      %2871 = vmatprep.subr.mxu0 0.0
      %2872 = vmatpush1.msra.mxu0 0.0
      %2873 = vmatprep.subr.mxu0 0.0
      %2874 = vmatpush1.msra.mxu0 0.0
      %2875 = vmatprep.subr.mxu0 0.0
      %2876 = vmatpush1.msra.mxu0 0.0
      %2877 = vmatprep.subr.mxu0 0.0
      %2878 = vmatpush1.msra.mxu0 0.0
      %2879 = vmatprep.subr.mxu0 0.0
      %2880 = vmatpush1.msra.mxu0 0.0
      %2881 = vmatprep.subr.mxu0 0.0
      %2882 = vmatpush1.msra.mxu0 0.0
      %2883 = vmatprep.mubr.f32.mxu0 0.0
      %2884 = vmatmul.mubr.f32.gmra.mrb[0].mxu0 %v2817
      %v2885 = vpop.f32.mrb[0].mxu0
      %v2886 = vadd.f32 0.0, %v2885
      %v2887 = vpop.f32.mrb[0].mxu0
      %2888 = vdwg.mxu0
      %v2889 = vmul.f32 %v2720, 0.5
      %v2891 = vrot.slane %v2889, 2
      %v2893 = vadd.f32 %v533, %v2891
      %v2895 = vrot.slane %v2886, 6
      %v2897 = vsub.f32 %v2886, %v2895
      %v2898 = vmax.f32 %v2897, 1.0
      %v2899 = vmul.f32 %v2897, 0.5
      %v2901 = vrot.slane %v2899, 2
      %v2903 = vadd.f32 %v2886, %v2901
      %v2904 = vsub.f32 %v2903, %v2893
      %v2905 = vrot.slane %v2720, 2
      %v2907 = vrcp.pop %v2905
      %v2908 = vmul.f32 %v2904, %v2907
      %v2909 = vmul.f32 %v2908, 10.0
      %v2910 = vrcp.pop %v2720
      %v2911 = vmul.f32 %v2898, %v2910
      %v2912 = vlog2.pop %v2911
      %v2913 = vmul.f32 %v2912, 0.6931472
      %v2914 = vmul.f32 %v2913, 5.0
      %v2915 = vsub.f32 %v2909, %v534
      %v2916 = vand.u32 2147483647, %v2915
      %vm2917 = vcmp.le.f32.partialorder %v2916, 0.11111111
      %v2918 = vmul.f32 %v2916, 4.5
      %v2919 = vmul.f32 %v2918, %v2916
      %v2920 = vsub.f32 %v2916, 0.055555556
      %v2921 = vsel %vm2917, %v2919, %v2920
      %v2923 = vrot.slane %v2921, 1
      %v2925 = vadd.f32 %v2921, %v2923
      %v2926 = vsub.f32 %v2914, %v534
      %v2927 = vand.u32 2147483647, %v2926
      %vm2928 = vcmp.le.f32.partialorder %v2927, 0.11111111
      %v2929 = vmul.f32 %v2927, 4.5
      %v2930 = vmul.f32 %v2929, %v2927
      %v2931 = vsub.f32 %v2927, 0.055555556
      %v2932 = vsel %vm2928, %v2930, %v2931
      %v2934 = vrot.slane %v2932, 2
      %v2936 = vadd.f32 %v2925, %v2934
      %v2937 = vrot.slane %v2932, 3
      %v2939 = vadd.f32 %v2936, %v2937
      %v2940 = vsel %vm2816, %v2939, 0.0
      %vm2941 = vcmask 1040384
      %v2942 = vsel %vm2941, %v2940, 0.0
      %2943 = vadd.xlane.f32.xlu0 %v2942
      %v2944 = vpop.xlane.xlu0 %2943
      %v2945 = vrot.slane %v2944, 4
      %v2946 = vadd.f32 %v2944, %v2945
      %v2947 = vrot.slane %v2946, 2
      %v2948 = vadd.f32 %v2946, %v2947
      %v2949 = vrot.slane %v2948, 1
      %v2950 = vadd.f32 %v2948, %v2949
      %s2951 = vtos %v2950
      %v2952 = vsel %vm2816, 1, 0
      %v2953 = vcvt.s32.f32 %v2952
      %v2954 = vsel %vm2941, %v2953, 0.0
      %2955 = vadd.xlane.f32.xlu0 %v2954
      %v2956 = vpop.xlane.xlu0 %2955
      %v2957 = vrot.slane %v2956, 4
      %v2958 = vadd.f32 %v2956, %v2957
      %v2959 = vrot.slane %v2958, 2
      %v2960 = vadd.f32 %v2958, %v2959
      %v2961 = vrot.slane %v2960, 1
      %v2962 = vadd.f32 %v2960, %v2961
      %s2963 = vtos %v2962
      %s2964 = smul.f32 %s2963, 4.0
      %vm2965 = vcmp.eq.s32.totalorder %v572, 0
      %v2966 = vstv %s2402
      %v2967 = vsel %vm2965, %v2966, 0.0
      %vm2968 = vcmp.eq.s32.totalorder %v572, 1
      %v2969 = vstv %s2963
      %v2970 = vsel %vm2968, %v2969, 0.0
      %v2971 = vadd.f32 %v2967, %v2970
      %vm2972 = vcmp.eq.s32.totalorder %v572, 2
      %v2973 = vstv %s2951
      %v2974 = vsel %vm2972, %v2973, 0.0
      %v2975 = vadd.f32 %v2971, %v2974
      %vm2976 = vcmp.eq.s32.totalorder %v572, 3
      %v2977 = vstv %s2964
      %v2978 = vsel %vm2976, %v2977, 0.0
      %v2979 = vadd.f32 %v2975, %v2978
      %vm2980 = vcmp.eq.s32.totalorder %v572, 4
      %v2981 = vstv %s2715
      %v2982 = vsel %vm2980, %v2981, 0.0
      %v2983 = vadd.f32 %v2979, %v2982
      %vm2984 = vcmp.eq.s32.totalorder %v572, 5
      %v2985 = vsel %vm2984, %v2969, 0.0
      %v2986 = vadd.f32 %v2983, %v2985
      %p2987 = scmp.eq.s32.totalorder %s25, 0
      // Predicated region
      $region49: #{dlde_net_loss.2} parent=47 // pred_check
        %p2988 = pneg %p2987
      $region50: #{dlde_net_loss.2} parent=47 // pred_check_branch
        %2990 = sbr.rel (%p2988) target = $region52
      $region51: #{dlde_net_loss.2} parent=47 // pred_region
        %2991 = vst [vmem:[%s516] sm:$0xff] 0.0
      $region52: #{dlde_net_loss.2} parent=47 // pred_fallthru
        _
      %v2992 = vld [vmem:[%s516] sm:$0xff]
      %v2993 = vadd.f32 %v2992, %v2986
      %2994 = vst [vmem:[%s516] sm:$0xff] %v2993
      %p2995 = scmp.lt.s32.totalorder %s23, 1
      %s2996 = scalar_select %p2995, %s23, 1
      %p2997 = scmp.lt.s32.totalorder %s24, 0
      %s2998 = scalar_select %p2997, %s24, 0
      %s2999 = sadd.s32 %s2998, %s2996
      %s3000 = smul.addr %s2999, 8
      %s3001 = scalar_lea.vmem %s7, %s3000
      // Predicated region
      $region53: #{dlde_net_loss.2} parent=47 // pred_check
        %p3002 = pneg %p259
      $region54: #{dlde_net_loss.2} parent=47 // pred_check_branch
        %3004 = sbr.rel (%p3002) target = $region56
      $region55: #{dlde_net_loss.2} parent=47 // pred_region
        _
      $region56: #{dlde_net_loss.2} parent=47 // pred_fallthru
        _
    $region48: #{dlde_net_loss.2} parent=5 // pred_fallthru
      _
    %p3005 = scmp.le.s32.totalorder 2, %s13
    // Predicated region
    $region57: #{dlde_net_loss.2} parent=5 // pred_check
      %p3006 = pneg %p3005
    $region58: #{dlde_net_loss.2} parent=5 // pred_check_branch
      %3008 = sbr.rel (%p3006) target = $region60
    $region59: #{dlde_net_loss.2} parent=5 // pred_region
      %s3009 = ssub.s32 %s13, 2
      // Predicated region
      $region61: #{dlde_net_loss.2} parent=59 // pred_check
        %p3010 = pneg %p265
      $region62: #{dlde_net_loss.2} parent=59 // pred_check_branch
        %3012 = sbr.rel (%p3010) target = $region64
      $region63: #{dlde_net_loss.2} parent=59 // pred_region
        %p3013 = scmp.lt.s32.totalorder %s26, 1
        %s3014 = scalar_select %p3013, %s26, 1
        %p3015 = scmp.lt.s32.totalorder %s27, 0
        %s3016 = scalar_select %p3015, %s27, 0
        %s3017 = sadd.s32 %s3016, %s3014
        %s3018 = smul.addr %s3017, 8
        %s3019 = scalar_lea.vmem %s7, %s3018
      $region64: #{dlde_net_loss.2} parent=59 // pred_fallthru
        _
    $region60: #{dlde_net_loss.2} parent=5 // pred_fallthru
      _
  $region6: #{dlde_net_loss.2} parent=0 // loop_footer
    %s17 = sadd.s32 1, %s13
  $region7: #{dlde_net_loss.2} parent=0 // loop_footer_branch
    %12 = sbr.rel target = $region3
  $region8: #{dlde_net_loss.2} parent=0 // loop_exit
    _

</llo_original>
